<compile_context>
chip_gen: v7x
topology: tpu7x:2x2x1
jax: 0.10.0
libtpu: 0.0.40
codegen_flags: <defaults>
</compile_context>

<pallas_src>
import numpy as np
import jax
import jax.numpy as jnp
from jax import lax
from jax.experimental import pallas as pl
from jax.experimental.pallas import tpu as pltpu

SELU_ALPHA = 1.6732632423543772848170429916717
SELU_SCALE = 1.0507009873554804934193349852946


def _selu(v):
    return SELU_SCALE * jnp.where(v > 0, v, SELU_ALPHA * (jnp.exp(v) - 1.0))


def _pad_hw(x, top, bottom, left, right):
    """Zero-pad H and W of an NHWC array by static amounts (in-kernel, value-level)."""
    n, h, w, c = x.shape
    if top or bottom:
        parts = []
        if top:
            parts.append(jnp.zeros((n, top, w, c), x.dtype))
        parts.append(x)
        if bottom:
            parts.append(jnp.zeros((n, bottom, w, c), x.dtype))
        x = jnp.concatenate(parts, axis=1)
        h = h + top + bottom
    if left or right:
        parts = []
        if left:
            parts.append(jnp.zeros((n, h, left, c), x.dtype))
        parts.append(x)
        if right:
            parts.append(jnp.zeros((n, h, right, c), x.dtype))
        x = jnp.concatenate(parts, axis=2)
    return x


def _im2col3x3(xp, h, w):
    """(N, H+2, W+2, C) zero-padded -> (N*H*W, 9*C), columns ordered (dy, dx, c)."""
    taps = [xp[:, dy:dy + h, dx:dx + w, :] for dy in range(3) for dx in range(3)]
    p = jnp.concatenate(taps, axis=-1)            # (N, H, W, 9*C)
    return p.reshape(-1, p.shape[-1])             # (N*H*W, 9*C)


def _make_up_kernel(pad_t, pad_b, pad_l, pad_r):
    """Build the fused upsample + concat + double-conv kernel (static pad amounts)."""

    def kernel(x2_ref, x1_ref, up_ref, w1_ref, b1_ref, w2t_ref, b2_ref, o_ref):
        # x2_ref:  (N, H, W, C2)        skip connection (NHWC)
        # x1_ref:  (N, h, w, C1)        low-res feature (NHWC)
        # up_ref:  (N*2h*2w, N*h*w)     kron(I_N, kron(Mh, Mw)) bilinear operator
        # w1_ref:  (9*Cin, Cmid)        conv1 weights, rows ordered (dy, dx, ci)
        # b1_ref:  (1, Cmid)
        # w2t_ref: (Cout, 9*Cmid)       conv2 weights transposed, cols (dy, dx, ci)
        # b2_ref:  (Cout, 1)
        # o_ref:   (Cout, N*H*W)        lane-dense output (col m = (n*H + h)*W + w)
        N, H, W, _ = x2_ref.shape
        _, h_lo, w_lo, C1 = x1_ref.shape
        Cmid = w1_ref.shape[1]

        # (1) bilinear x2 upsample (align_corners=True) as a single MXU matmul.
        x1_flat = x1_ref[...].reshape(N * h_lo * w_lo, C1)
        x1_up = jnp.dot(up_ref[...], x1_flat, preferred_element_type=jnp.float32)
        x1_up = x1_up.reshape(N, 2 * h_lo, 2 * w_lo, C1).astype(x2_ref.dtype)

        # (2) F.pad so spatial dims match the skip connection (static; no-op here).
        x1_up = _pad_hw(x1_up, pad_t, pad_b, pad_l, pad_r)

        # (3) torch.cat([x2, x1], dim=1) == NHWC concat on C.
        x = jnp.concatenate([x2_ref[...], x1_up], axis=-1)          # (N, H, W, Cin)

        # (4) conv1 (3x3, pad=1) as one MXU matmul: (N*H*W, 9*Cin) @ (9*Cin, Cmid)
        p1 = _im2col3x3(_pad_hw(x, 1, 1, 1, 1), H, W)
        hmid = jnp.dot(p1, w1_ref[...], preferred_element_type=jnp.float32)
        hmid = _selu(hmid + b1_ref[...])                            # (N*H*W, Cmid)
        # TODO(synk): nn.Dropout layers are treated as eval-mode identity (no RNG drop).

        # (5) conv2 (3x3, pad=1), computed transposed so the output store is lane-dense:
        #     y_t[co, m] = sum_k w2t[co, k] * p2[m, k]
        p2 = _im2col3x3(_pad_hw(hmid.reshape(N, H, W, Cmid), 1, 1, 1, 1), H, W)
        y_t = lax.dot_general(w2t_ref[...], p2,
                              dimension_numbers=(((1,), (1,)), ((), ())),
                              preferred_element_type=jnp.float32)   # (Cout, N*H*W)
        y_t = _selu(y_t + b2_ref[...])
        o_ref[...] = y_t.astype(o_ref.dtype)

    return kernel


def _align_corners_matrix(out_size, in_size):
    """Interpolation matrix reproducing nn.Upsample(bilinear, align_corners=True)."""
    if in_size == 1:
        return np.ones((out_size, 1), dtype=np.float32)
    m = np.zeros((out_size, in_size), dtype=np.float32)
    scale = (in_size - 1) / (out_size - 1)
    for i in range(out_size):
        src = i * scale
        i0 = min(int(np.floor(src)), in_size - 1)
        i1 = min(i0 + 1, in_size - 1)
        frac = src - i0
        m[i, i0] += 1.0 - frac
        m[i, i1] += frac
    return m


def up_forward(x1_nchw, x2_nchw, params):
    """Forward of Up(in_channels, out_channels, bilinear=True) in eval mode."""
    x1 = jnp.transpose(x1_nchw, (0, 2, 3, 1))   # NCHW -> NHWC
    x2 = jnp.transpose(x2_nchw, (0, 2, 3, 1))

    N, H, W, C2 = x2.shape
    _, h_lo, w_lo, C1 = x1.shape
    diffY = H - 2 * h_lo
    diffX = W - 2 * w_lo
    assert diffY >= 0 and diffX >= 0, "skip connection must not be smaller than 2x x1"
    pad_t, pad_b = diffY // 2, diffY - diffY // 2
    pad_l, pad_r = diffX // 2, diffX - diffX // 2

    # Bilinear x2 (align_corners=True) operator as one block-diagonal matrix
    # (tiny at these sizes; for production N/H tile over a "parallel" grid axis
    # and pass the per-sample kron(Mh, Mw) instead).
    U = np.kron(_align_corners_matrix(2 * h_lo, h_lo),
                _align_corners_matrix(2 * w_lo, w_lo)).astype(np.float32)
    UN = jnp.asarray(np.kron(np.eye(N, dtype=np.float32), U))      # (N*2h*2w, N*h*w)

    w1, b1, w2, b2 = params['w1'], params['b1'], params['w2'], params['b2']
    Cmid, Cout = w1.shape[-1], w2.shape[-1]

    w1r = w1.reshape(-1, Cmid)            # (9*Cin, Cmid), rows ordered (dy, dx, ci)
    w2t = w2.reshape(-1, Cout).T          # (Cout, 9*Cmid)
    b1r = b1.reshape(1, Cmid)
    b2r = b2.reshape(Cout, 1)

    kernel = _make_up_kernel(pad_t, pad_b, pad_l, pad_r)

    out_t = pl.pallas_call(
        kernel,
        out_shape=jax.ShapeDtypeStruct((Cout, N * H * W), x2.dtype),
        grid_spec=pltpu.PrefetchScalarGridSpec(
            num_scalar_prefetch=0,
            grid=(1,),
            in_specs=[
                pl.BlockSpec((N, H, W, C2), lambda i: (0, 0, 0, 0)),
                pl.BlockSpec((N, h_lo, w_lo, C1), lambda i: (0, 0, 0, 0)),
                pl.BlockSpec(tuple(UN.shape), lambda i: (0, 0)),
                pl.BlockSpec(tuple(w1r.shape), lambda i: (0, 0)),
                pl.BlockSpec(tuple(b1r.shape), lambda i: (0, 0)),
                pl.BlockSpec(tuple(w2t.shape), lambda i: (0, 0)),
                pl.BlockSpec(tuple(b2r.shape), lambda i: (0, 0)),
            ],
            out_specs=pl.BlockSpec((Cout, N * H * W), lambda i: (0, 0)),
        ),
        compiler_params=pltpu.CompilerParams(
            dimension_semantics=("arbitrary",)),
    )(x2, x1, UN, w1r, b1r, w2t, b2r)

    y = out_t.reshape(Cout, N, H, W)
    return jnp.transpose(y, (1, 0, 2, 3))    # back to NCHW


# ------------------------- pure-JAX reference (no Pallas) -------------------------

def ref_bilinear_upsample_x2(x_nhwc):
    """Exact f32 gather/lerp bilinear x2 upsample, align_corners=True (reference only)."""
    N, H, W, C = x_nhwc.shape

    def idx_frac(out, inp):
        if inp == 1:
            z = np.zeros(out, np.int32)
            return z, z, np.zeros(out, np.float32)
        src = np.arange(out) * (inp - 1) / (out - 1)
        i0 = np.clip(np.floor(src).astype(np.int32), 0, inp - 1)
        i1 = np.clip(i0 + 1, 0, inp - 1)
        return i0, i1, (src - i0).astype(np.float32)

    h0, h1, fh = idx_frac(2 * H, H)
    w0, w1, fw = idx_frac(2 * W, W)
    fh = jnp.asarray(fh)[None, :, None, None]
    fw = jnp.asarray(fw)[None, None, :, None]
    top = x_nhwc[:, h0][:, :, w0] * (1 - fw) + x_nhwc[:, h0][:, :, w1] * fw
    bot = x_nhwc[:, h1][:, :, w0] * (1 - fw) + x_nhwc[:, h1][:, :, w1] * fw
    return top * (1 - fh) + bot * fh


if __name__ == "__main__":
    key = jax.random.PRNGKey(0)
    k1, k2, k3, k4, kx1, kx2 = jax.random.split(key, 6)

    # Up(in_channels=8, out_channels=4, bilinear=True) -> DoubleConv(8, 4, mid=4)
    in_ch, out_ch = 8, 4
    mid_ch = in_ch // 2
    N, H2, W2 = 2, 16, 16
    c_half = in_ch // 2  # x1 and x2 each carry in_ch//2 channels so cat gives in_ch

    x1 = jax.random.normal(kx1, (N, c_half, H2 // 2, W2 // 2), jnp.float32)  # low-res feature
    x2 = jax.random.normal(kx2, (N, c_half, H2, W2), jnp.float32)            # skip connection

    params = {
        'w1': 0.1 * jax.random.normal(k1, (3, 3, in_ch, mid_ch), jnp.float32),   # HWIO
        'b1': 0.1 * jax.random.normal(k2, (mid_ch,), jnp.float32),
        'w2': 0.1 * jax.random.normal(k3, (3, 3, mid_ch, out_ch), jnp.float32),  # HWIO
        'b2': 0.1 * jax.random.normal(k4, (out_ch,), jnp.float32),
    }

    out = jax.block_until_ready(up_forward(x1, x2, params))
    assert out.shape == (N, out_ch, H2, W2), out.shape

    # Pure-JAX reference check (same math via XLA conv + gather-based upsample).
    def ref_conv_selu(xn, w, b):
        y = lax.conv_general_dilated(
            xn, w, window_strides=(1, 1), padding='SAME',
            dimension_numbers=('NHWC', 'HWIO', 'NHWC'))
        y = y + b.reshape(1, 1, 1, -1)
        return SELU_SCALE * jnp.where(y > 0, y, SELU_ALPHA * (jnp.exp(y) - 1.0))

    x1n = jnp.transpose(x1, (0, 2, 3, 1))
    x2n = jnp.transpose(x2, (0, 2, 3, 1))
    xin = jnp.concatenate([x2n, ref_bilinear_upsample_x2(x1n)], axis=-1)
    ref = ref_conv_selu(ref_conv_selu(xin, params['w1'], params['b1']),
                        params['w2'], params['b2'])
    ref = jnp.transpose(ref, (0, 3, 1, 2))
    np.testing.assert_allclose(np.asarray(out), np.asarray(ref), rtol=1e-4, atol=1e-4)

    print("KERNEL_OK")
</pallas_src>

<mosaic_0001>
module attributes {stable_mosaic.version = 11 : i64} {
  func.func @kernel(%arg0: i32, %arg1: memref<2x16x16x4xf32, #tpu.memory_space<vmem>>, %arg2: memref<2x8x8x4xf32, #tpu.memory_space<vmem>>, %arg3: memref<512x128xf32, #tpu.memory_space<vmem>>, %arg4: memref<72x4xf32, #tpu.memory_space<vmem>>, %arg5: memref<1x4xf32, #tpu.memory_space<vmem>>, %arg6: memref<4x36xf32, #tpu.memory_space<vmem>>, %arg7: memref<4x1xf32, #tpu.memory_space<vmem>>, %arg8: memref<4x512xf32, #tpu.memory_space<vmem>>) attributes {dimension_semantics = [#tpu.dimension_semantics<arbitrary>], iteration_bounds = array<i64: 1>, scalar_prefetch = 0 : i64, scratch_operands = 0 : i64, tpu.core_type = #tpu.core_type<tc>, window_params = [{pipeline_mode = #tpu.pipeline_mode<synchronous>, transform_indices = @transform_0, window_bounds = array<i64: 2, 16, 16, 4>}, {pipeline_mode = #tpu.pipeline_mode<synchronous>, transform_indices = @transform_1, window_bounds = array<i64: 2, 8, 8, 4>}, {pipeline_mode = #tpu.pipeline_mode<synchronous>, transform_indices = @transform_2, window_bounds = array<i64: 512, 128>}, {pipeline_mode = #tpu.pipeline_mode<synchronous>, transform_indices = @transform_3, window_bounds = array<i64: 72, 4>}, {pipeline_mode = #tpu.pipeline_mode<synchronous>, transform_indices = @transform_4, window_bounds = array<i64: 1, 4>}, {pipeline_mode = #tpu.pipeline_mode<synchronous>, transform_indices = @transform_5, window_bounds = array<i64: 4, 36>}, {pipeline_mode = #tpu.pipeline_mode<synchronous>, transform_indices = @transform_6, window_bounds = array<i64: 4, 1>}, {pipeline_mode = #tpu.pipeline_mode<synchronous>, transform_indices = @transform_7, window_bounds = array<i64: 4, 512>}]} {
    %c0 = arith.constant 0 : index
    %c0_0 = arith.constant 0 : index
    %c0_1 = arith.constant 0 : index
    %c0_2 = arith.constant 0 : index
    %0 = vector.load %arg2[%c0, %c0_0, %c0_1, %c0_2] : memref<2x8x8x4xf32, #tpu.memory_space<vmem>>, vector<2x8x8x4xf32>
    %1 = vector.shape_cast %0 : vector<2x8x8x4xf32> to vector<128x4xf32>
    %c0_3 = arith.constant 0 : index
    %c0_4 = arith.constant 0 : index
    %2 = vector.load %arg3[%c0_3, %c0_4] : memref<512x128xf32, #tpu.memory_space<vmem>>, vector<512x128xf32>
    %cst = arith.constant dense<0.000000e+00> : vector<512x4xf32>
    %3 = tpu.matmul %2, %1, %cst {dimension_numbers = #tpu.dot_dimension_numbers<[1], [0], [0], [1], [0, 0, 1, 1], [], []>} : vector<512x128xf32>, vector<128x4xf32>, vector<512x4xf32> -> vector<512x4xf32>
    %4 = vector.shape_cast %3 : vector<512x4xf32> to vector<2x16x16x4xf32>
    %c0_5 = arith.constant 0 : index
    %c0_6 = arith.constant 0 : index
    %c0_7 = arith.constant 0 : index
    %c0_8 = arith.constant 0 : index
    %5 = vector.load %arg1[%c0_5, %c0_6, %c0_7, %c0_8] : memref<2x16x16x4xf32, #tpu.memory_space<vmem>>, vector<2x16x16x4xf32>
    %6 = tpu.concatenate %5, %4 in 3 : vector<2x16x16x4xf32>, vector<2x16x16x4xf32> -> vector<2x16x16x8xf32>
    %cst_9 = arith.constant 0.000000e+00 : f32
    %7 = vector.broadcast %cst_9 : f32 to vector<2x1x16x8xf32>
    %cst_10 = arith.constant 0.000000e+00 : f32
    %8 = vector.broadcast %cst_10 : f32 to vector<2x1x16x8xf32>
    %9 = tpu.concatenate %7, %6, %8 in 1 : vector<2x1x16x8xf32>, vector<2x16x16x8xf32>, vector<2x1x16x8xf32> -> vector<2x18x16x8xf32>
    %cst_11 = arith.constant 0.000000e+00 : f32
    %10 = vector.broadcast %cst_11 : f32 to vector<2x18x1x8xf32>
    %cst_12 = arith.constant 0.000000e+00 : f32
    %11 = vector.broadcast %cst_12 : f32 to vector<2x18x1x8xf32>
    %12 = tpu.concatenate %10, %9, %11 in 2 : vector<2x18x1x8xf32>, vector<2x18x16x8xf32>, vector<2x18x1x8xf32> -> vector<2x18x18x8xf32>
    %13 = vector.extract_strided_slice %12 {offsets = [0, 0, 0, 0], sizes = [2, 16, 16, 8], strides = [1, 1, 1, 1]} : vector<2x18x18x8xf32> to vector<2x16x16x8xf32>
    %14 = vector.extract_strided_slice %12 {offsets = [0, 0, 1, 0], sizes = [2, 16, 16, 8], strides = [1, 1, 1, 1]} : vector<2x18x18x8xf32> to vector<2x16x16x8xf32>
    %15 = vector.extract_strided_slice %12 {offsets = [0, 0, 2, 0], sizes = [2, 16, 16, 8], strides = [1, 1, 1, 1]} : vector<2x18x18x8xf32> to vector<2x16x16x8xf32>
    %16 = vector.extract_strided_slice %12 {offsets = [0, 1, 0, 0], sizes = [2, 16, 16, 8], strides = [1, 1, 1, 1]} : vector<2x18x18x8xf32> to vector<2x16x16x8xf32>
    %17 = vector.extract_strided_slice %12 {offsets = [0, 1, 1, 0], sizes = [2, 16, 16, 8], strides = [1, 1, 1, 1]} : vector<2x18x18x8xf32> to vector<2x16x16x8xf32>
    %18 = vector.extract_strided_slice %12 {offsets = [0, 1, 2, 0], sizes = [2, 16, 16, 8], strides = [1, 1, 1, 1]} : vector<2x18x18x8xf32> to vector<2x16x16x8xf32>
    %19 = vector.extract_strided_slice %12 {offsets = [0, 2, 0, 0], sizes = [2, 16, 16, 8], strides = [1, 1, 1, 1]} : vector<2x18x18x8xf32> to vector<2x16x16x8xf32>
    %20 = vector.extract_strided_slice %12 {offsets = [0, 2, 1, 0], sizes = [2, 16, 16, 8], strides = [1, 1, 1, 1]} : vector<2x18x18x8xf32> to vector<2x16x16x8xf32>
    %21 = vector.extract_strided_slice %12 {offsets = [0, 2, 2, 0], sizes = [2, 16, 16, 8], strides = [1, 1, 1, 1]} : vector<2x18x18x8xf32> to vector<2x16x16x8xf32>
    %22 = tpu.concatenate %13, %14, %15, %16, %17, %18, %19, %20, %21 in 3 : vector<2x16x16x8xf32>, vector<2x16x16x8xf32>, vector<2x16x16x8xf32>, vector<2x16x16x8xf32>, vector<2x16x16x8xf32>, vector<2x16x16x8xf32>, vector<2x16x16x8xf32>, vector<2x16x16x8xf32>, vector<2x16x16x8xf32> -> vector<2x16x16x72xf32>
    %23 = vector.shape_cast %22 : vector<2x16x16x72xf32> to vector<512x72xf32>
    %c0_13 = arith.constant 0 : index
    %c0_14 = arith.constant 0 : index
    %24 = vector.load %arg4[%c0_13, %c0_14] : memref<72x4xf32, #tpu.memory_space<vmem>>, vector<72x4xf32>
    %cst_15 = arith.constant dense<0.000000e+00> : vector<512x4xf32>
    %25 = tpu.matmul %23, %24, %cst_15 {dimension_numbers = #tpu.dot_dimension_numbers<[1], [0], [0], [1], [0, 0, 1, 1], [], []>} : vector<512x72xf32>, vector<72x4xf32>, vector<512x4xf32> -> vector<512x4xf32>
    %c0_16 = arith.constant 0 : index
    %c0_17 = arith.constant 0 : index
    %26 = vector.load %arg5[%c0_16, %c0_17] : memref<1x4xf32, #tpu.memory_space<vmem>>, vector<1x4xf32>
    %27 = vector.broadcast %26 : vector<1x4xf32> to vector<512x4xf32>
    %28 = arith.addf %25, %27 : vector<512x4xf32>
    %cst_18 = arith.constant 0.000000e+00 : f32
    %29 = vector.broadcast %cst_18 : f32 to vector<512x4xf32>
    %30 = arith.cmpf ogt, %28, %29 : vector<512x4xf32>
    %31 = math.exp %28 : vector<512x4xf32>
    %cst_19 = arith.constant 1.000000e+00 : f32
    %32 = vector.broadcast %cst_19 : f32 to vector<512x4xf32>
    %33 = arith.subf %31, %32 : vector<512x4xf32>
    %cst_20 = arith.constant 1.67326319 : f32
    %34 = vector.broadcast %cst_20 : f32 to vector<512x4xf32>
    %35 = arith.mulf %34, %33 : vector<512x4xf32>
    %36 = arith.select %30, %28, %35 : vector<512x4xi1>, vector<512x4xf32>
    %cst_21 = arith.constant 1.05070102 : f32
    %37 = vector.broadcast %cst_21 : f32 to vector<512x4xf32>
    %38 = arith.mulf %37, %36 : vector<512x4xf32>
    %39 = vector.shape_cast %38 : vector<512x4xf32> to vector<2x16x16x4xf32>
    %cst_22 = arith.constant 0.000000e+00 : f32
    %40 = vector.broadcast %cst_22 : f32 to vector<2x1x16x4xf32>
    %cst_23 = arith.constant 0.000000e+00 : f32
    %41 = vector.broadcast %cst_23 : f32 to vector<2x1x16x4xf32>
    %42 = tpu.concatenate %40, %39, %41 in 1 : vector<2x1x16x4xf32>, vector<2x16x16x4xf32>, vector<2x1x16x4xf32> -> vector<2x18x16x4xf32>
    %cst_24 = arith.constant 0.000000e+00 : f32
    %43 = vector.broadcast %cst_24 : f32 to vector<2x18x1x4xf32>
    %cst_25 = arith.constant 0.000000e+00 : f32
    %44 = vector.broadcast %cst_25 : f32 to vector<2x18x1x4xf32>
    %45 = tpu.concatenate %43, %42, %44 in 2 : vector<2x18x1x4xf32>, vector<2x18x16x4xf32>, vector<2x18x1x4xf32> -> vector<2x18x18x4xf32>
    %46 = vector.extract_strided_slice %45 {offsets = [0, 0, 0, 0], sizes = [2, 16, 16, 4], strides = [1, 1, 1, 1]} : vector<2x18x18x4xf32> to vector<2x16x16x4xf32>
    %47 = vector.extract_strided_slice %45 {offsets = [0, 0, 1, 0], sizes = [2, 16, 16, 4], strides = [1, 1, 1, 1]} : vector<2x18x18x4xf32> to vector<2x16x16x4xf32>
    %48 = vector.extract_strided_slice %45 {offsets = [0, 0, 2, 0], sizes = [2, 16, 16, 4], strides = [1, 1, 1, 1]} : vector<2x18x18x4xf32> to vector<2x16x16x4xf32>
    %49 = vector.extract_strided_slice %45 {offsets = [0, 1, 0, 0], sizes = [2, 16, 16, 4], strides = [1, 1, 1, 1]} : vector<2x18x18x4xf32> to vector<2x16x16x4xf32>
    %50 = vector.extract_strided_slice %45 {offsets = [0, 1, 1, 0], sizes = [2, 16, 16, 4], strides = [1, 1, 1, 1]} : vector<2x18x18x4xf32> to vector<2x16x16x4xf32>
    %51 = vector.extract_strided_slice %45 {offsets = [0, 1, 2, 0], sizes = [2, 16, 16, 4], strides = [1, 1, 1, 1]} : vector<2x18x18x4xf32> to vector<2x16x16x4xf32>
    %52 = vector.extract_strided_slice %45 {offsets = [0, 2, 0, 0], sizes = [2, 16, 16, 4], strides = [1, 1, 1, 1]} : vector<2x18x18x4xf32> to vector<2x16x16x4xf32>
    %53 = vector.extract_strided_slice %45 {offsets = [0, 2, 1, 0], sizes = [2, 16, 16, 4], strides = [1, 1, 1, 1]} : vector<2x18x18x4xf32> to vector<2x16x16x4xf32>
    %54 = vector.extract_strided_slice %45 {offsets = [0, 2, 2, 0], sizes = [2, 16, 16, 4], strides = [1, 1, 1, 1]} : vector<2x18x18x4xf32> to vector<2x16x16x4xf32>
    %55 = tpu.concatenate %46, %47, %48, %49, %50, %51, %52, %53, %54 in 3 : vector<2x16x16x4xf32>, vector<2x16x16x4xf32>, vector<2x16x16x4xf32>, vector<2x16x16x4xf32>, vector<2x16x16x4xf32>, vector<2x16x16x4xf32>, vector<2x16x16x4xf32>, vector<2x16x16x4xf32>, vector<2x16x16x4xf32> -> vector<2x16x16x36xf32>
    %56 = vector.shape_cast %55 : vector<2x16x16x36xf32> to vector<512x36xf32>
    %c0_26 = arith.constant 0 : index
    %c0_27 = arith.constant 0 : index
    %57 = vector.load %arg6[%c0_26, %c0_27] : memref<4x36xf32, #tpu.memory_space<vmem>>, vector<4x36xf32>
    %cst_28 = arith.constant dense<0.000000e+00> : vector<4x512xf32>
    %58 = tpu.matmul %57, %56, %cst_28 {dimension_numbers = #tpu.dot_dimension_numbers<[1], [1], [0], [0], [0, 0, 1, 0], [], []>} : vector<4x36xf32>, vector<512x36xf32>, vector<4x512xf32> -> vector<4x512xf32>
    %c0_29 = arith.constant 0 : index
    %c0_30 = arith.constant 0 : index
    %59 = vector.load %arg7[%c0_29, %c0_30] : memref<4x1xf32, #tpu.memory_space<vmem>>, vector<4x1xf32>
    %60 = vector.broadcast %59 : vector<4x1xf32> to vector<4x512xf32>
    %61 = arith.addf %58, %60 : vector<4x512xf32>
    %cst_31 = arith.constant 0.000000e+00 : f32
    %62 = vector.broadcast %cst_31 : f32 to vector<4x512xf32>
    %63 = arith.cmpf ogt, %61, %62 : vector<4x512xf32>
    %64 = math.exp %61 : vector<4x512xf32>
    %cst_32 = arith.constant 1.000000e+00 : f32
    %65 = vector.broadcast %cst_32 : f32 to vector<4x512xf32>
    %66 = arith.subf %64, %65 : vector<4x512xf32>
    %cst_33 = arith.constant 1.67326319 : f32
    %67 = vector.broadcast %cst_33 : f32 to vector<4x512xf32>
    %68 = arith.mulf %67, %66 : vector<4x512xf32>
    %69 = arith.select %63, %61, %68 : vector<4x512xi1>, vector<4x512xf32>
    %cst_34 = arith.constant 1.05070102 : f32
    %70 = vector.broadcast %cst_34 : f32 to vector<4x512xf32>
    %71 = arith.mulf %70, %69 : vector<4x512xf32>
    %c0_35 = arith.constant 0 : index
    %c0_36 = arith.constant 0 : index
    %72 = vector.load %arg8[%c0_35, %c0_36] : memref<4x512xf32, #tpu.memory_space<vmem>>, vector<4x512xf32>
    tpu.vector_store %arg8[%c0_35, %c0_36], %71 {strides = array<i32>} : memref<4x512xf32, #tpu.memory_space<vmem>>, vector<4x512xf32>,
    return
  }
  func.func @transform_0(%arg0: i32) -> (i32, i32, i32, i32) {
    %c0_i32 = arith.constant 0 : i32
    %c0_i32_0 = arith.constant 0 : i32
    %c0_i32_1 = arith.constant 0 : i32
    %c0_i32_2 = arith.constant 0 : i32
    %c0_i32_3 = arith.constant 0 : i32
    return %c0_i32, %c0_i32_0, %c0_i32_1, %c0_i32_2 : i32, i32, i32, i32
  }
  func.func @transform_1(%arg0: i32) -> (i32, i32, i32, i32) {
    %c0_i32 = arith.constant 0 : i32
    %c0_i32_0 = arith.constant 0 : i32
    %c0_i32_1 = arith.constant 0 : i32
    %c0_i32_2 = arith.constant 0 : i32
    %c0_i32_3 = arith.constant 0 : i32
    return %c0_i32, %c0_i32_0, %c0_i32_1, %c0_i32_2 : i32, i32, i32, i32
  }
  func.func @transform_2(%arg0: i32) -> (i32, i32) {
    %c0_i32 = arith.constant 0 : i32
    %c0_i32_0 = arith.constant 0 : i32
    %c0_i32_1 = arith.constant 0 : i32
    return %c0_i32, %c0_i32_0 : i32, i32
  }
  func.func @transform_3(%arg0: i32) -> (i32, i32) {
    %c0_i32 = arith.constant 0 : i32
    %c0_i32_0 = arith.constant 0 : i32
    %c0_i32_1 = arith.constant 0 : i32
    return %c0_i32, %c0_i32_0 : i32, i32
  }
  func.func @transform_4(%arg0: i32) -> (i32, i32) {
    %c0_i32 = arith.constant 0 : i32
    %c0_i32_0 = arith.constant 0 : i32
    %c0_i32_1 = arith.constant 0 : i32
    return %c0_i32, %c0_i32_0 : i32, i32
  }
  func.func @transform_5(%arg0: i32) -> (i32, i32) {
    %c0_i32 = arith.constant 0 : i32
    %c0_i32_0 = arith.constant 0 : i32
    %c0_i32_1 = arith.constant 0 : i32
    return %c0_i32, %c0_i32_0 : i32, i32
  }
  func.func @transform_6(%arg0: i32) -> (i32, i32) {
    %c0_i32 = arith.constant 0 : i32
    %c0_i32_0 = arith.constant 0 : i32
    %c0_i32_1 = arith.constant 0 : i32
    return %c0_i32, %c0_i32_0 : i32, i32
  }
  func.func @transform_7(%arg0: i32) -> (i32, i32) {
    %c0_i32 = arith.constant 0 : i32
    %c0_i32_0 = arith.constant 0 : i32
    %c0_i32_1 = arith.constant 0 : i32
    return %c0_i32, %c0_i32_0 : i32, i32
  }
}

</mosaic_0001>

<llo_original>
// kernel: tpu_custom_call.1
$region0: #{tpu_custom_call.1}
  #allocation0 [shape = 'u32[]', space=smem, size = 0x4, offset = 0x4, fixed_abs, tag = 'smem constant byte address 0x4 - core index']
  #allocation1 [shape = 'u32[144,128]{1,0:T(1,128)}', space=vmem, size = 0x12000, scoped, tag = 'internal scratch']
  %s0 = inlined_call_operand.vmem [shape: f32[2,16,16,4], index: 0, kind: input, shape index: {}]
  %s1 = inlined_call_operand.vmem [shape: f32[2,8,8,4], index: 1, kind: input, shape index: {}]
  %s2 = inlined_call_operand.vmem [shape: f32[512,128], index: 2, kind: input, shape index: {}]
  %s3 = inlined_call_operand.vmem [shape: f32[72,4], index: 3, kind: input, shape index: {}]
  %s4 = inlined_call_operand.vmem [shape: f32[1,4], index: 4, kind: input, shape index: {}]
  %s5 = inlined_call_operand.vmem [shape: f32[4,36], index: 5, kind: input, shape index: {}]
  %s6 = inlined_call_operand.vmem [shape: f32[4,1], index: 6, kind: input, shape index: {}]
  %s7 = inlined_call_operand.hbm [shape: f32[4,512], index: 7, kind: output, shape index: {}]
  %s8 = sld [smem:[#allocation0]]
  $region38: #{tpu_custom_call.1} parent=0
    _
  %s10 = ssub.s32 1, %s8
  %s11 = scalar_select 0, %s10, %s8
  $region1: #{tpu_custom_call.1} parent=0
    #allocation2 [shape = 'u8[8192]{0}', space=vmem, size = 0x2000, scoped, tag = 'output window, operand 0, single buffered']
    #allocation3 [shape = 's32[1]{0}', space=sflag, size = 0x4, scoped, tag = 'scoped memory for tpu_custom_call.1']
    %12 = vsyncpa [#allocation3], 0
    // Predicated region
    $region2: #{tpu_custom_call.1} parent=1 // pred_check
      _
    $region3: #{tpu_custom_call.1} parent=1 // pred_check_branch
      %14 = sbr.rel (0) target = $region5
    $region4: #{tpu_custom_call.1} parent=1 // pred_region
      _
    $region5: #{tpu_custom_call.1} parent=1 // pred_fallthru
      _
    // Predicated region
    $region6: #{tpu_custom_call.1} parent=1 // pred_check
      _
    $region7: #{tpu_custom_call.1} parent=1 // pred_check_branch
      %16 = sbr.rel (0) target = $region9
    $region8: #{tpu_custom_call.1} parent=1 // pred_region
      _
    $region9: #{tpu_custom_call.1} parent=1 // pred_fallthru
      _
    // Predicated region
    $region10: #{tpu_custom_call.1} parent=1 // pred_check
      _
    $region11: #{tpu_custom_call.1} parent=1 // pred_check_branch
      %18 = sbr.rel (0) target = $region13
    $region12: #{tpu_custom_call.1} parent=1 // pred_region
      _
    $region13: #{tpu_custom_call.1} parent=1 // pred_fallthru
      _
    // Predicated region
    $region14: #{tpu_custom_call.1} parent=1 // pred_check
      _
    $region15: #{tpu_custom_call.1} parent=1 // pred_check_branch
      %20 = sbr.rel (0) target = $region17
    $region16: #{tpu_custom_call.1} parent=1 // pred_region
      _
    $region17: #{tpu_custom_call.1} parent=1 // pred_fallthru
      _
    // Predicated region
    $region18: #{tpu_custom_call.1} parent=1 // pred_check
      _
    $region19: #{tpu_custom_call.1} parent=1 // pred_check_branch
      %22 = sbr.rel (0) target = $region21
    $region20: #{tpu_custom_call.1} parent=1 // pred_region
      _
    $region21: #{tpu_custom_call.1} parent=1 // pred_fallthru
      _
    // Predicated region
    $region22: #{tpu_custom_call.1} parent=1 // pred_check
      _
    $region23: #{tpu_custom_call.1} parent=1 // pred_check_branch
      %24 = sbr.rel (0) target = $region25
    $region24: #{tpu_custom_call.1} parent=1 // pred_region
      _
    $region25: #{tpu_custom_call.1} parent=1 // pred_fallthru
      _
    // Predicated region
    $region26: #{tpu_custom_call.1} parent=1 // pred_check
      _
    $region27: #{tpu_custom_call.1} parent=1 // pred_check_branch
      %26 = sbr.rel (0) target = $region29
    $region28: #{tpu_custom_call.1} parent=1 // pred_region
      _
    $region29: #{tpu_custom_call.1} parent=1 // pred_fallthru
      _
    %v27 = vld [vmem:[%s1] sm:$0xff]
    %v28 = vld [vmem:[%s1 + $0x8] sm:$0xff]
    %v29 = vld [vmem:[%s1 + $0x10] sm:$0xff]
    %v30 = vld [vmem:[%s1 + $0x18] sm:$0xff]
    %v31 = vld [vmem:[%s1 + $0x20] sm:$0xff]
    %v32 = vld [vmem:[%s1 + $0x28] sm:$0xff]
    %v33 = vld [vmem:[%s1 + $0x30] sm:$0xff]
    %v34 = vld [vmem:[%s1 + $0x38] sm:$0xff]
    %v35 = vld [vmem:[%s1 + $0x40] sm:$0xff]
    %v36 = vld [vmem:[%s1 + $0x48] sm:$0xff]
    %v37 = vld [vmem:[%s1 + $0x50] sm:$0xff]
    %v38 = vld [vmem:[%s1 + $0x58] sm:$0xff]
    %v39 = vld [vmem:[%s1 + $0x60] sm:$0xff]
    %v40 = vld [vmem:[%s1 + $0x68] sm:$0xff]
    %v41 = vld [vmem:[%s1 + $0x70] sm:$0xff]
    %v42 = vld [vmem:[%s1 + $0x78] sm:$0xff]
    %v43 = vld [vmem:[%s2] sm:$0xff]
    %v44 = vld [vmem:[%s2 + $0x8] sm:$0xff]
    %v45 = vld [vmem:[%s2 + $0x10] sm:$0xff]
    %v46 = vld [vmem:[%s2 + $0x18] sm:$0xff]
    %v47 = vld [vmem:[%s2 + $0x20] sm:$0xff]
    %v48 = vld [vmem:[%s2 + $0x28] sm:$0xff]
    %v49 = vld [vmem:[%s2 + $0x30] sm:$0xff]
    %v50 = vld [vmem:[%s2 + $0x38] sm:$0xff]
    %v51 = vld [vmem:[%s2 + $0x40] sm:$0xff]
    %v52 = vld [vmem:[%s2 + $0x48] sm:$0xff]
    %v53 = vld [vmem:[%s2 + $0x50] sm:$0xff]
    %v54 = vld [vmem:[%s2 + $0x58] sm:$0xff]
    %v55 = vld [vmem:[%s2 + $0x60] sm:$0xff]
    %v56 = vld [vmem:[%s2 + $0x68] sm:$0xff]
    %v57 = vld [vmem:[%s2 + $0x70] sm:$0xff]
    %v58 = vld [vmem:[%s2 + $0x78] sm:$0xff]
    %v59 = vld [vmem:[%s2 + $0x80] sm:$0xff]
    %v60 = vld [vmem:[%s2 + $0x88] sm:$0xff]
    %v61 = vld [vmem:[%s2 + $0x90] sm:$0xff]
    %v62 = vld [vmem:[%s2 + $0x98] sm:$0xff]
    %v63 = vld [vmem:[%s2 + $0xa0] sm:$0xff]
    %v64 = vld [vmem:[%s2 + $0xa8] sm:$0xff]
    %v65 = vld [vmem:[%s2 + $0xb0] sm:$0xff]
    %v66 = vld [vmem:[%s2 + $0xb8] sm:$0xff]
    %v67 = vld [vmem:[%s2 + $0xc0] sm:$0xff]
    %v68 = vld [vmem:[%s2 + $0xc8] sm:$0xff]
    %v69 = vld [vmem:[%s2 + $0xd0] sm:$0xff]
    %v70 = vld [vmem:[%s2 + $0xd8] sm:$0xff]
    %v71 = vld [vmem:[%s2 + $0xe0] sm:$0xff]
    %v72 = vld [vmem:[%s2 + $0xe8] sm:$0xff]
    %v73 = vld [vmem:[%s2 + $0xf0] sm:$0xff]
    %v74 = vld [vmem:[%s2 + $0xf8] sm:$0xff]
    %v75 = vld [vmem:[%s2 + $0x100] sm:$0xff]
    %v76 = vld [vmem:[%s2 + $0x108] sm:$0xff]
    %v77 = vld [vmem:[%s2 + $0x110] sm:$0xff]
    %v78 = vld [vmem:[%s2 + $0x118] sm:$0xff]
    %v79 = vld [vmem:[%s2 + $0x120] sm:$0xff]
    %v80 = vld [vmem:[%s2 + $0x128] sm:$0xff]
    %v81 = vld [vmem:[%s2 + $0x130] sm:$0xff]
    %v82 = vld [vmem:[%s2 + $0x138] sm:$0xff]
    %v83 = vld [vmem:[%s2 + $0x140] sm:$0xff]
    %v84 = vld [vmem:[%s2 + $0x148] sm:$0xff]
    %v85 = vld [vmem:[%s2 + $0x150] sm:$0xff]
    %v86 = vld [vmem:[%s2 + $0x158] sm:$0xff]
    %v87 = vld [vmem:[%s2 + $0x160] sm:$0xff]
    %v88 = vld [vmem:[%s2 + $0x168] sm:$0xff]
    %v89 = vld [vmem:[%s2 + $0x170] sm:$0xff]
    %v90 = vld [vmem:[%s2 + $0x178] sm:$0xff]
    %v91 = vld [vmem:[%s2 + $0x180] sm:$0xff]
    %v92 = vld [vmem:[%s2 + $0x188] sm:$0xff]
    %v93 = vld [vmem:[%s2 + $0x190] sm:$0xff]
    %v94 = vld [vmem:[%s2 + $0x198] sm:$0xff]
    %v95 = vld [vmem:[%s2 + $0x1a0] sm:$0xff]
    %v96 = vld [vmem:[%s2 + $0x1a8] sm:$0xff]
    %v97 = vld [vmem:[%s2 + $0x1b0] sm:$0xff]
    %v98 = vld [vmem:[%s2 + $0x1b8] sm:$0xff]
    %v99 = vld [vmem:[%s2 + $0x1c0] sm:$0xff]
    %v100 = vld [vmem:[%s2 + $0x1c8] sm:$0xff]
    %v101 = vld [vmem:[%s2 + $0x1d0] sm:$0xff]
    %v102 = vld [vmem:[%s2 + $0x1d8] sm:$0xff]
    %v103 = vld [vmem:[%s2 + $0x1e0] sm:$0xff]
    %v104 = vld [vmem:[%s2 + $0x1e8] sm:$0xff]
    %v105 = vld [vmem:[%s2 + $0x1f0] sm:$0xff]
    %v106 = vld [vmem:[%s2 + $0x1f8] sm:$0xff]
    %107 = vmatprep.subr.mxu0 0.0
    %108 = vmatpush1.msra.mxu0 %v27
    %109 = vmatprep.subr.mxu0 0.0
    %110 = vmatpush1.msra.mxu0 %v28
    %111 = vmatprep.subr.mxu0 0.0
    %112 = vmatpush1.msra.mxu0 %v29
    %113 = vmatprep.subr.mxu0 0.0
    %114 = vmatpush1.msra.mxu0 %v30
    %115 = vmatprep.subr.mxu0 0.0
    %116 = vmatpush1.msra.mxu0 %v31
    %117 = vmatprep.subr.mxu0 0.0
    %118 = vmatpush1.msra.mxu0 %v32
    %119 = vmatprep.subr.mxu0 0.0
    %120 = vmatpush1.msra.mxu0 %v33
    %121 = vmatprep.subr.mxu0 0.0
    %122 = vmatpush1.msra.mxu0 %v34
    %123 = vmatprep.subr.mxu0 0.0
    %124 = vmatpush1.msra.mxu0 %v35
    %125 = vmatprep.subr.mxu0 0.0
    %126 = vmatpush1.msra.mxu0 %v36
    %127 = vmatprep.subr.mxu0 0.0
    %128 = vmatpush1.msra.mxu0 %v37
    %129 = vmatprep.subr.mxu0 0.0
    %130 = vmatpush1.msra.mxu0 %v38
    %131 = vmatprep.subr.mxu0 0.0
    %132 = vmatpush1.msra.mxu0 %v39
    %133 = vmatprep.subr.mxu0 0.0
    %134 = vmatpush1.msra.mxu0 %v40
    %135 = vmatprep.subr.mxu0 0.0
    %136 = vmatpush1.msra.mxu0 %v41
    %137 = vmatprep.subr.mxu0 0.0
    %138 = vmatpush1.msra.mxu0 %v42
    %139 = vmatprep.subr.mxu0 0.0
    %140 = vmatpush1.msra.mxu0 0.0
    %141 = vmatprep.subr.mxu0 0.0
    %142 = vmatpush1.msra.mxu0 0.0
    %143 = vmatprep.subr.mxu0 0.0
    %144 = vmatpush1.msra.mxu0 0.0
    %145 = vmatprep.subr.mxu0 0.0
    %146 = vmatpush1.msra.mxu0 0.0
    %147 = vmatprep.subr.mxu0 0.0
    %148 = vmatpush1.msra.mxu0 0.0
    %149 = vmatprep.subr.mxu0 0.0
    %150 = vmatpush1.msra.mxu0 0.0
    %151 = vmatprep.subr.mxu0 0.0
    %152 = vmatpush1.msra.mxu0 0.0
    %153 = vmatprep.subr.mxu0 0.0
    %154 = vmatpush1.msra.mxu0 0.0
    %155 = vmatprep.subr.mxu0 0.0
    %156 = vmatpush1.msra.mxu0 0.0
    %157 = vmatprep.subr.mxu0 0.0
    %158 = vmatpush1.msra.mxu0 0.0
    %159 = vmatprep.subr.mxu0 0.0
    %160 = vmatpush1.msra.mxu0 0.0
    %161 = vmatprep.subr.mxu0 0.0
    %162 = vmatpush1.msra.mxu0 0.0
    %163 = vmatprep.subr.mxu0 0.0
    %164 = vmatpush1.msra.mxu0 0.0
    %165 = vmatprep.subr.mxu0 0.0
    %166 = vmatpush1.msra.mxu0 0.0
    %167 = vmatprep.subr.mxu0 0.0
    %168 = vmatpush1.msra.mxu0 0.0
    %169 = vmatprep.subr.mxu0 0.0
    %170 = vmatpush1.msra.mxu0 0.0
    %171 = vmatprep.mubr.f32.mxu0 0.0
    %172 = vmatmul.mubr.f32.gmra.mrb[0].mxu0 %v43
    %v173 = vpop.f32.mrb[0].mxu0
    %v174 = vadd.f32 0.0, %v173
    %v175 = vpop.f32.mrb[0].mxu0
    %176 = vmatprep.mubr.f32.mxu0 0.0
    %177 = vmatmul.mubr.f32.gmra.mrb[0].mxu0 %v44
    %v178 = vpop.f32.mrb[0].mxu0
    %v179 = vadd.f32 0.0, %v178
    %v180 = vpop.f32.mrb[0].mxu0
    %181 = vmatprep.mubr.f32.mxu0 0.0
    %182 = vmatmul.mubr.f32.gmra.mrb[0].mxu0 %v45
    %v183 = vpop.f32.mrb[0].mxu0
    %v184 = vadd.f32 0.0, %v183
    %v185 = vpop.f32.mrb[0].mxu0
    %186 = vmatprep.mubr.f32.mxu0 0.0
    %187 = vmatmul.mubr.f32.gmra.mrb[0].mxu0 %v46
    %v188 = vpop.f32.mrb[0].mxu0
    %v189 = vadd.f32 0.0, %v188
    %v190 = vpop.f32.mrb[0].mxu0
    %191 = vmatprep.mubr.f32.mxu0 0.0
    %192 = vmatmul.mubr.f32.gmra.mrb[0].mxu0 %v47
    %v193 = vpop.f32.mrb[0].mxu0
    %v194 = vadd.f32 0.0, %v193
    %v195 = vpop.f32.mrb[0].mxu0
    %196 = vmatprep.mubr.f32.mxu0 0.0
    %197 = vmatmul.mubr.f32.gmra.mrb[0].mxu0 %v48
    %v198 = vpop.f32.mrb[0].mxu0
    %v199 = vadd.f32 0.0, %v198
    %v200 = vpop.f32.mrb[0].mxu0
    %201 = vmatprep.mubr.f32.mxu0 0.0
    %202 = vmatmul.mubr.f32.gmra.mrb[0].mxu0 %v49
    %v203 = vpop.f32.mrb[0].mxu0
    %v204 = vadd.f32 0.0, %v203
    %v205 = vpop.f32.mrb[0].mxu0
    %206 = vmatprep.mubr.f32.mxu0 0.0
    %207 = vmatmul.mubr.f32.gmra.mrb[0].mxu0 %v50
    %v208 = vpop.f32.mrb[0].mxu0
    %v209 = vadd.f32 0.0, %v208
    %v210 = vpop.f32.mrb[0].mxu0
    %211 = vmatprep.mubr.f32.mxu0 0.0
    %212 = vmatmul.mubr.f32.gmra.mrb[0].mxu0 %v51
    %v213 = vpop.f32.mrb[0].mxu0
    %v214 = vadd.f32 0.0, %v213
    %v215 = vpop.f32.mrb[0].mxu0
    %216 = vmatprep.mubr.f32.mxu0 0.0
    %217 = vmatmul.mubr.f32.gmra.mrb[0].mxu0 %v52
    %v218 = vpop.f32.mrb[0].mxu0
    %v219 = vadd.f32 0.0, %v218
    %v220 = vpop.f32.mrb[0].mxu0
    %221 = vmatprep.mubr.f32.mxu0 0.0
    %222 = vmatmul.mubr.f32.gmra.mrb[0].mxu0 %v53
    %v223 = vpop.f32.mrb[0].mxu0
    %v224 = vadd.f32 0.0, %v223
    %v225 = vpop.f32.mrb[0].mxu0
    %226 = vmatprep.mubr.f32.mxu0 0.0
    %227 = vmatmul.mubr.f32.gmra.mrb[0].mxu0 %v54
    %v228 = vpop.f32.mrb[0].mxu0
    %v229 = vadd.f32 0.0, %v228
    %v230 = vpop.f32.mrb[0].mxu0
    %231 = vmatprep.mubr.f32.mxu0 0.0
    %232 = vmatmul.mubr.f32.gmra.mrb[0].mxu0 %v55
    %v233 = vpop.f32.mrb[0].mxu0
    %v234 = vadd.f32 0.0, %v233
    %v235 = vpop.f32.mrb[0].mxu0
    %236 = vmatprep.mubr.f32.mxu0 0.0
    %237 = vmatmul.mubr.f32.gmra.mrb[0].mxu0 %v56
    %v238 = vpop.f32.mrb[0].mxu0
    %v239 = vadd.f32 0.0, %v238
    %v240 = vpop.f32.mrb[0].mxu0
    %241 = vmatprep.mubr.f32.mxu0 0.0
    %242 = vmatmul.mubr.f32.gmra.mrb[0].mxu0 %v57
    %v243 = vpop.f32.mrb[0].mxu0
    %v244 = vadd.f32 0.0, %v243
    %v245 = vpop.f32.mrb[0].mxu0
    %246 = vmatprep.mubr.f32.mxu0 0.0
    %247 = vmatmul.mubr.f32.gmra.mrb[0].mxu0 %v58
    %v248 = vpop.f32.mrb[0].mxu0
    %v249 = vadd.f32 0.0, %v248
    %v250 = vpop.f32.mrb[0].mxu0
    %251 = vmatprep.mubr.f32.mxu0 0.0
    %252 = vmatmul.mubr.f32.gmra.mrb[0].mxu0 %v59
    %v253 = vpop.f32.mrb[0].mxu0
    %v254 = vadd.f32 0.0, %v253
    %v255 = vpop.f32.mrb[0].mxu0
    %256 = vmatprep.mubr.f32.mxu0 0.0
    %257 = vmatmul.mubr.f32.gmra.mrb[0].mxu0 %v60
    %v258 = vpop.f32.mrb[0].mxu0
    %v259 = vadd.f32 0.0, %v258
    %v260 = vpop.f32.mrb[0].mxu0
    %261 = vmatprep.mubr.f32.mxu0 0.0
    %262 = vmatmul.mubr.f32.gmra.mrb[0].mxu0 %v61
    %v263 = vpop.f32.mrb[0].mxu0
    %v264 = vadd.f32 0.0, %v263
    %v265 = vpop.f32.mrb[0].mxu0
    %266 = vmatprep.mubr.f32.mxu0 0.0
    %267 = vmatmul.mubr.f32.gmra.mrb[0].mxu0 %v62
    %v268 = vpop.f32.mrb[0].mxu0
    %v269 = vadd.f32 0.0, %v268
    %v270 = vpop.f32.mrb[0].mxu0
    %271 = vmatprep.mubr.f32.mxu0 0.0
    %272 = vmatmul.mubr.f32.gmra.mrb[0].mxu0 %v63
    %v273 = vpop.f32.mrb[0].mxu0
    %v274 = vadd.f32 0.0, %v273
    %v275 = vpop.f32.mrb[0].mxu0
    %276 = vmatprep.mubr.f32.mxu0 0.0
    %277 = vmatmul.mubr.f32.gmra.mrb[0].mxu0 %v64
    %v278 = vpop.f32.mrb[0].mxu0
    %v279 = vadd.f32 0.0, %v278
    %v280 = vpop.f32.mrb[0].mxu0
    %281 = vmatprep.mubr.f32.mxu0 0.0
    %282 = vmatmul.mubr.f32.gmra.mrb[0].mxu0 %v65
    %v283 = vpop.f32.mrb[0].mxu0
    %v284 = vadd.f32 0.0, %v283
    %v285 = vpop.f32.mrb[0].mxu0
    %286 = vmatprep.mubr.f32.mxu0 0.0
    %287 = vmatmul.mubr.f32.gmra.mrb[0].mxu0 %v66
    %v288 = vpop.f32.mrb[0].mxu0
    %v289 = vadd.f32 0.0, %v288
    %v290 = vpop.f32.mrb[0].mxu0
    %291 = vmatprep.mubr.f32.mxu0 0.0
    %292 = vmatmul.mubr.f32.gmra.mrb[0].mxu0 %v67
    %v293 = vpop.f32.mrb[0].mxu0
    %v294 = vadd.f32 0.0, %v293
    %v295 = vpop.f32.mrb[0].mxu0
    %296 = vmatprep.mubr.f32.mxu0 0.0
    %297 = vmatmul.mubr.f32.gmra.mrb[0].mxu0 %v68
    %v298 = vpop.f32.mrb[0].mxu0
    %v299 = vadd.f32 0.0, %v298
    %v300 = vpop.f32.mrb[0].mxu0
    %301 = vmatprep.mubr.f32.mxu0 0.0
    %302 = vmatmul.mubr.f32.gmra.mrb[0].mxu0 %v69
    %v303 = vpop.f32.mrb[0].mxu0
    %v304 = vadd.f32 0.0, %v303
    %v305 = vpop.f32.mrb[0].mxu0
    %306 = vmatprep.mubr.f32.mxu0 0.0
    %307 = vmatmul.mubr.f32.gmra.mrb[0].mxu0 %v70
    %v308 = vpop.f32.mrb[0].mxu0
    %v309 = vadd.f32 0.0, %v308
    %v310 = vpop.f32.mrb[0].mxu0
    %311 = vmatprep.mubr.f32.mxu0 0.0
    %312 = vmatmul.mubr.f32.gmra.mrb[0].mxu0 %v71
    %v313 = vpop.f32.mrb[0].mxu0
    %v314 = vadd.f32 0.0, %v313
    %v315 = vpop.f32.mrb[0].mxu0
    %316 = vmatprep.mubr.f32.mxu0 0.0
    %317 = vmatmul.mubr.f32.gmra.mrb[0].mxu0 %v72
    %v318 = vpop.f32.mrb[0].mxu0
    %v319 = vadd.f32 0.0, %v318
    %v320 = vpop.f32.mrb[0].mxu0
    %321 = vmatprep.mubr.f32.mxu0 0.0
    %322 = vmatmul.mubr.f32.gmra.mrb[0].mxu0 %v73
    %v323 = vpop.f32.mrb[0].mxu0
    %v324 = vadd.f32 0.0, %v323
    %v325 = vpop.f32.mrb[0].mxu0
    %326 = vmatprep.mubr.f32.mxu0 0.0
    %327 = vmatmul.mubr.f32.gmra.mrb[0].mxu0 %v74
    %v328 = vpop.f32.mrb[0].mxu0
    %v329 = vadd.f32 0.0, %v328
    %v330 = vpop.f32.mrb[0].mxu0
    %331 = vmatprep.mubr.f32.mxu0 0.0
    %332 = vmatmul.mubr.f32.gmra.mrb[0].mxu0 %v75
    %v333 = vpop.f32.mrb[0].mxu0
    %v334 = vadd.f32 0.0, %v333
    %v335 = vpop.f32.mrb[0].mxu0
    %336 = vmatprep.mubr.f32.mxu0 0.0
    %337 = vmatmul.mubr.f32.gmra.mrb[0].mxu0 %v76
    %v338 = vpop.f32.mrb[0].mxu0
    %v339 = vadd.f32 0.0, %v338
    %v340 = vpop.f32.mrb[0].mxu0
    %341 = vmatprep.mubr.f32.mxu0 0.0
    %342 = vmatmul.mubr.f32.gmra.mrb[0].mxu0 %v77
    %v343 = vpop.f32.mrb[0].mxu0
    %v344 = vadd.f32 0.0, %v343
    %v345 = vpop.f32.mrb[0].mxu0
    %346 = vmatprep.mubr.f32.mxu0 0.0
    %347 = vmatmul.mubr.f32.gmra.mrb[0].mxu0 %v78
    %v348 = vpop.f32.mrb[0].mxu0
    %v349 = vadd.f32 0.0, %v348
    %v350 = vpop.f32.mrb[0].mxu0
    %351 = vmatprep.mubr.f32.mxu0 0.0
    %352 = vmatmul.mubr.f32.gmra.mrb[0].mxu0 %v79
    %v353 = vpop.f32.mrb[0].mxu0
    %v354 = vadd.f32 0.0, %v353
    %v355 = vpop.f32.mrb[0].mxu0
    %356 = vmatprep.mubr.f32.mxu0 0.0
    %357 = vmatmul.mubr.f32.gmra.mrb[0].mxu0 %v80
    %v358 = vpop.f32.mrb[0].mxu0
    %v359 = vadd.f32 0.0, %v358
    %v360 = vpop.f32.mrb[0].mxu0
    %361 = vmatprep.mubr.f32.mxu0 0.0
    %362 = vmatmul.mubr.f32.gmra.mrb[0].mxu0 %v81
    %v363 = vpop.f32.mrb[0].mxu0
    %v364 = vadd.f32 0.0, %v363
    %v365 = vpop.f32.mrb[0].mxu0
    %366 = vmatprep.mubr.f32.mxu0 0.0
    %367 = vmatmul.mubr.f32.gmra.mrb[0].mxu0 %v82
    %v368 = vpop.f32.mrb[0].mxu0
    %v369 = vadd.f32 0.0, %v368
    %v370 = vpop.f32.mrb[0].mxu0
    %371 = vmatprep.mubr.f32.mxu0 0.0
    %372 = vmatmul.mubr.f32.gmra.mrb[0].mxu0 %v83
    %v373 = vpop.f32.mrb[0].mxu0
    %v374 = vadd.f32 0.0, %v373
    %v375 = vpop.f32.mrb[0].mxu0
    %376 = vmatprep.mubr.f32.mxu0 0.0
    %377 = vmatmul.mubr.f32.gmra.mrb[0].mxu0 %v84
    %v378 = vpop.f32.mrb[0].mxu0
    %v379 = vadd.f32 0.0, %v378
    %v380 = vpop.f32.mrb[0].mxu0
    %381 = vmatprep.mubr.f32.mxu0 0.0
    %382 = vmatmul.mubr.f32.gmra.mrb[0].mxu0 %v85
    %v383 = vpop.f32.mrb[0].mxu0
    %v384 = vadd.f32 0.0, %v383
    %v385 = vpop.f32.mrb[0].mxu0
    %386 = vmatprep.mubr.f32.mxu0 0.0
    %387 = vmatmul.mubr.f32.gmra.mrb[0].mxu0 %v86
    %v388 = vpop.f32.mrb[0].mxu0
    %v389 = vadd.f32 0.0, %v388
    %v390 = vpop.f32.mrb[0].mxu0
    %391 = vmatprep.mubr.f32.mxu0 0.0
    %392 = vmatmul.mubr.f32.gmra.mrb[0].mxu0 %v87
    %v393 = vpop.f32.mrb[0].mxu0
    %v394 = vadd.f32 0.0, %v393
    %v395 = vpop.f32.mrb[0].mxu0
    %396 = vmatprep.mubr.f32.mxu0 0.0
    %397 = vmatmul.mubr.f32.gmra.mrb[0].mxu0 %v88
    %v398 = vpop.f32.mrb[0].mxu0
    %v399 = vadd.f32 0.0, %v398
    %v400 = vpop.f32.mrb[0].mxu0
    %401 = vmatprep.mubr.f32.mxu0 0.0
    %402 = vmatmul.mubr.f32.gmra.mrb[0].mxu0 %v89
    %v403 = vpop.f32.mrb[0].mxu0
    %v404 = vadd.f32 0.0, %v403
    %v405 = vpop.f32.mrb[0].mxu0
    %406 = vmatprep.mubr.f32.mxu0 0.0
    %407 = vmatmul.mubr.f32.gmra.mrb[0].mxu0 %v90
    %v408 = vpop.f32.mrb[0].mxu0
    %v409 = vadd.f32 0.0, %v408
    %v410 = vpop.f32.mrb[0].mxu0
    %411 = vmatprep.mubr.f32.mxu0 0.0
    %412 = vmatmul.mubr.f32.gmra.mrb[0].mxu0 %v91
    %v413 = vpop.f32.mrb[0].mxu0
    %v414 = vadd.f32 0.0, %v413
    %v415 = vpop.f32.mrb[0].mxu0
    %416 = vmatprep.mubr.f32.mxu0 0.0
    %417 = vmatmul.mubr.f32.gmra.mrb[0].mxu0 %v92
    %v418 = vpop.f32.mrb[0].mxu0
    %v419 = vadd.f32 0.0, %v418
    %v420 = vpop.f32.mrb[0].mxu0
    %421 = vmatprep.mubr.f32.mxu0 0.0
    %422 = vmatmul.mubr.f32.gmra.mrb[0].mxu0 %v93
    %v423 = vpop.f32.mrb[0].mxu0
    %v424 = vadd.f32 0.0, %v423
    %v425 = vpop.f32.mrb[0].mxu0
    %426 = vmatprep.mubr.f32.mxu0 0.0
    %427 = vmatmul.mubr.f32.gmra.mrb[0].mxu0 %v94
    %v428 = vpop.f32.mrb[0].mxu0
    %v429 = vadd.f32 0.0, %v428
    %v430 = vpop.f32.mrb[0].mxu0
    %431 = vmatprep.mubr.f32.mxu0 0.0
    %432 = vmatmul.mubr.f32.gmra.mrb[0].mxu0 %v95
    %v433 = vpop.f32.mrb[0].mxu0
    %v434 = vadd.f32 0.0, %v433
    %v435 = vpop.f32.mrb[0].mxu0
    %436 = vmatprep.mubr.f32.mxu0 0.0
    %437 = vmatmul.mubr.f32.gmra.mrb[0].mxu0 %v96
    %v438 = vpop.f32.mrb[0].mxu0
    %v439 = vadd.f32 0.0, %v438
    %v440 = vpop.f32.mrb[0].mxu0
    %441 = vmatprep.mubr.f32.mxu0 0.0
    %442 = vmatmul.mubr.f32.gmra.mrb[0].mxu0 %v97
    %v443 = vpop.f32.mrb[0].mxu0
    %v444 = vadd.f32 0.0, %v443
    %v445 = vpop.f32.mrb[0].mxu0
    %446 = vmatprep.mubr.f32.mxu0 0.0
    %447 = vmatmul.mubr.f32.gmra.mrb[0].mxu0 %v98
    %v448 = vpop.f32.mrb[0].mxu0
    %v449 = vadd.f32 0.0, %v448
    %v450 = vpop.f32.mrb[0].mxu0
    %451 = vmatprep.mubr.f32.mxu0 0.0
    %452 = vmatmul.mubr.f32.gmra.mrb[0].mxu0 %v99
    %v453 = vpop.f32.mrb[0].mxu0
    %v454 = vadd.f32 0.0, %v453
    %v455 = vpop.f32.mrb[0].mxu0
    %456 = vmatprep.mubr.f32.mxu0 0.0
    %457 = vmatmul.mubr.f32.gmra.mrb[0].mxu0 %v100
    %v458 = vpop.f32.mrb[0].mxu0
    %v459 = vadd.f32 0.0, %v458
    %v460 = vpop.f32.mrb[0].mxu0
    %461 = vmatprep.mubr.f32.mxu0 0.0
    %462 = vmatmul.mubr.f32.gmra.mrb[0].mxu0 %v101
    %v463 = vpop.f32.mrb[0].mxu0
    %v464 = vadd.f32 0.0, %v463
    %v465 = vpop.f32.mrb[0].mxu0
    %466 = vmatprep.mubr.f32.mxu0 0.0
    %467 = vmatmul.mubr.f32.gmra.mrb[0].mxu0 %v102
    %v468 = vpop.f32.mrb[0].mxu0
    %v469 = vadd.f32 0.0, %v468
    %v470 = vpop.f32.mrb[0].mxu0
    %471 = vmatprep.mubr.f32.mxu0 0.0
    %472 = vmatmul.mubr.f32.gmra.mrb[0].mxu0 %v103
    %v473 = vpop.f32.mrb[0].mxu0
    %v474 = vadd.f32 0.0, %v473
    %v475 = vpop.f32.mrb[0].mxu0
    %476 = vmatprep.mubr.f32.mxu0 0.0
    %477 = vmatmul.mubr.f32.gmra.mrb[0].mxu0 %v104
    %v478 = vpop.f32.mrb[0].mxu0
    %v479 = vadd.f32 0.0, %v478
    %v480 = vpop.f32.mrb[0].mxu0
    %481 = vmatprep.mubr.f32.mxu0 0.0
    %482 = vmatmul.mubr.f32.gmra.mrb[0].mxu0 %v105
    %v483 = vpop.f32.mrb[0].mxu0
    %v484 = vadd.f32 0.0, %v483
    %v485 = vpop.f32.mrb[0].mxu0
    %486 = vmatprep.mubr.f32.mxu0 0.0
    %487 = vmatmul.mubr.f32.gmra.mrb[0].mxu0 %v106
    %v488 = vpop.f32.mrb[0].mxu0
    %v489 = vadd.f32 0.0, %v488
    %v490 = vpop.f32.mrb[0].mxu0
    %491 = vdwg.mxu0
    %v492 = vld [vmem:[%s0] sm:$0xff]
    %v493 = vld [vmem:[%s0 + $0x8] sm:$0xff]
    %v494 = vld [vmem:[%s0 + $0x10] sm:$0xff]
    %v495 = vld [vmem:[%s0 + $0x18] sm:$0xff]
    %v496 = vld [vmem:[%s0 + $0x20] sm:$0xff]
    %v497 = vld [vmem:[%s0 + $0x28] sm:$0xff]
    %v498 = vld [vmem:[%s0 + $0x30] sm:$0xff]
    %v499 = vld [vmem:[%s0 + $0x38] sm:$0xff]
    %v500 = vld [vmem:[%s0 + $0x40] sm:$0xff]
    %v501 = vld [vmem:[%s0 + $0x48] sm:$0xff]
    %v502 = vld [vmem:[%s0 + $0x50] sm:$0xff]
    %v503 = vld [vmem:[%s0 + $0x58] sm:$0xff]
    %v504 = vld [vmem:[%s0 + $0x60] sm:$0xff]
    %v505 = vld [vmem:[%s0 + $0x68] sm:$0xff]
    %v506 = vld [vmem:[%s0 + $0x70] sm:$0xff]
    %v507 = vld [vmem:[%s0 + $0x78] sm:$0xff]
    %v508 = vld [vmem:[%s0 + $0x80] sm:$0xff]
    %v509 = vld [vmem:[%s0 + $0x88] sm:$0xff]
    %v510 = vld [vmem:[%s0 + $0x90] sm:$0xff]
    %v511 = vld [vmem:[%s0 + $0x98] sm:$0xff]
    %v512 = vld [vmem:[%s0 + $0xa0] sm:$0xff]
    %v513 = vld [vmem:[%s0 + $0xa8] sm:$0xff]
    %v514 = vld [vmem:[%s0 + $0xb0] sm:$0xff]
    %v515 = vld [vmem:[%s0 + $0xb8] sm:$0xff]
    %v516 = vld [vmem:[%s0 + $0xc0] sm:$0xff]
    %v517 = vld [vmem:[%s0 + $0xc8] sm:$0xff]
    %v518 = vld [vmem:[%s0 + $0xd0] sm:$0xff]
    %v519 = vld [vmem:[%s0 + $0xd8] sm:$0xff]
    %v520 = vld [vmem:[%s0 + $0xe0] sm:$0xff]
    %v521 = vld [vmem:[%s0 + $0xe8] sm:$0xff]
    %v522 = vld [vmem:[%s0 + $0xf0] sm:$0xff]
    %v523 = vld [vmem:[%s0 + $0xf8] sm:$0xff]
    %v524 = vld [vmem:[%s0 + $0x100] sm:$0xff]
    %v525 = vld [vmem:[%s0 + $0x108] sm:$0xff]
    %v526 = vld [vmem:[%s0 + $0x110] sm:$0xff]
    %v527 = vld [vmem:[%s0 + $0x118] sm:$0xff]
    %v528 = vld [vmem:[%s0 + $0x120] sm:$0xff]
    %v529 = vld [vmem:[%s0 + $0x128] sm:$0xff]
    %v530 = vld [vmem:[%s0 + $0x130] sm:$0xff]
    %v531 = vld [vmem:[%s0 + $0x138] sm:$0xff]
    %v532 = vld [vmem:[%s0 + $0x140] sm:$0xff]
    %v533 = vld [vmem:[%s0 + $0x148] sm:$0xff]
    %v534 = vld [vmem:[%s0 + $0x150] sm:$0xff]
    %v535 = vld [vmem:[%s0 + $0x158] sm:$0xff]
    %v536 = vld [vmem:[%s0 + $0x160] sm:$0xff]
    %v537 = vld [vmem:[%s0 + $0x168] sm:$0xff]
    %v538 = vld [vmem:[%s0 + $0x170] sm:$0xff]
    %v539 = vld [vmem:[%s0 + $0x178] sm:$0xff]
    %v540 = vld [vmem:[%s0 + $0x180] sm:$0xff]
    %v541 = vld [vmem:[%s0 + $0x188] sm:$0xff]
    %v542 = vld [vmem:[%s0 + $0x190] sm:$0xff]
    %v543 = vld [vmem:[%s0 + $0x198] sm:$0xff]
    %v544 = vld [vmem:[%s0 + $0x1a0] sm:$0xff]
    %v545 = vld [vmem:[%s0 + $0x1a8] sm:$0xff]
    %v546 = vld [vmem:[%s0 + $0x1b0] sm:$0xff]
    %v547 = vld [vmem:[%s0 + $0x1b8] sm:$0xff]
    %v548 = vld [vmem:[%s0 + $0x1c0] sm:$0xff]
    %v549 = vld [vmem:[%s0 + $0x1c8] sm:$0xff]
    %v550 = vld [vmem:[%s0 + $0x1d0] sm:$0xff]
    %v551 = vld [vmem:[%s0 + $0x1d8] sm:$0xff]
    %v552 = vld [vmem:[%s0 + $0x1e0] sm:$0xff]
    %v553 = vld [vmem:[%s0 + $0x1e8] sm:$0xff]
    %v554 = vld [vmem:[%s0 + $0x1f0] sm:$0xff]
    %v555 = vld [vmem:[%s0 + $0x1f8] sm:$0xff]
    %620 = vrot.lane.b32.xlu0 %v174, 4
    %v621 = vpop.permute.xlu0 %620
    %622 = vrot.lane.b32.xlu0 %v179, 4
    %v623 = vpop.permute.xlu0 %622
    %624 = vrot.lane.b32.xlu0 %v184, 4
    %v625 = vpop.permute.xlu0 %624
    %626 = vrot.lane.b32.xlu0 %v189, 4
    %v627 = vpop.permute.xlu0 %626
    %628 = vrot.lane.b32.xlu0 %v194, 4
    %v629 = vpop.permute.xlu0 %628
    %630 = vrot.lane.b32.xlu0 %v199, 4
    %v631 = vpop.permute.xlu0 %630
    %632 = vrot.lane.b32.xlu0 %v204, 4
    %v633 = vpop.permute.xlu0 %632
    %634 = vrot.lane.b32.xlu0 %v209, 4
    %v635 = vpop.permute.xlu0 %634
    %636 = vrot.lane.b32.xlu0 %v214, 4
    %v637 = vpop.permute.xlu0 %636
    %638 = vrot.lane.b32.xlu0 %v219, 4
    %v639 = vpop.permute.xlu0 %638
    %640 = vrot.lane.b32.xlu0 %v224, 4
    %v641 = vpop.permute.xlu0 %640
    %642 = vrot.lane.b32.xlu0 %v229, 4
    %v643 = vpop.permute.xlu0 %642
    %644 = vrot.lane.b32.xlu0 %v234, 4
    %v645 = vpop.permute.xlu0 %644
    %646 = vrot.lane.b32.xlu0 %v239, 4
    %v647 = vpop.permute.xlu0 %646
    %648 = vrot.lane.b32.xlu0 %v244, 4
    %v649 = vpop.permute.xlu0 %648
    %650 = vrot.lane.b32.xlu0 %v249, 4
    %v651 = vpop.permute.xlu0 %650
    %652 = vrot.lane.b32.xlu0 %v254, 4
    %v653 = vpop.permute.xlu0 %652
    %654 = vrot.lane.b32.xlu0 %v259, 4
    %v655 = vpop.permute.xlu0 %654
    %656 = vrot.lane.b32.xlu0 %v264, 4
    %v657 = vpop.permute.xlu0 %656
    %658 = vrot.lane.b32.xlu0 %v269, 4
    %v659 = vpop.permute.xlu0 %658
    %660 = vrot.lane.b32.xlu0 %v274, 4
    %v661 = vpop.permute.xlu0 %660
    %662 = vrot.lane.b32.xlu0 %v279, 4
    %v663 = vpop.permute.xlu0 %662
    %664 = vrot.lane.b32.xlu0 %v284, 4
    %v665 = vpop.permute.xlu0 %664
    %666 = vrot.lane.b32.xlu0 %v289, 4
    %v667 = vpop.permute.xlu0 %666
    %668 = vrot.lane.b32.xlu0 %v294, 4
    %v669 = vpop.permute.xlu0 %668
    %670 = vrot.lane.b32.xlu0 %v299, 4
    %v671 = vpop.permute.xlu0 %670
    %672 = vrot.lane.b32.xlu0 %v304, 4
    %v673 = vpop.permute.xlu0 %672
    %674 = vrot.lane.b32.xlu0 %v309, 4
    %v675 = vpop.permute.xlu0 %674
    %676 = vrot.lane.b32.xlu0 %v314, 4
    %v677 = vpop.permute.xlu0 %676
    %678 = vrot.lane.b32.xlu0 %v319, 4
    %v679 = vpop.permute.xlu0 %678
    %680 = vrot.lane.b32.xlu0 %v324, 4
    %v681 = vpop.permute.xlu0 %680
    %682 = vrot.lane.b32.xlu0 %v329, 4
    %v683 = vpop.permute.xlu0 %682
    %684 = vrot.lane.b32.xlu0 %v334, 4
    %v685 = vpop.permute.xlu0 %684
    %686 = vrot.lane.b32.xlu0 %v339, 4
    %v687 = vpop.permute.xlu0 %686
    %688 = vrot.lane.b32.xlu0 %v344, 4
    %v689 = vpop.permute.xlu0 %688
    %690 = vrot.lane.b32.xlu0 %v349, 4
    %v691 = vpop.permute.xlu0 %690
    %692 = vrot.lane.b32.xlu0 %v354, 4
    %v693 = vpop.permute.xlu0 %692
    %694 = vrot.lane.b32.xlu0 %v359, 4
    %v695 = vpop.permute.xlu0 %694
    %696 = vrot.lane.b32.xlu0 %v364, 4
    %v697 = vpop.permute.xlu0 %696
    %698 = vrot.lane.b32.xlu0 %v369, 4
    %v699 = vpop.permute.xlu0 %698
    %700 = vrot.lane.b32.xlu0 %v374, 4
    %v701 = vpop.permute.xlu0 %700
    %702 = vrot.lane.b32.xlu0 %v379, 4
    %v703 = vpop.permute.xlu0 %702
    %704 = vrot.lane.b32.xlu0 %v384, 4
    %v705 = vpop.permute.xlu0 %704
    %706 = vrot.lane.b32.xlu0 %v389, 4
    %v707 = vpop.permute.xlu0 %706
    %708 = vrot.lane.b32.xlu0 %v394, 4
    %v709 = vpop.permute.xlu0 %708
    %710 = vrot.lane.b32.xlu0 %v399, 4
    %v711 = vpop.permute.xlu0 %710
    %712 = vrot.lane.b32.xlu0 %v404, 4
    %v713 = vpop.permute.xlu0 %712
    %714 = vrot.lane.b32.xlu0 %v409, 4
    %v715 = vpop.permute.xlu0 %714
    %716 = vrot.lane.b32.xlu0 %v414, 4
    %v717 = vpop.permute.xlu0 %716
    %718 = vrot.lane.b32.xlu0 %v419, 4
    %v719 = vpop.permute.xlu0 %718
    %720 = vrot.lane.b32.xlu0 %v424, 4
    %v721 = vpop.permute.xlu0 %720
    %722 = vrot.lane.b32.xlu0 %v429, 4
    %v723 = vpop.permute.xlu0 %722
    %724 = vrot.lane.b32.xlu0 %v434, 4
    %v725 = vpop.permute.xlu0 %724
    %726 = vrot.lane.b32.xlu0 %v439, 4
    %v727 = vpop.permute.xlu0 %726
    %728 = vrot.lane.b32.xlu0 %v444, 4
    %v729 = vpop.permute.xlu0 %728
    %730 = vrot.lane.b32.xlu0 %v449, 4
    %v731 = vpop.permute.xlu0 %730
    %732 = vrot.lane.b32.xlu0 %v454, 4
    %v733 = vpop.permute.xlu0 %732
    %734 = vrot.lane.b32.xlu0 %v459, 4
    %v735 = vpop.permute.xlu0 %734
    %736 = vrot.lane.b32.xlu0 %v464, 4
    %v737 = vpop.permute.xlu0 %736
    %738 = vrot.lane.b32.xlu0 %v469, 4
    %v739 = vpop.permute.xlu0 %738
    %740 = vrot.lane.b32.xlu0 %v474, 4
    %v741 = vpop.permute.xlu0 %740
    %742 = vrot.lane.b32.xlu0 %v479, 4
    %v743 = vpop.permute.xlu0 %742
    %744 = vrot.lane.b32.xlu0 %v484, 4
    %v745 = vpop.permute.xlu0 %744
    %746 = vrot.lane.b32.xlu0 %v489, 4
    %v747 = vpop.permute.xlu0 %746
    %vm812 = vcmask 31744
    %v813 = vsel %vm812, %v492, %v621
    %v814 = vsel %vm812, %v493, %v623
    %v815 = vsel %vm812, %v494, %v625
    %v816 = vsel %vm812, %v495, %v627
    %v817 = vsel %vm812, %v496, %v629
    %v818 = vsel %vm812, %v497, %v631
    %v819 = vsel %vm812, %v498, %v633
    %v820 = vsel %vm812, %v499, %v635
    %v821 = vsel %vm812, %v500, %v637
    %v822 = vsel %vm812, %v501, %v639
    %v823 = vsel %vm812, %v502, %v641
    %v824 = vsel %vm812, %v503, %v643
    %v825 = vsel %vm812, %v504, %v645
    %v826 = vsel %vm812, %v505, %v647
    %v827 = vsel %vm812, %v506, %v649
    %v828 = vsel %vm812, %v507, %v651
    %v829 = vsel %vm812, %v508, %v653
    %v830 = vsel %vm812, %v509, %v655
    %v831 = vsel %vm812, %v510, %v657
    %v832 = vsel %vm812, %v511, %v659
    %v833 = vsel %vm812, %v512, %v661
    %v834 = vsel %vm812, %v513, %v663
    %v835 = vsel %vm812, %v514, %v665
    %v836 = vsel %vm812, %v515, %v667
    %v837 = vsel %vm812, %v516, %v669
    %v838 = vsel %vm812, %v517, %v671
    %v839 = vsel %vm812, %v518, %v673
    %v840 = vsel %vm812, %v519, %v675
    %v841 = vsel %vm812, %v520, %v677
    %v842 = vsel %vm812, %v521, %v679
    %v843 = vsel %vm812, %v522, %v681
    %v844 = vsel %vm812, %v523, %v683
    %v845 = vsel %vm812, %v524, %v685
    %v846 = vsel %vm812, %v525, %v687
    %v847 = vsel %vm812, %v526, %v689
    %v848 = vsel %vm812, %v527, %v691
    %v849 = vsel %vm812, %v528, %v693
    %v850 = vsel %vm812, %v529, %v695
    %v851 = vsel %vm812, %v530, %v697
    %v852 = vsel %vm812, %v531, %v699
    %v853 = vsel %vm812, %v532, %v701
    %v854 = vsel %vm812, %v533, %v703
    %v855 = vsel %vm812, %v534, %v705
    %v856 = vsel %vm812, %v535, %v707
    %v857 = vsel %vm812, %v536, %v709
    %v858 = vsel %vm812, %v537, %v711
    %v859 = vsel %vm812, %v538, %v713
    %v860 = vsel %vm812, %v539, %v715
    %v861 = vsel %vm812, %v540, %v717
    %v862 = vsel %vm812, %v541, %v719
    %v863 = vsel %vm812, %v542, %v721
    %v864 = vsel %vm812, %v543, %v723
    %v865 = vsel %vm812, %v544, %v725
    %v866 = vsel %vm812, %v545, %v727
    %v867 = vsel %vm812, %v546, %v729
    %v868 = vsel %vm812, %v547, %v731
    %v869 = vsel %vm812, %v548, %v733
    %v870 = vsel %vm812, %v549, %v735
    %v871 = vsel %vm812, %v550, %v737
    %v872 = vsel %vm812, %v551, %v739
    %v873 = vsel %vm812, %v552, %v741
    %v874 = vsel %vm812, %v553, %v743
    %v875 = vsel %vm812, %v554, %v745
    %v876 = vsel %vm812, %v555, %v747
    %vm942 = vcmask 1040384
    %v943 = vrot.slane 0.0, 7
    %v944 = vsel %vm942, %v943, %v943
    %v945 = vrot.slane %v813, 7
    %v946 = vrot.slane %v814, 7
    %v947 = vsel %vm942, %v945, %v946
    %v948 = vrot.slane %v815, 7
    %v949 = vrot.slane %v816, 7
    %v950 = vsel %vm942, %v948, %v949
    %v951 = vrot.slane %v817, 7
    %v952 = vrot.slane %v818, 7
    %v953 = vsel %vm942, %v951, %v952
    %v954 = vrot.slane %v819, 7
    %v955 = vrot.slane %v820, 7
    %v956 = vsel %vm942, %v954, %v955
    %v957 = vrot.slane %v821, 7
    %v958 = vrot.slane %v822, 7
    %v959 = vsel %vm942, %v957, %v958
    %v960 = vrot.slane %v823, 7
    %v961 = vrot.slane %v824, 7
    %v962 = vsel %vm942, %v960, %v961
    %v963 = vrot.slane %v825, 7
    %v964 = vrot.slane %v826, 7
    %v965 = vsel %vm942, %v963, %v964
    %v966 = vrot.slane %v827, 7
    %v967 = vrot.slane %v828, 7
    %v968 = vsel %vm942, %v966, %v967
    %v969 = vrot.slane %v829, 7
    %v970 = vrot.slane %v830, 7
    %v971 = vsel %vm942, %v969, %v970
    %v972 = vrot.slane %v831, 7
    %v973 = vrot.slane %v832, 7
    %v974 = vsel %vm942, %v972, %v973
    %v975 = vrot.slane %v833, 7
    %v976 = vrot.slane %v834, 7
    %v977 = vsel %vm942, %v975, %v976
    %v978 = vrot.slane %v835, 7
    %v979 = vrot.slane %v836, 7
    %v980 = vsel %vm942, %v978, %v979
    %v981 = vrot.slane %v837, 7
    %v982 = vrot.slane %v838, 7
    %v983 = vsel %vm942, %v981, %v982
    %v984 = vrot.slane %v839, 7
    %v985 = vrot.slane %v840, 7
    %v986 = vsel %vm942, %v984, %v985
    %v987 = vrot.slane %v841, 7
    %v988 = vrot.slane %v842, 7
    %v989 = vsel %vm942, %v987, %v988
    %v990 = vrot.slane %v843, 7
    %v991 = vrot.slane %v844, 7
    %v992 = vsel %vm942, %v990, %v991
    %v993 = vrot.slane %v845, 7
    %v994 = vrot.slane %v846, 7
    %v995 = vsel %vm942, %v993, %v994
    %v996 = vrot.slane %v847, 7
    %v997 = vrot.slane %v848, 7
    %v998 = vsel %vm942, %v996, %v997
    %v999 = vrot.slane %v849, 7
    %v1000 = vrot.slane %v850, 7
    %v1001 = vsel %vm942, %v999, %v1000
    %v1002 = vrot.slane %v851, 7
    %v1003 = vrot.slane %v852, 7
    %v1004 = vsel %vm942, %v1002, %v1003
    %v1005 = vrot.slane %v853, 7
    %v1006 = vrot.slane %v854, 7
    %v1007 = vsel %vm942, %v1005, %v1006
    %v1008 = vrot.slane %v855, 7
    %v1009 = vrot.slane %v856, 7
    %v1010 = vsel %vm942, %v1008, %v1009
    %v1011 = vrot.slane %v857, 7
    %v1012 = vrot.slane %v858, 7
    %v1013 = vsel %vm942, %v1011, %v1012
    %v1014 = vrot.slane %v859, 7
    %v1015 = vrot.slane %v860, 7
    %v1016 = vsel %vm942, %v1014, %v1015
    %v1017 = vrot.slane %v861, 7
    %v1018 = vrot.slane %v862, 7
    %v1019 = vsel %vm942, %v1017, %v1018
    %v1020 = vrot.slane %v863, 7
    %v1021 = vrot.slane %v864, 7
    %v1022 = vsel %vm942, %v1020, %v1021
    %v1023 = vrot.slane %v865, 7
    %v1024 = vrot.slane %v866, 7
    %v1025 = vsel %vm942, %v1023, %v1024
    %v1026 = vrot.slane %v867, 7
    %v1027 = vrot.slane %v868, 7
    %v1028 = vsel %vm942, %v1026, %v1027
    %v1029 = vrot.slane %v869, 7
    %v1030 = vrot.slane %v870, 7
    %v1031 = vsel %vm942, %v1029, %v1030
    %v1032 = vrot.slane %v871, 7
    %v1033 = vrot.slane %v872, 7
    %v1034 = vsel %vm942, %v1032, %v1033
    %v1035 = vrot.slane %v873, 7
    %v1036 = vrot.slane %v874, 7
    %v1037 = vsel %vm942, %v1035, %v1036
    %v1038 = vrot.slane %v875, 7
    %v1039 = vrot.slane %v876, 7
    %v1040 = vsel %vm942, %v1038, %v1039
    %v1137 = vsel %vm942, 0.0, %v943
    %v1138 = vsel %vm942, 0.0, %v945
    %v1139 = vsel %vm942, 0.0, %v948
    %v1140 = vsel %vm942, 0.0, %v951
    %v1141 = vsel %vm942, 0.0, %v954
    %v1142 = vsel %vm942, 0.0, %v957
    %v1143 = vsel %vm942, 0.0, %v960
    %v1144 = vsel %vm942, 0.0, %v963
    %v1145 = vsel %vm942, 0.0, %v966
    %v1146 = vsel %vm942, 0.0, %v969
    %v1147 = vsel %vm942, 0.0, %v972
    %v1148 = vsel %vm942, 0.0, %v975
    %v1149 = vsel %vm942, 0.0, %v978
    %v1150 = vsel %vm942, 0.0, %v981
    %v1151 = vsel %vm942, 0.0, %v984
    %v1152 = vsel %vm942, 0.0, %v987
    %v1153 = vsel %vm942, 0.0, %v990
    %v1154 = vsel %vm942, 0.0, %v993
    %v1155 = vsel %vm942, 0.0, %v996
    %v1156 = vsel %vm942, 0.0, %v999
    %v1157 = vsel %vm942, 0.0, %v1002
    %v1158 = vsel %vm942, 0.0, %v1005
    %v1159 = vsel %vm942, 0.0, %v1008
    %v1160 = vsel %vm942, 0.0, %v1011
    %v1161 = vsel %vm942, 0.0, %v1014
    %v1162 = vsel %vm942, 0.0, %v1017
    %v1163 = vsel %vm942, 0.0, %v1020
    %v1164 = vsel %vm942, 0.0, %v1023
    %v1165 = vsel %vm942, 0.0, %v1026
    %v1166 = vsel %vm942, 0.0, %v1029
    %v1167 = vsel %vm942, 0.0, %v1032
    %v1168 = vsel %vm942, 0.0, %v1035
    %v1169 = vsel %vm942, 0.0, %v1038
    %v1170 = vsel %vm942, %v943, 0.0
    %v1171 = vsel %vm942, %v946, 0.0
    %v1172 = vsel %vm942, %v949, 0.0
    %v1173 = vsel %vm942, %v952, 0.0
    %v1174 = vsel %vm942, %v955, 0.0
    %v1175 = vsel %vm942, %v958, 0.0
    %v1176 = vsel %vm942, %v961, 0.0
    %v1177 = vsel %vm942, %v964, 0.0
    %v1178 = vsel %vm942, %v967, 0.0
    %v1179 = vsel %vm942, %v970, 0.0
    %v1180 = vsel %vm942, %v973, 0.0
    %v1181 = vsel %vm942, %v976, 0.0
    %v1182 = vsel %vm942, %v979, 0.0
    %v1183 = vsel %vm942, %v982, 0.0
    %v1184 = vsel %vm942, %v985, 0.0
    %v1185 = vsel %vm942, %v988, 0.0
    %v1186 = vsel %vm942, %v991, 0.0
    %v1187 = vsel %vm942, %v994, 0.0
    %v1188 = vsel %vm942, %v997, 0.0
    %v1189 = vsel %vm942, %v1000, 0.0
    %v1190 = vsel %vm942, %v1003, 0.0
    %v1191 = vsel %vm942, %v1006, 0.0
    %v1192 = vsel %vm942, %v1009, 0.0
    %v1193 = vsel %vm942, %v1012, 0.0
    %v1194 = vsel %vm942, %v1015, 0.0
    %v1195 = vsel %vm942, %v1018, 0.0
    %v1196 = vsel %vm942, %v1021, 0.0
    %v1197 = vsel %vm942, %v1024, 0.0
    %v1198 = vsel %vm942, %v1027, 0.0
    %v1199 = vsel %vm942, %v1030, 0.0
    %v1200 = vsel %vm942, %v1033, 0.0
    %v1201 = vsel %vm942, %v1036, 0.0
    %v1202 = vsel %vm942, %v1039, 0.0
    %vm1265 = vcmask 1046528
    %v1266 = vrot.slane %v1137, 1
    %v1267 = vrot.slane %v944, 1
    %v1268 = vsel %vm1265, %v1266, %v1267
    %v1269 = vrot.slane %v1170, 1
    %v1270 = vsel %vm1265, %v1267, %v1269
    %v1271 = vrot.slane %v1138, 1
    %v1272 = vrot.slane %v947, 1
    %v1273 = vsel %vm1265, %v1271, %v1272
    %v1274 = vrot.slane %v1171, 1
    %v1275 = vsel %vm1265, %v1272, %v1274
    %v1276 = vrot.slane %v1139, 1
    %v1277 = vrot.slane %v950, 1
    %v1278 = vsel %vm1265, %v1276, %v1277
    %v1279 = vrot.slane %v1172, 1
    %v1280 = vsel %vm1265, %v1277, %v1279
    %v1281 = vrot.slane %v1140, 1
    %v1282 = vrot.slane %v953, 1
    %v1283 = vsel %vm1265, %v1281, %v1282
    %v1284 = vrot.slane %v1173, 1
    %v1285 = vsel %vm1265, %v1282, %v1284
    %v1286 = vrot.slane %v1141, 1
    %v1287 = vrot.slane %v956, 1
    %v1288 = vsel %vm1265, %v1286, %v1287
    %v1289 = vrot.slane %v1174, 1
    %v1290 = vsel %vm1265, %v1287, %v1289
    %v1291 = vrot.slane %v1142, 1
    %v1292 = vrot.slane %v959, 1
    %v1293 = vsel %vm1265, %v1291, %v1292
    %v1294 = vrot.slane %v1175, 1
    %v1295 = vsel %vm1265, %v1292, %v1294
    %v1296 = vrot.slane %v1143, 1
    %v1297 = vrot.slane %v962, 1
    %v1298 = vsel %vm1265, %v1296, %v1297
    %v1299 = vrot.slane %v1176, 1
    %v1300 = vsel %vm1265, %v1297, %v1299
    %v1301 = vrot.slane %v1144, 1
    %v1302 = vrot.slane %v965, 1
    %v1303 = vsel %vm1265, %v1301, %v1302
    %v1304 = vrot.slane %v1177, 1
    %v1305 = vsel %vm1265, %v1302, %v1304
    %v1306 = vrot.slane %v1145, 1
    %v1307 = vrot.slane %v968, 1
    %v1308 = vsel %vm1265, %v1306, %v1307
    %v1309 = vrot.slane %v1178, 1
    %v1310 = vsel %vm1265, %v1307, %v1309
    %v1311 = vrot.slane %v1146, 1
    %v1312 = vrot.slane %v971, 1
    %v1313 = vsel %vm1265, %v1311, %v1312
    %v1314 = vrot.slane %v1179, 1
    %v1315 = vsel %vm1265, %v1312, %v1314
    %v1316 = vrot.slane %v1147, 1
    %v1317 = vrot.slane %v974, 1
    %v1318 = vsel %vm1265, %v1316, %v1317
    %v1319 = vrot.slane %v1180, 1
    %v1320 = vsel %vm1265, %v1317, %v1319
    %v1321 = vrot.slane %v1148, 1
    %v1322 = vrot.slane %v977, 1
    %v1323 = vsel %vm1265, %v1321, %v1322
    %v1324 = vrot.slane %v1181, 1
    %v1325 = vsel %vm1265, %v1322, %v1324
    %v1326 = vrot.slane %v1149, 1
    %v1327 = vrot.slane %v980, 1
    %v1328 = vsel %vm1265, %v1326, %v1327
    %v1329 = vrot.slane %v1182, 1
    %v1330 = vsel %vm1265, %v1327, %v1329
    %v1331 = vrot.slane %v1150, 1
    %v1332 = vrot.slane %v983, 1
    %v1333 = vsel %vm1265, %v1331, %v1332
    %v1334 = vrot.slane %v1183, 1
    %v1335 = vsel %vm1265, %v1332, %v1334
    %v1336 = vrot.slane %v1151, 1
    %v1337 = vrot.slane %v986, 1
    %v1338 = vsel %vm1265, %v1336, %v1337
    %v1339 = vrot.slane %v1184, 1
    %v1340 = vsel %vm1265, %v1337, %v1339
    %v1341 = vrot.slane %v1152, 1
    %v1342 = vrot.slane %v989, 1
    %v1343 = vsel %vm1265, %v1341, %v1342
    %v1344 = vrot.slane %v1185, 1
    %v1345 = vsel %vm1265, %v1342, %v1344
    %v1346 = vrot.slane %v1154, 1
    %v1347 = vrot.slane %v995, 1
    %v1348 = vsel %vm1265, %v1346, %v1347
    %v1349 = vrot.slane %v1187, 1
    %v1350 = vsel %vm1265, %v1347, %v1349
    %v1351 = vrot.slane %v1155, 1
    %v1352 = vrot.slane %v998, 1
    %v1353 = vsel %vm1265, %v1351, %v1352
    %v1354 = vrot.slane %v1188, 1
    %v1355 = vsel %vm1265, %v1352, %v1354
    %v1356 = vrot.slane %v1156, 1
    %v1357 = vrot.slane %v1001, 1
    %v1358 = vsel %vm1265, %v1356, %v1357
    %v1359 = vrot.slane %v1189, 1
    %v1360 = vsel %vm1265, %v1357, %v1359
    %v1361 = vrot.slane %v1157, 1
    %v1362 = vrot.slane %v1004, 1
    %v1363 = vsel %vm1265, %v1361, %v1362
    %v1364 = vrot.slane %v1190, 1
    %v1365 = vsel %vm1265, %v1362, %v1364
    %v1366 = vrot.slane %v1158, 1
    %v1367 = vrot.slane %v1007, 1
    %v1368 = vsel %vm1265, %v1366, %v1367
    %v1369 = vrot.slane %v1191, 1
    %v1370 = vsel %vm1265, %v1367, %v1369
    %v1371 = vrot.slane %v1159, 1
    %v1372 = vrot.slane %v1010, 1
    %v1373 = vsel %vm1265, %v1371, %v1372
    %v1374 = vrot.slane %v1192, 1
    %v1375 = vsel %vm1265, %v1372, %v1374
    %v1376 = vrot.slane %v1160, 1
    %v1377 = vrot.slane %v1013, 1
    %v1378 = vsel %vm1265, %v1376, %v1377
    %v1379 = vrot.slane %v1193, 1
    %v1380 = vsel %vm1265, %v1377, %v1379
    %v1381 = vrot.slane %v1161, 1
    %v1382 = vrot.slane %v1016, 1
    %v1383 = vsel %vm1265, %v1381, %v1382
    %v1384 = vrot.slane %v1194, 1
    %v1385 = vsel %vm1265, %v1382, %v1384
    %v1386 = vrot.slane %v1162, 1
    %v1387 = vrot.slane %v1019, 1
    %v1388 = vsel %vm1265, %v1386, %v1387
    %v1389 = vrot.slane %v1195, 1
    %v1390 = vsel %vm1265, %v1387, %v1389
    %v1391 = vrot.slane %v1163, 1
    %v1392 = vrot.slane %v1022, 1
    %v1393 = vsel %vm1265, %v1391, %v1392
    %v1394 = vrot.slane %v1196, 1
    %v1395 = vsel %vm1265, %v1392, %v1394
    %v1396 = vrot.slane %v1164, 1
    %v1397 = vrot.slane %v1025, 1
    %v1398 = vsel %vm1265, %v1396, %v1397
    %v1399 = vrot.slane %v1197, 1
    %v1400 = vsel %vm1265, %v1397, %v1399
    %v1401 = vrot.slane %v1165, 1
    %v1402 = vrot.slane %v1028, 1
    %v1403 = vsel %vm1265, %v1401, %v1402
    %v1404 = vrot.slane %v1198, 1
    %v1405 = vsel %vm1265, %v1402, %v1404
    %v1406 = vrot.slane %v1166, 1
    %v1407 = vrot.slane %v1031, 1
    %v1408 = vsel %vm1265, %v1406, %v1407
    %v1409 = vrot.slane %v1199, 1
    %v1410 = vsel %vm1265, %v1407, %v1409
    %v1411 = vrot.slane %v1167, 1
    %v1412 = vrot.slane %v1034, 1
    %v1413 = vsel %vm1265, %v1411, %v1412
    %v1414 = vrot.slane %v1200, 1
    %v1415 = vsel %vm1265, %v1412, %v1414
    %v1416 = vrot.slane %v1168, 1
    %v1417 = vrot.slane %v1037, 1
    %v1418 = vsel %vm1265, %v1416, %v1417
    %v1419 = vrot.slane %v1201, 1
    %v1420 = vsel %vm1265, %v1417, %v1419
    %1421 = vrot.lane.b32.xlu0 %v1268, 8
    %v1422 = vpop.permute.xlu0 %1421
    %1423 = vrot.lane.b32.xlu0 %v1270, 8
    %v1424 = vpop.permute.xlu0 %1423
    %1425 = vrot.lane.b32.xlu0 %v1273, 8
    %v1426 = vpop.permute.xlu0 %1425
    %1427 = vrot.lane.b32.xlu0 %v1275, 8
    %v1428 = vpop.permute.xlu0 %1427
    %1429 = vrot.lane.b32.xlu0 %v1278, 8
    %v1430 = vpop.permute.xlu0 %1429
    %1431 = vrot.lane.b32.xlu0 %v1280, 8
    %v1432 = vpop.permute.xlu0 %1431
    %1433 = vrot.lane.b32.xlu0 %v1283, 8
    %v1434 = vpop.permute.xlu0 %1433
    %1435 = vrot.lane.b32.xlu0 %v1285, 8
    %v1436 = vpop.permute.xlu0 %1435
    %1437 = vrot.lane.b32.xlu0 %v1288, 8
    %v1438 = vpop.permute.xlu0 %1437
    %1439 = vrot.lane.b32.xlu0 %v1290, 8
    %v1440 = vpop.permute.xlu0 %1439
    %1441 = vrot.lane.b32.xlu0 %v1293, 8
    %v1442 = vpop.permute.xlu0 %1441
    %1443 = vrot.lane.b32.xlu0 %v1295, 8
    %v1444 = vpop.permute.xlu0 %1443
    %1445 = vrot.lane.b32.xlu0 %v1298, 8
    %v1446 = vpop.permute.xlu0 %1445
    %1447 = vrot.lane.b32.xlu0 %v1300, 8
    %v1448 = vpop.permute.xlu0 %1447
    %1449 = vrot.lane.b32.xlu0 %v1303, 8
    %v1450 = vpop.permute.xlu0 %1449
    %1451 = vrot.lane.b32.xlu0 %v1305, 8
    %v1452 = vpop.permute.xlu0 %1451
    %1453 = vrot.lane.b32.xlu0 %v1308, 8
    %v1454 = vpop.permute.xlu0 %1453
    %1455 = vrot.lane.b32.xlu0 %v1310, 8
    %v1456 = vpop.permute.xlu0 %1455
    %1457 = vrot.lane.b32.xlu0 %v1313, 8
    %v1458 = vpop.permute.xlu0 %1457
    %1459 = vrot.lane.b32.xlu0 %v1315, 8
    %v1460 = vpop.permute.xlu0 %1459
    %1461 = vrot.lane.b32.xlu0 %v1318, 8
    %v1462 = vpop.permute.xlu0 %1461
    %1463 = vrot.lane.b32.xlu0 %v1320, 8
    %v1464 = vpop.permute.xlu0 %1463
    %1465 = vrot.lane.b32.xlu0 %v1323, 8
    %v1466 = vpop.permute.xlu0 %1465
    %1467 = vrot.lane.b32.xlu0 %v1325, 8
    %v1468 = vpop.permute.xlu0 %1467
    %1469 = vrot.lane.b32.xlu0 %v1328, 8
    %v1470 = vpop.permute.xlu0 %1469
    %1471 = vrot.lane.b32.xlu0 %v1330, 8
    %v1472 = vpop.permute.xlu0 %1471
    %1473 = vrot.lane.b32.xlu0 %v1333, 8
    %v1474 = vpop.permute.xlu0 %1473
    %1475 = vrot.lane.b32.xlu0 %v1335, 8
    %v1476 = vpop.permute.xlu0 %1475
    %1477 = vrot.lane.b32.xlu0 %v1338, 8
    %v1478 = vpop.permute.xlu0 %1477
    %1479 = vrot.lane.b32.xlu0 %v1340, 8
    %v1480 = vpop.permute.xlu0 %1479
    %1481 = vrot.lane.b32.xlu0 %v1343, 8
    %v1482 = vpop.permute.xlu0 %1481
    %1483 = vrot.lane.b32.xlu0 %v1345, 8
    %v1484 = vpop.permute.xlu0 %1483
    %1485 = vrot.lane.b32.xlu0 %v1348, 8
    %v1486 = vpop.permute.xlu0 %1485
    %1487 = vrot.lane.b32.xlu0 %v1350, 8
    %v1488 = vpop.permute.xlu0 %1487
    %1489 = vrot.lane.b32.xlu0 %v1353, 8
    %v1490 = vpop.permute.xlu0 %1489
    %1491 = vrot.lane.b32.xlu0 %v1355, 8
    %v1492 = vpop.permute.xlu0 %1491
    %1493 = vrot.lane.b32.xlu0 %v1358, 8
    %v1494 = vpop.permute.xlu0 %1493
    %1495 = vrot.lane.b32.xlu0 %v1360, 8
    %v1496 = vpop.permute.xlu0 %1495
    %1497 = vrot.lane.b32.xlu0 %v1363, 8
    %v1498 = vpop.permute.xlu0 %1497
    %1499 = vrot.lane.b32.xlu0 %v1365, 8
    %v1500 = vpop.permute.xlu0 %1499
    %1501 = vrot.lane.b32.xlu0 %v1368, 8
    %v1502 = vpop.permute.xlu0 %1501
    %1503 = vrot.lane.b32.xlu0 %v1370, 8
    %v1504 = vpop.permute.xlu0 %1503
    %1505 = vrot.lane.b32.xlu0 %v1373, 8
    %v1506 = vpop.permute.xlu0 %1505
    %1507 = vrot.lane.b32.xlu0 %v1375, 8
    %v1508 = vpop.permute.xlu0 %1507
    %1509 = vrot.lane.b32.xlu0 %v1378, 8
    %v1510 = vpop.permute.xlu0 %1509
    %1511 = vrot.lane.b32.xlu0 %v1380, 8
    %v1512 = vpop.permute.xlu0 %1511
    %1513 = vrot.lane.b32.xlu0 %v1383, 8
    %v1514 = vpop.permute.xlu0 %1513
    %1515 = vrot.lane.b32.xlu0 %v1385, 8
    %v1516 = vpop.permute.xlu0 %1515
    %1517 = vrot.lane.b32.xlu0 %v1388, 8
    %v1518 = vpop.permute.xlu0 %1517
    %1519 = vrot.lane.b32.xlu0 %v1390, 8
    %v1520 = vpop.permute.xlu0 %1519
    %1521 = vrot.lane.b32.xlu0 %v1393, 8
    %v1522 = vpop.permute.xlu0 %1521
    %1523 = vrot.lane.b32.xlu0 %v1395, 8
    %v1524 = vpop.permute.xlu0 %1523
    %1525 = vrot.lane.b32.xlu0 %v1398, 8
    %v1526 = vpop.permute.xlu0 %1525
    %1527 = vrot.lane.b32.xlu0 %v1400, 8
    %v1528 = vpop.permute.xlu0 %1527
    %1529 = vrot.lane.b32.xlu0 %v1403, 8
    %v1530 = vpop.permute.xlu0 %1529
    %1531 = vrot.lane.b32.xlu0 %v1405, 8
    %v1532 = vpop.permute.xlu0 %1531
    %1533 = vrot.lane.b32.xlu0 %v1408, 8
    %v1534 = vpop.permute.xlu0 %1533
    %1535 = vrot.lane.b32.xlu0 %v1410, 8
    %v1536 = vpop.permute.xlu0 %1535
    %1537 = vrot.lane.b32.xlu0 %v1413, 8
    %v1538 = vpop.permute.xlu0 %1537
    %1539 = vrot.lane.b32.xlu0 %v1415, 8
    %v1540 = vpop.permute.xlu0 %1539
    %1541 = vrot.lane.b32.xlu0 %v1418, 8
    %v1542 = vpop.permute.xlu0 %1541
    %1543 = vrot.lane.b32.xlu0 %v1420, 8
    %v1544 = vpop.permute.xlu0 %1543
    %vm1607 = vcmask 1045504
    %v1608 = vrot.slane %v1137, 2
    %v1609 = vrot.slane %v944, 2
    %v1610 = vsel %vm1607, %v1608, %v1609
    %v1611 = vrot.slane %v1170, 2
    %v1612 = vsel %vm1607, %v1609, %v1611
    %v1613 = vrot.slane %v1138, 2
    %v1614 = vrot.slane %v947, 2
    %v1615 = vsel %vm1607, %v1613, %v1614
    %v1616 = vrot.slane %v1171, 2
    %v1617 = vsel %vm1607, %v1614, %v1616
    %v1618 = vrot.slane %v1139, 2
    %v1619 = vrot.slane %v950, 2
    %v1620 = vsel %vm1607, %v1618, %v1619
    %v1621 = vrot.slane %v1172, 2
    %v1622 = vsel %vm1607, %v1619, %v1621
    %v1623 = vrot.slane %v1140, 2
    %v1624 = vrot.slane %v953, 2
    %v1625 = vsel %vm1607, %v1623, %v1624
    %v1626 = vrot.slane %v1173, 2
    %v1627 = vsel %vm1607, %v1624, %v1626
    %v1628 = vrot.slane %v1141, 2
    %v1629 = vrot.slane %v956, 2
    %v1630 = vsel %vm1607, %v1628, %v1629
    %v1631 = vrot.slane %v1174, 2
    %v1632 = vsel %vm1607, %v1629, %v1631
    %v1633 = vrot.slane %v1142, 2
    %v1634 = vrot.slane %v959, 2
    %v1635 = vsel %vm1607, %v1633, %v1634
    %v1636 = vrot.slane %v1175, 2
    %v1637 = vsel %vm1607, %v1634, %v1636
    %v1638 = vrot.slane %v1143, 2
    %v1639 = vrot.slane %v962, 2
    %v1640 = vsel %vm1607, %v1638, %v1639
    %v1641 = vrot.slane %v1176, 2
    %v1642 = vsel %vm1607, %v1639, %v1641
    %v1643 = vrot.slane %v1144, 2
    %v1644 = vrot.slane %v965, 2
    %v1645 = vsel %vm1607, %v1643, %v1644
    %v1646 = vrot.slane %v1177, 2
    %v1647 = vsel %vm1607, %v1644, %v1646
    %v1648 = vrot.slane %v1145, 2
    %v1649 = vrot.slane %v968, 2
    %v1650 = vsel %vm1607, %v1648, %v1649
    %v1651 = vrot.slane %v1178, 2
    %v1652 = vsel %vm1607, %v1649, %v1651
    %v1653 = vrot.slane %v1146, 2
    %v1654 = vrot.slane %v971, 2
    %v1655 = vsel %vm1607, %v1653, %v1654
    %v1656 = vrot.slane %v1179, 2
    %v1657 = vsel %vm1607, %v1654, %v1656
    %v1658 = vrot.slane %v1147, 2
    %v1659 = vrot.slane %v974, 2
    %v1660 = vsel %vm1607, %v1658, %v1659
    %v1661 = vrot.slane %v1180, 2
    %v1662 = vsel %vm1607, %v1659, %v1661
    %v1663 = vrot.slane %v1148, 2
    %v1664 = vrot.slane %v977, 2
    %v1665 = vsel %vm1607, %v1663, %v1664
    %v1666 = vrot.slane %v1181, 2
    %v1667 = vsel %vm1607, %v1664, %v1666
    %v1668 = vrot.slane %v1149, 2
    %v1669 = vrot.slane %v980, 2
    %v1670 = vsel %vm1607, %v1668, %v1669
    %v1671 = vrot.slane %v1182, 2
    %v1672 = vsel %vm1607, %v1669, %v1671
    %v1673 = vrot.slane %v1150, 2
    %v1674 = vrot.slane %v983, 2
    %v1675 = vsel %vm1607, %v1673, %v1674
    %v1676 = vrot.slane %v1183, 2
    %v1677 = vsel %vm1607, %v1674, %v1676
    %v1678 = vrot.slane %v1151, 2
    %v1679 = vrot.slane %v986, 2
    %v1680 = vsel %vm1607, %v1678, %v1679
    %v1681 = vrot.slane %v1184, 2
    %v1682 = vsel %vm1607, %v1679, %v1681
    %v1683 = vrot.slane %v1152, 2
    %v1684 = vrot.slane %v989, 2
    %v1685 = vsel %vm1607, %v1683, %v1684
    %v1686 = vrot.slane %v1185, 2
    %v1687 = vsel %vm1607, %v1684, %v1686
    %v1688 = vrot.slane %v1154, 2
    %v1689 = vrot.slane %v995, 2
    %v1690 = vsel %vm1607, %v1688, %v1689
    %v1691 = vrot.slane %v1187, 2
    %v1692 = vsel %vm1607, %v1689, %v1691
    %v1693 = vrot.slane %v1155, 2
    %v1694 = vrot.slane %v998, 2
    %v1695 = vsel %vm1607, %v1693, %v1694
    %v1696 = vrot.slane %v1188, 2
    %v1697 = vsel %vm1607, %v1694, %v1696
    %v1698 = vrot.slane %v1156, 2
    %v1699 = vrot.slane %v1001, 2
    %v1700 = vsel %vm1607, %v1698, %v1699
    %v1701 = vrot.slane %v1189, 2
    %v1702 = vsel %vm1607, %v1699, %v1701
    %v1703 = vrot.slane %v1157, 2
    %v1704 = vrot.slane %v1004, 2
    %v1705 = vsel %vm1607, %v1703, %v1704
    %v1706 = vrot.slane %v1190, 2
    %v1707 = vsel %vm1607, %v1704, %v1706
    %v1708 = vrot.slane %v1158, 2
    %v1709 = vrot.slane %v1007, 2
    %v1710 = vsel %vm1607, %v1708, %v1709
    %v1711 = vrot.slane %v1191, 2
    %v1712 = vsel %vm1607, %v1709, %v1711
    %v1713 = vrot.slane %v1159, 2
    %v1714 = vrot.slane %v1010, 2
    %v1715 = vsel %vm1607, %v1713, %v1714
    %v1716 = vrot.slane %v1192, 2
    %v1717 = vsel %vm1607, %v1714, %v1716
    %v1718 = vrot.slane %v1160, 2
    %v1719 = vrot.slane %v1013, 2
    %v1720 = vsel %vm1607, %v1718, %v1719
    %v1721 = vrot.slane %v1193, 2
    %v1722 = vsel %vm1607, %v1719, %v1721
    %v1723 = vrot.slane %v1161, 2
    %v1724 = vrot.slane %v1016, 2
    %v1725 = vsel %vm1607, %v1723, %v1724
    %v1726 = vrot.slane %v1194, 2
    %v1727 = vsel %vm1607, %v1724, %v1726
    %v1728 = vrot.slane %v1162, 2
    %v1729 = vrot.slane %v1019, 2
    %v1730 = vsel %vm1607, %v1728, %v1729
    %v1731 = vrot.slane %v1195, 2
    %v1732 = vsel %vm1607, %v1729, %v1731
    %v1733 = vrot.slane %v1163, 2
    %v1734 = vrot.slane %v1022, 2
    %v1735 = vsel %vm1607, %v1733, %v1734
    %v1736 = vrot.slane %v1196, 2
    %v1737 = vsel %vm1607, %v1734, %v1736
    %v1738 = vrot.slane %v1164, 2
    %v1739 = vrot.slane %v1025, 2
    %v1740 = vsel %vm1607, %v1738, %v1739
    %v1741 = vrot.slane %v1197, 2
    %v1742 = vsel %vm1607, %v1739, %v1741
    %v1743 = vrot.slane %v1165, 2
    %v1744 = vrot.slane %v1028, 2
    %v1745 = vsel %vm1607, %v1743, %v1744
    %v1746 = vrot.slane %v1198, 2
    %v1747 = vsel %vm1607, %v1744, %v1746
    %v1748 = vrot.slane %v1166, 2
    %v1749 = vrot.slane %v1031, 2
    %v1750 = vsel %vm1607, %v1748, %v1749
    %v1751 = vrot.slane %v1199, 2
    %v1752 = vsel %vm1607, %v1749, %v1751
    %v1753 = vrot.slane %v1167, 2
    %v1754 = vrot.slane %v1034, 2
    %v1755 = vsel %vm1607, %v1753, %v1754
    %v1756 = vrot.slane %v1200, 2
    %v1757 = vsel %vm1607, %v1754, %v1756
    %v1758 = vrot.slane %v1168, 2
    %v1759 = vrot.slane %v1037, 2
    %v1760 = vsel %vm1607, %v1758, %v1759
    %v1761 = vrot.slane %v1201, 2
    %v1762 = vsel %vm1607, %v1759, %v1761
    %1763 = vrot.lane.b32.xlu0 %v1610, 16
    %v1764 = vpop.permute.xlu0 %1763
    %1765 = vrot.lane.b32.xlu0 %v1612, 16
    %v1766 = vpop.permute.xlu0 %1765
    %1767 = vrot.lane.b32.xlu0 %v1615, 16
    %v1768 = vpop.permute.xlu0 %1767
    %1769 = vrot.lane.b32.xlu0 %v1617, 16
    %v1770 = vpop.permute.xlu0 %1769
    %1771 = vrot.lane.b32.xlu0 %v1620, 16
    %v1772 = vpop.permute.xlu0 %1771
    %1773 = vrot.lane.b32.xlu0 %v1622, 16
    %v1774 = vpop.permute.xlu0 %1773
    %1775 = vrot.lane.b32.xlu0 %v1625, 16
    %v1776 = vpop.permute.xlu0 %1775
    %1777 = vrot.lane.b32.xlu0 %v1627, 16
    %v1778 = vpop.permute.xlu0 %1777
    %1779 = vrot.lane.b32.xlu0 %v1630, 16
    %v1780 = vpop.permute.xlu0 %1779
    %1781 = vrot.lane.b32.xlu0 %v1632, 16
    %v1782 = vpop.permute.xlu0 %1781
    %1783 = vrot.lane.b32.xlu0 %v1635, 16
    %v1784 = vpop.permute.xlu0 %1783
    %1785 = vrot.lane.b32.xlu0 %v1637, 16
    %v1786 = vpop.permute.xlu0 %1785
    %1787 = vrot.lane.b32.xlu0 %v1640, 16
    %v1788 = vpop.permute.xlu0 %1787
    %1789 = vrot.lane.b32.xlu0 %v1642, 16
    %v1790 = vpop.permute.xlu0 %1789
    %1791 = vrot.lane.b32.xlu0 %v1645, 16
    %v1792 = vpop.permute.xlu0 %1791
    %1793 = vrot.lane.b32.xlu0 %v1647, 16
    %v1794 = vpop.permute.xlu0 %1793
    %1795 = vrot.lane.b32.xlu0 %v1650, 16
    %v1796 = vpop.permute.xlu0 %1795
    %1797 = vrot.lane.b32.xlu0 %v1652, 16
    %v1798 = vpop.permute.xlu0 %1797
    %1799 = vrot.lane.b32.xlu0 %v1655, 16
    %v1800 = vpop.permute.xlu0 %1799
    %1801 = vrot.lane.b32.xlu0 %v1657, 16
    %v1802 = vpop.permute.xlu0 %1801
    %1803 = vrot.lane.b32.xlu0 %v1660, 16
    %v1804 = vpop.permute.xlu0 %1803
    %1805 = vrot.lane.b32.xlu0 %v1662, 16
    %v1806 = vpop.permute.xlu0 %1805
    %1807 = vrot.lane.b32.xlu0 %v1665, 16
    %v1808 = vpop.permute.xlu0 %1807
    %1809 = vrot.lane.b32.xlu0 %v1667, 16
    %v1810 = vpop.permute.xlu0 %1809
    %1811 = vrot.lane.b32.xlu0 %v1670, 16
    %v1812 = vpop.permute.xlu0 %1811
    %1813 = vrot.lane.b32.xlu0 %v1672, 16
    %v1814 = vpop.permute.xlu0 %1813
    %1815 = vrot.lane.b32.xlu0 %v1675, 16
    %v1816 = vpop.permute.xlu0 %1815
    %1817 = vrot.lane.b32.xlu0 %v1677, 16
    %v1818 = vpop.permute.xlu0 %1817
    %1819 = vrot.lane.b32.xlu0 %v1680, 16
    %v1820 = vpop.permute.xlu0 %1819
    %1821 = vrot.lane.b32.xlu0 %v1682, 16
    %v1822 = vpop.permute.xlu0 %1821
    %1823 = vrot.lane.b32.xlu0 %v1685, 16
    %v1824 = vpop.permute.xlu0 %1823
    %1825 = vrot.lane.b32.xlu0 %v1687, 16
    %v1826 = vpop.permute.xlu0 %1825
    %1827 = vrot.lane.b32.xlu0 %v1690, 16
    %v1828 = vpop.permute.xlu0 %1827
    %1829 = vrot.lane.b32.xlu0 %v1692, 16
    %v1830 = vpop.permute.xlu0 %1829
    %1831 = vrot.lane.b32.xlu0 %v1695, 16
    %v1832 = vpop.permute.xlu0 %1831
    %1833 = vrot.lane.b32.xlu0 %v1697, 16
    %v1834 = vpop.permute.xlu0 %1833
    %1835 = vrot.lane.b32.xlu0 %v1700, 16
    %v1836 = vpop.permute.xlu0 %1835
    %1837 = vrot.lane.b32.xlu0 %v1702, 16
    %v1838 = vpop.permute.xlu0 %1837
    %1839 = vrot.lane.b32.xlu0 %v1705, 16
    %v1840 = vpop.permute.xlu0 %1839
    %1841 = vrot.lane.b32.xlu0 %v1707, 16
    %v1842 = vpop.permute.xlu0 %1841
    %1843 = vrot.lane.b32.xlu0 %v1710, 16
    %v1844 = vpop.permute.xlu0 %1843
    %1845 = vrot.lane.b32.xlu0 %v1712, 16
    %v1846 = vpop.permute.xlu0 %1845
    %1847 = vrot.lane.b32.xlu0 %v1715, 16
    %v1848 = vpop.permute.xlu0 %1847
    %1849 = vrot.lane.b32.xlu0 %v1717, 16
    %v1850 = vpop.permute.xlu0 %1849
    %1851 = vrot.lane.b32.xlu0 %v1720, 16
    %v1852 = vpop.permute.xlu0 %1851
    %1853 = vrot.lane.b32.xlu0 %v1722, 16
    %v1854 = vpop.permute.xlu0 %1853
    %1855 = vrot.lane.b32.xlu0 %v1725, 16
    %v1856 = vpop.permute.xlu0 %1855
    %1857 = vrot.lane.b32.xlu0 %v1727, 16
    %v1858 = vpop.permute.xlu0 %1857
    %1859 = vrot.lane.b32.xlu0 %v1730, 16
    %v1860 = vpop.permute.xlu0 %1859
    %1861 = vrot.lane.b32.xlu0 %v1732, 16
    %v1862 = vpop.permute.xlu0 %1861
    %1863 = vrot.lane.b32.xlu0 %v1735, 16
    %v1864 = vpop.permute.xlu0 %1863
    %1865 = vrot.lane.b32.xlu0 %v1737, 16
    %v1866 = vpop.permute.xlu0 %1865
    %1867 = vrot.lane.b32.xlu0 %v1740, 16
    %v1868 = vpop.permute.xlu0 %1867
    %1869 = vrot.lane.b32.xlu0 %v1742, 16
    %v1870 = vpop.permute.xlu0 %1869
    %1871 = vrot.lane.b32.xlu0 %v1745, 16
    %v1872 = vpop.permute.xlu0 %1871
    %1873 = vrot.lane.b32.xlu0 %v1747, 16
    %v1874 = vpop.permute.xlu0 %1873
    %1875 = vrot.lane.b32.xlu0 %v1750, 16
    %v1876 = vpop.permute.xlu0 %1875
    %1877 = vrot.lane.b32.xlu0 %v1752, 16
    %v1878 = vpop.permute.xlu0 %1877
    %1879 = vrot.lane.b32.xlu0 %v1755, 16
    %v1880 = vpop.permute.xlu0 %1879
    %1881 = vrot.lane.b32.xlu0 %v1757, 16
    %v1882 = vpop.permute.xlu0 %1881
    %1883 = vrot.lane.b32.xlu0 %v1760, 16
    %v1884 = vpop.permute.xlu0 %1883
    %1885 = vrot.lane.b32.xlu0 %v1762, 16
    %v1886 = vpop.permute.xlu0 %1885
    %1951 = vrot.lane.b32.xlu0 %v1138, 24
    %v1952 = vpop.permute.xlu0 %1951
    %1953 = vrot.lane.b32.xlu0 %v947, 24
    %v1954 = vpop.permute.xlu0 %1953
    %1955 = vrot.lane.b32.xlu0 %v1139, 24
    %v1956 = vpop.permute.xlu0 %1955
    %1957 = vrot.lane.b32.xlu0 %v950, 24
    %v1958 = vpop.permute.xlu0 %1957
    %1959 = vrot.lane.b32.xlu0 %v1140, 24
    %v1960 = vpop.permute.xlu0 %1959
    %1961 = vrot.lane.b32.xlu0 %v953, 24
    %v1962 = vpop.permute.xlu0 %1961
    %1963 = vrot.lane.b32.xlu0 %v1141, 24
    %v1964 = vpop.permute.xlu0 %1963
    %1965 = vrot.lane.b32.xlu0 %v956, 24
    %v1966 = vpop.permute.xlu0 %1965
    %1967 = vrot.lane.b32.xlu0 %v1142, 24
    %v1968 = vpop.permute.xlu0 %1967
    %1969 = vrot.lane.b32.xlu0 %v959, 24
    %v1970 = vpop.permute.xlu0 %1969
    %1971 = vrot.lane.b32.xlu0 %v1143, 24
    %v1972 = vpop.permute.xlu0 %1971
    %1973 = vrot.lane.b32.xlu0 %v962, 24
    %v1974 = vpop.permute.xlu0 %1973
    %1975 = vrot.lane.b32.xlu0 %v1144, 24
    %v1976 = vpop.permute.xlu0 %1975
    %1977 = vrot.lane.b32.xlu0 %v965, 24
    %v1978 = vpop.permute.xlu0 %1977
    %1979 = vrot.lane.b32.xlu0 %v1145, 24
    %v1980 = vpop.permute.xlu0 %1979
    %1981 = vrot.lane.b32.xlu0 %v968, 24
    %v1982 = vpop.permute.xlu0 %1981
    %1983 = vrot.lane.b32.xlu0 %v1146, 24
    %v1984 = vpop.permute.xlu0 %1983
    %1985 = vrot.lane.b32.xlu0 %v971, 24
    %v1986 = vpop.permute.xlu0 %1985
    %1987 = vrot.lane.b32.xlu0 %v1147, 24
    %v1988 = vpop.permute.xlu0 %1987
    %1989 = vrot.lane.b32.xlu0 %v974, 24
    %v1990 = vpop.permute.xlu0 %1989
    %1991 = vrot.lane.b32.xlu0 %v1148, 24
    %v1992 = vpop.permute.xlu0 %1991
    %1993 = vrot.lane.b32.xlu0 %v977, 24
    %v1994 = vpop.permute.xlu0 %1993
    %1995 = vrot.lane.b32.xlu0 %v1149, 24
    %v1996 = vpop.permute.xlu0 %1995
    %1997 = vrot.lane.b32.xlu0 %v980, 24
    %v1998 = vpop.permute.xlu0 %1997
    %1999 = vrot.lane.b32.xlu0 %v1150, 24
    %v2000 = vpop.permute.xlu0 %1999
    %2001 = vrot.lane.b32.xlu0 %v983, 24
    %v2002 = vpop.permute.xlu0 %2001
    %2003 = vrot.lane.b32.xlu0 %v1151, 24
    %v2004 = vpop.permute.xlu0 %2003
    %2005 = vrot.lane.b32.xlu0 %v986, 24
    %v2006 = vpop.permute.xlu0 %2005
    %2007 = vrot.lane.b32.xlu0 %v1152, 24
    %v2008 = vpop.permute.xlu0 %2007
    %2009 = vrot.lane.b32.xlu0 %v989, 24
    %v2010 = vpop.permute.xlu0 %2009
    %2011 = vrot.lane.b32.xlu0 %v1153, 24
    %v2012 = vpop.permute.xlu0 %2011
    %2013 = vrot.lane.b32.xlu0 %v992, 24
    %v2014 = vpop.permute.xlu0 %2013
    %2015 = vrot.lane.b32.xlu0 %v1154, 24
    %v2016 = vpop.permute.xlu0 %2015
    %2017 = vrot.lane.b32.xlu0 %v995, 24
    %v2018 = vpop.permute.xlu0 %2017
    %2019 = vrot.lane.b32.xlu0 %v1155, 24
    %v2020 = vpop.permute.xlu0 %2019
    %2021 = vrot.lane.b32.xlu0 %v998, 24
    %v2022 = vpop.permute.xlu0 %2021
    %2023 = vrot.lane.b32.xlu0 %v1156, 24
    %v2024 = vpop.permute.xlu0 %2023
    %2025 = vrot.lane.b32.xlu0 %v1001, 24
    %v2026 = vpop.permute.xlu0 %2025
    %2027 = vrot.lane.b32.xlu0 %v1157, 24
    %v2028 = vpop.permute.xlu0 %2027
    %2029 = vrot.lane.b32.xlu0 %v1004, 24
    %v2030 = vpop.permute.xlu0 %2029
    %2031 = vrot.lane.b32.xlu0 %v1158, 24
    %v2032 = vpop.permute.xlu0 %2031
    %2033 = vrot.lane.b32.xlu0 %v1007, 24
    %v2034 = vpop.permute.xlu0 %2033
    %2035 = vrot.lane.b32.xlu0 %v1159, 24
    %v2036 = vpop.permute.xlu0 %2035
    %2037 = vrot.lane.b32.xlu0 %v1010, 24
    %v2038 = vpop.permute.xlu0 %2037
    %2039 = vrot.lane.b32.xlu0 %v1160, 24
    %v2040 = vpop.permute.xlu0 %2039
    %2041 = vrot.lane.b32.xlu0 %v1013, 24
    %v2042 = vpop.permute.xlu0 %2041
    %2043 = vrot.lane.b32.xlu0 %v1161, 24
    %v2044 = vpop.permute.xlu0 %2043
    %2045 = vrot.lane.b32.xlu0 %v1016, 24
    %v2046 = vpop.permute.xlu0 %2045
    %2047 = vrot.lane.b32.xlu0 %v1162, 24
    %v2048 = vpop.permute.xlu0 %2047
    %2049 = vrot.lane.b32.xlu0 %v1019, 24
    %v2050 = vpop.permute.xlu0 %2049
    %2051 = vrot.lane.b32.xlu0 %v1163, 24
    %v2052 = vpop.permute.xlu0 %2051
    %2053 = vrot.lane.b32.xlu0 %v1022, 24
    %v2054 = vpop.permute.xlu0 %2053
    %2055 = vrot.lane.b32.xlu0 %v1164, 24
    %v2056 = vpop.permute.xlu0 %2055
    %2057 = vrot.lane.b32.xlu0 %v1025, 24
    %v2058 = vpop.permute.xlu0 %2057
    %2059 = vrot.lane.b32.xlu0 %v1165, 24
    %v2060 = vpop.permute.xlu0 %2059
    %2061 = vrot.lane.b32.xlu0 %v1028, 24
    %v2062 = vpop.permute.xlu0 %2061
    %2063 = vrot.lane.b32.xlu0 %v1166, 24
    %v2064 = vpop.permute.xlu0 %2063
    %2065 = vrot.lane.b32.xlu0 %v1031, 24
    %v2066 = vpop.permute.xlu0 %2065
    %2067 = vrot.lane.b32.xlu0 %v1167, 24
    %v2068 = vpop.permute.xlu0 %2067
    %2069 = vrot.lane.b32.xlu0 %v1034, 24
    %v2070 = vpop.permute.xlu0 %2069
    %2071 = vrot.lane.b32.xlu0 %v1168, 24
    %v2072 = vpop.permute.xlu0 %2071
    %2073 = vrot.lane.b32.xlu0 %v1037, 24
    %v2074 = vpop.permute.xlu0 %2073
    %2075 = vrot.lane.b32.xlu0 %v1169, 24
    %v2076 = vpop.permute.xlu0 %2075
    %2077 = vrot.lane.b32.xlu0 %v1040, 24
    %v2078 = vpop.permute.xlu0 %2077
    %v2145 = vrot.slane %v1153, 1
    %v2146 = vrot.slane %v992, 1
    %v2147 = vsel %vm1265, %v2145, %v2146
    %v2148 = vrot.slane %v1186, 1
    %v2149 = vsel %vm1265, %v2146, %v2148
    %v2150 = vrot.slane %v1169, 1
    %v2151 = vrot.slane %v1040, 1
    %v2152 = vsel %vm1265, %v2150, %v2151
    %v2153 = vrot.slane %v1202, 1
    %v2154 = vsel %vm1265, %v2151, %v2153
    %2155 = vrot.lane.b32.xlu0 %v1273, 32
    %v2156 = vpop.permute.xlu0 %2155
    %2157 = vrot.lane.b32.xlu0 %v1275, 32
    %v2158 = vpop.permute.xlu0 %2157
    %2159 = vrot.lane.b32.xlu0 %v1278, 32
    %v2160 = vpop.permute.xlu0 %2159
    %2161 = vrot.lane.b32.xlu0 %v1280, 32
    %v2162 = vpop.permute.xlu0 %2161
    %2163 = vrot.lane.b32.xlu0 %v1283, 32
    %v2164 = vpop.permute.xlu0 %2163
    %2165 = vrot.lane.b32.xlu0 %v1285, 32
    %v2166 = vpop.permute.xlu0 %2165
    %2167 = vrot.lane.b32.xlu0 %v1288, 32
    %v2168 = vpop.permute.xlu0 %2167
    %2169 = vrot.lane.b32.xlu0 %v1290, 32
    %v2170 = vpop.permute.xlu0 %2169
    %2171 = vrot.lane.b32.xlu0 %v1293, 32
    %v2172 = vpop.permute.xlu0 %2171
    %2173 = vrot.lane.b32.xlu0 %v1295, 32
    %v2174 = vpop.permute.xlu0 %2173
    %2175 = vrot.lane.b32.xlu0 %v1298, 32
    %v2176 = vpop.permute.xlu0 %2175
    %2177 = vrot.lane.b32.xlu0 %v1300, 32
    %v2178 = vpop.permute.xlu0 %2177
    %2179 = vrot.lane.b32.xlu0 %v1303, 32
    %v2180 = vpop.permute.xlu0 %2179
    %2181 = vrot.lane.b32.xlu0 %v1305, 32
    %v2182 = vpop.permute.xlu0 %2181
    %2183 = vrot.lane.b32.xlu0 %v1308, 32
    %v2184 = vpop.permute.xlu0 %2183
    %2185 = vrot.lane.b32.xlu0 %v1310, 32
    %v2186 = vpop.permute.xlu0 %2185
    %2187 = vrot.lane.b32.xlu0 %v1313, 32
    %v2188 = vpop.permute.xlu0 %2187
    %2189 = vrot.lane.b32.xlu0 %v1315, 32
    %v2190 = vpop.permute.xlu0 %2189
    %2191 = vrot.lane.b32.xlu0 %v1318, 32
    %v2192 = vpop.permute.xlu0 %2191
    %2193 = vrot.lane.b32.xlu0 %v1320, 32
    %v2194 = vpop.permute.xlu0 %2193
    %2195 = vrot.lane.b32.xlu0 %v1323, 32
    %v2196 = vpop.permute.xlu0 %2195
    %2197 = vrot.lane.b32.xlu0 %v1325, 32
    %v2198 = vpop.permute.xlu0 %2197
    %2199 = vrot.lane.b32.xlu0 %v1328, 32
    %v2200 = vpop.permute.xlu0 %2199
    %2201 = vrot.lane.b32.xlu0 %v1330, 32
    %v2202 = vpop.permute.xlu0 %2201
    %2203 = vrot.lane.b32.xlu0 %v1333, 32
    %v2204 = vpop.permute.xlu0 %2203
    %2205 = vrot.lane.b32.xlu0 %v1335, 32
    %v2206 = vpop.permute.xlu0 %2205
    %2207 = vrot.lane.b32.xlu0 %v1338, 32
    %v2208 = vpop.permute.xlu0 %2207
    %2209 = vrot.lane.b32.xlu0 %v1340, 32
    %v2210 = vpop.permute.xlu0 %2209
    %2211 = vrot.lane.b32.xlu0 %v1343, 32
    %v2212 = vpop.permute.xlu0 %2211
    %2213 = vrot.lane.b32.xlu0 %v1345, 32
    %v2214 = vpop.permute.xlu0 %2213
    %2215 = vrot.lane.b32.xlu0 %v2147, 32
    %v2216 = vpop.permute.xlu0 %2215
    %2217 = vrot.lane.b32.xlu0 %v2149, 32
    %v2218 = vpop.permute.xlu0 %2217
    %2219 = vrot.lane.b32.xlu0 %v1348, 32
    %v2220 = vpop.permute.xlu0 %2219
    %2221 = vrot.lane.b32.xlu0 %v1350, 32
    %v2222 = vpop.permute.xlu0 %2221
    %2223 = vrot.lane.b32.xlu0 %v1353, 32
    %v2224 = vpop.permute.xlu0 %2223
    %2225 = vrot.lane.b32.xlu0 %v1355, 32
    %v2226 = vpop.permute.xlu0 %2225
    %2227 = vrot.lane.b32.xlu0 %v1358, 32
    %v2228 = vpop.permute.xlu0 %2227
    %2229 = vrot.lane.b32.xlu0 %v1360, 32
    %v2230 = vpop.permute.xlu0 %2229
    %2231 = vrot.lane.b32.xlu0 %v1363, 32
    %v2232 = vpop.permute.xlu0 %2231
    %2233 = vrot.lane.b32.xlu0 %v1365, 32
    %v2234 = vpop.permute.xlu0 %2233
    %2235 = vrot.lane.b32.xlu0 %v1368, 32
    %v2236 = vpop.permute.xlu0 %2235
    %2237 = vrot.lane.b32.xlu0 %v1370, 32
    %v2238 = vpop.permute.xlu0 %2237
    %2239 = vrot.lane.b32.xlu0 %v1373, 32
    %v2240 = vpop.permute.xlu0 %2239
    %2241 = vrot.lane.b32.xlu0 %v1375, 32
    %v2242 = vpop.permute.xlu0 %2241
    %2243 = vrot.lane.b32.xlu0 %v1378, 32
    %v2244 = vpop.permute.xlu0 %2243
    %2245 = vrot.lane.b32.xlu0 %v1380, 32
    %v2246 = vpop.permute.xlu0 %2245
    %2247 = vrot.lane.b32.xlu0 %v1383, 32
    %v2248 = vpop.permute.xlu0 %2247
    %2249 = vrot.lane.b32.xlu0 %v1385, 32
    %v2250 = vpop.permute.xlu0 %2249
    %2251 = vrot.lane.b32.xlu0 %v1388, 32
    %v2252 = vpop.permute.xlu0 %2251
    %2253 = vrot.lane.b32.xlu0 %v1390, 32
    %v2254 = vpop.permute.xlu0 %2253
    %2255 = vrot.lane.b32.xlu0 %v1393, 32
    %v2256 = vpop.permute.xlu0 %2255
    %2257 = vrot.lane.b32.xlu0 %v1395, 32
    %v2258 = vpop.permute.xlu0 %2257
    %2259 = vrot.lane.b32.xlu0 %v1398, 32
    %v2260 = vpop.permute.xlu0 %2259
    %2261 = vrot.lane.b32.xlu0 %v1400, 32
    %v2262 = vpop.permute.xlu0 %2261
    %2263 = vrot.lane.b32.xlu0 %v1403, 32
    %v2264 = vpop.permute.xlu0 %2263
    %2265 = vrot.lane.b32.xlu0 %v1405, 32
    %v2266 = vpop.permute.xlu0 %2265
    %2267 = vrot.lane.b32.xlu0 %v1408, 32
    %v2268 = vpop.permute.xlu0 %2267
    %2269 = vrot.lane.b32.xlu0 %v1410, 32
    %v2270 = vpop.permute.xlu0 %2269
    %2271 = vrot.lane.b32.xlu0 %v1413, 32
    %v2272 = vpop.permute.xlu0 %2271
    %2273 = vrot.lane.b32.xlu0 %v1415, 32
    %v2274 = vpop.permute.xlu0 %2273
    %2275 = vrot.lane.b32.xlu0 %v1418, 32
    %v2276 = vpop.permute.xlu0 %2275
    %2277 = vrot.lane.b32.xlu0 %v1420, 32
    %v2278 = vpop.permute.xlu0 %2277
    %2279 = vrot.lane.b32.xlu0 %v2152, 32
    %v2280 = vpop.permute.xlu0 %2279
    %2281 = vrot.lane.b32.xlu0 %v2154, 32
    %v2282 = vpop.permute.xlu0 %2281
    %v2347 = vrot.slane %v1153, 2
    %v2348 = vrot.slane %v992, 2
    %v2349 = vsel %vm1607, %v2347, %v2348
    %v2350 = vrot.slane %v1186, 2
    %v2351 = vsel %vm1607, %v2348, %v2350
    %v2352 = vrot.slane %v1169, 2
    %v2353 = vrot.slane %v1040, 2
    %v2354 = vsel %vm1607, %v2352, %v2353
    %v2355 = vrot.slane %v1202, 2
    %v2356 = vsel %vm1607, %v2353, %v2355
    %2357 = vrot.lane.b32.xlu0 %v1615, 40
    %v2358 = vpop.permute.xlu0 %2357
    %2359 = vrot.lane.b32.xlu0 %v1617, 40
    %v2360 = vpop.permute.xlu0 %2359
    %2361 = vrot.lane.b32.xlu0 %v1620, 40
    %v2362 = vpop.permute.xlu0 %2361
    %2363 = vrot.lane.b32.xlu0 %v1622, 40
    %v2364 = vpop.permute.xlu0 %2363
    %2365 = vrot.lane.b32.xlu0 %v1625, 40
    %v2366 = vpop.permute.xlu0 %2365
    %2367 = vrot.lane.b32.xlu0 %v1627, 40
    %v2368 = vpop.permute.xlu0 %2367
    %2369 = vrot.lane.b32.xlu0 %v1630, 40
    %v2370 = vpop.permute.xlu0 %2369
    %2371 = vrot.lane.b32.xlu0 %v1632, 40
    %v2372 = vpop.permute.xlu0 %2371
    %2373 = vrot.lane.b32.xlu0 %v1635, 40
    %v2374 = vpop.permute.xlu0 %2373
    %2375 = vrot.lane.b32.xlu0 %v1637, 40
    %v2376 = vpop.permute.xlu0 %2375
    %2377 = vrot.lane.b32.xlu0 %v1640, 40
    %v2378 = vpop.permute.xlu0 %2377
    %2379 = vrot.lane.b32.xlu0 %v1642, 40
    %v2380 = vpop.permute.xlu0 %2379
    %2381 = vrot.lane.b32.xlu0 %v1645, 40
    %v2382 = vpop.permute.xlu0 %2381
    %2383 = vrot.lane.b32.xlu0 %v1647, 40
    %v2384 = vpop.permute.xlu0 %2383
    %2385 = vrot.lane.b32.xlu0 %v1650, 40
    %v2386 = vpop.permute.xlu0 %2385
    %2387 = vrot.lane.b32.xlu0 %v1652, 40
    %v2388 = vpop.permute.xlu0 %2387
    %2389 = vrot.lane.b32.xlu0 %v1655, 40
    %v2390 = vpop.permute.xlu0 %2389
    %2391 = vrot.lane.b32.xlu0 %v1657, 40
    %v2392 = vpop.permute.xlu0 %2391
    %2393 = vrot.lane.b32.xlu0 %v1660, 40
    %v2394 = vpop.permute.xlu0 %2393
    %2395 = vrot.lane.b32.xlu0 %v1662, 40
    %v2396 = vpop.permute.xlu0 %2395
    %2397 = vrot.lane.b32.xlu0 %v1665, 40
    %v2398 = vpop.permute.xlu0 %2397
    %2399 = vrot.lane.b32.xlu0 %v1667, 40
    %v2400 = vpop.permute.xlu0 %2399
    %2401 = vrot.lane.b32.xlu0 %v1670, 40
    %v2402 = vpop.permute.xlu0 %2401
    %2403 = vrot.lane.b32.xlu0 %v1672, 40
    %v2404 = vpop.permute.xlu0 %2403
    %2405 = vrot.lane.b32.xlu0 %v1675, 40
    %v2406 = vpop.permute.xlu0 %2405
    %2407 = vrot.lane.b32.xlu0 %v1677, 40
    %v2408 = vpop.permute.xlu0 %2407
    %2409 = vrot.lane.b32.xlu0 %v1680, 40
    %v2410 = vpop.permute.xlu0 %2409
    %2411 = vrot.lane.b32.xlu0 %v1682, 40
    %v2412 = vpop.permute.xlu0 %2411
    %2413 = vrot.lane.b32.xlu0 %v1685, 40
    %v2414 = vpop.permute.xlu0 %2413
    %2415 = vrot.lane.b32.xlu0 %v1687, 40
    %v2416 = vpop.permute.xlu0 %2415
    %2417 = vrot.lane.b32.xlu0 %v2349, 40
    %v2418 = vpop.permute.xlu0 %2417
    %2419 = vrot.lane.b32.xlu0 %v2351, 40
    %v2420 = vpop.permute.xlu0 %2419
    %2421 = vrot.lane.b32.xlu0 %v1690, 40
    %v2422 = vpop.permute.xlu0 %2421
    %2423 = vrot.lane.b32.xlu0 %v1692, 40
    %v2424 = vpop.permute.xlu0 %2423
    %2425 = vrot.lane.b32.xlu0 %v1695, 40
    %v2426 = vpop.permute.xlu0 %2425
    %2427 = vrot.lane.b32.xlu0 %v1697, 40
    %v2428 = vpop.permute.xlu0 %2427
    %2429 = vrot.lane.b32.xlu0 %v1700, 40
    %v2430 = vpop.permute.xlu0 %2429
    %2431 = vrot.lane.b32.xlu0 %v1702, 40
    %v2432 = vpop.permute.xlu0 %2431
    %2433 = vrot.lane.b32.xlu0 %v1705, 40
    %v2434 = vpop.permute.xlu0 %2433
    %2435 = vrot.lane.b32.xlu0 %v1707, 40
    %v2436 = vpop.permute.xlu0 %2435
    %2437 = vrot.lane.b32.xlu0 %v1710, 40
    %v2438 = vpop.permute.xlu0 %2437
    %2439 = vrot.lane.b32.xlu0 %v1712, 40
    %v2440 = vpop.permute.xlu0 %2439
    %2441 = vrot.lane.b32.xlu0 %v1715, 40
    %v2442 = vpop.permute.xlu0 %2441
    %2443 = vrot.lane.b32.xlu0 %v1717, 40
    %v2444 = vpop.permute.xlu0 %2443
    %2445 = vrot.lane.b32.xlu0 %v1720, 40
    %v2446 = vpop.permute.xlu0 %2445
    %2447 = vrot.lane.b32.xlu0 %v1722, 40
    %v2448 = vpop.permute.xlu0 %2447
    %2449 = vrot.lane.b32.xlu0 %v1725, 40
    %v2450 = vpop.permute.xlu0 %2449
    %2451 = vrot.lane.b32.xlu0 %v1727, 40
    %v2452 = vpop.permute.xlu0 %2451
    %2453 = vrot.lane.b32.xlu0 %v1730, 40
    %v2454 = vpop.permute.xlu0 %2453
    %2455 = vrot.lane.b32.xlu0 %v1732, 40
    %v2456 = vpop.permute.xlu0 %2455
    %2457 = vrot.lane.b32.xlu0 %v1735, 40
    %v2458 = vpop.permute.xlu0 %2457
    %2459 = vrot.lane.b32.xlu0 %v1737, 40
    %v2460 = vpop.permute.xlu0 %2459
    %2461 = vrot.lane.b32.xlu0 %v1740, 40
    %v2462 = vpop.permute.xlu0 %2461
    %2463 = vrot.lane.b32.xlu0 %v1742, 40
    %v2464 = vpop.permute.xlu0 %2463
    %2465 = vrot.lane.b32.xlu0 %v1745, 40
    %v2466 = vpop.permute.xlu0 %2465
    %2467 = vrot.lane.b32.xlu0 %v1747, 40
    %v2468 = vpop.permute.xlu0 %2467
    %2469 = vrot.lane.b32.xlu0 %v1750, 40
    %v2470 = vpop.permute.xlu0 %2469
    %2471 = vrot.lane.b32.xlu0 %v1752, 40
    %v2472 = vpop.permute.xlu0 %2471
    %2473 = vrot.lane.b32.xlu0 %v1755, 40
    %v2474 = vpop.permute.xlu0 %2473
    %2475 = vrot.lane.b32.xlu0 %v1757, 40
    %v2476 = vpop.permute.xlu0 %2475
    %2477 = vrot.lane.b32.xlu0 %v1760, 40
    %v2478 = vpop.permute.xlu0 %2477
    %2479 = vrot.lane.b32.xlu0 %v1762, 40
    %v2480 = vpop.permute.xlu0 %2479
    %2481 = vrot.lane.b32.xlu0 %v2354, 40
    %v2482 = vpop.permute.xlu0 %2481
    %2483 = vrot.lane.b32.xlu0 %v2356, 40
    %v2484 = vpop.permute.xlu0 %2483
    %2549 = vrot.lane.b32.xlu0 %v1139, 48
    %v2550 = vpop.permute.xlu0 %2549
    %2551 = vrot.lane.b32.xlu0 %v950, 48
    %v2552 = vpop.permute.xlu0 %2551
    %2553 = vrot.lane.b32.xlu0 %v1140, 48
    %v2554 = vpop.permute.xlu0 %2553
    %2555 = vrot.lane.b32.xlu0 %v953, 48
    %v2556 = vpop.permute.xlu0 %2555
    %2557 = vrot.lane.b32.xlu0 %v1141, 48
    %v2558 = vpop.permute.xlu0 %2557
    %2559 = vrot.lane.b32.xlu0 %v956, 48
    %v2560 = vpop.permute.xlu0 %2559
    %2561 = vrot.lane.b32.xlu0 %v1142, 48
    %v2562 = vpop.permute.xlu0 %2561
    %2563 = vrot.lane.b32.xlu0 %v959, 48
    %v2564 = vpop.permute.xlu0 %2563
    %2565 = vrot.lane.b32.xlu0 %v1143, 48
    %v2566 = vpop.permute.xlu0 %2565
    %2567 = vrot.lane.b32.xlu0 %v962, 48
    %v2568 = vpop.permute.xlu0 %2567
    %2569 = vrot.lane.b32.xlu0 %v1144, 48
    %v2570 = vpop.permute.xlu0 %2569
    %2571 = vrot.lane.b32.xlu0 %v965, 48
    %v2572 = vpop.permute.xlu0 %2571
    %2573 = vrot.lane.b32.xlu0 %v1145, 48
    %v2574 = vpop.permute.xlu0 %2573
    %2575 = vrot.lane.b32.xlu0 %v968, 48
    %v2576 = vpop.permute.xlu0 %2575
    %2577 = vrot.lane.b32.xlu0 %v1146, 48
    %v2578 = vpop.permute.xlu0 %2577
    %2579 = vrot.lane.b32.xlu0 %v971, 48
    %v2580 = vpop.permute.xlu0 %2579
    %2581 = vrot.lane.b32.xlu0 %v1147, 48
    %v2582 = vpop.permute.xlu0 %2581
    %2583 = vrot.lane.b32.xlu0 %v974, 48
    %v2584 = vpop.permute.xlu0 %2583
    %2585 = vrot.lane.b32.xlu0 %v1148, 48
    %v2586 = vpop.permute.xlu0 %2585
    %2587 = vrot.lane.b32.xlu0 %v977, 48
    %v2588 = vpop.permute.xlu0 %2587
    %2589 = vrot.lane.b32.xlu0 %v1149, 48
    %v2590 = vpop.permute.xlu0 %2589
    %2591 = vrot.lane.b32.xlu0 %v980, 48
    %v2592 = vpop.permute.xlu0 %2591
    %2593 = vrot.lane.b32.xlu0 %v1150, 48
    %v2594 = vpop.permute.xlu0 %2593
    %2595 = vrot.lane.b32.xlu0 %v983, 48
    %v2596 = vpop.permute.xlu0 %2595
    %2597 = vrot.lane.b32.xlu0 %v1151, 48
    %v2598 = vpop.permute.xlu0 %2597
    %2599 = vrot.lane.b32.xlu0 %v986, 48
    %v2600 = vpop.permute.xlu0 %2599
    %2601 = vrot.lane.b32.xlu0 %v1152, 48
    %v2602 = vpop.permute.xlu0 %2601
    %2603 = vrot.lane.b32.xlu0 %v989, 48
    %v2604 = vpop.permute.xlu0 %2603
    %2605 = vrot.lane.b32.xlu0 %v1153, 48
    %v2606 = vpop.permute.xlu0 %2605
    %2607 = vrot.lane.b32.xlu0 %v992, 48
    %v2608 = vpop.permute.xlu0 %2607
    %2609 = vrot.lane.b32.xlu0 %v1137, 48
    %v2610 = vpop.permute.xlu0 %2609
    %2611 = vrot.lane.b32.xlu0 %v944, 48
    %v2612 = vpop.permute.xlu0 %2611
    %2613 = vrot.lane.b32.xlu0 %v1155, 48
    %v2614 = vpop.permute.xlu0 %2613
    %2615 = vrot.lane.b32.xlu0 %v998, 48
    %v2616 = vpop.permute.xlu0 %2615
    %2617 = vrot.lane.b32.xlu0 %v1156, 48
    %v2618 = vpop.permute.xlu0 %2617
    %2619 = vrot.lane.b32.xlu0 %v1001, 48
    %v2620 = vpop.permute.xlu0 %2619
    %2621 = vrot.lane.b32.xlu0 %v1157, 48
    %v2622 = vpop.permute.xlu0 %2621
    %2623 = vrot.lane.b32.xlu0 %v1004, 48
    %v2624 = vpop.permute.xlu0 %2623
    %2625 = vrot.lane.b32.xlu0 %v1158, 48
    %v2626 = vpop.permute.xlu0 %2625
    %2627 = vrot.lane.b32.xlu0 %v1007, 48
    %v2628 = vpop.permute.xlu0 %2627
    %2629 = vrot.lane.b32.xlu0 %v1159, 48
    %v2630 = vpop.permute.xlu0 %2629
    %2631 = vrot.lane.b32.xlu0 %v1010, 48
    %v2632 = vpop.permute.xlu0 %2631
    %2633 = vrot.lane.b32.xlu0 %v1160, 48
    %v2634 = vpop.permute.xlu0 %2633
    %2635 = vrot.lane.b32.xlu0 %v1013, 48
    %v2636 = vpop.permute.xlu0 %2635
    %2637 = vrot.lane.b32.xlu0 %v1161, 48
    %v2638 = vpop.permute.xlu0 %2637
    %2639 = vrot.lane.b32.xlu0 %v1016, 48
    %v2640 = vpop.permute.xlu0 %2639
    %2641 = vrot.lane.b32.xlu0 %v1162, 48
    %v2642 = vpop.permute.xlu0 %2641
    %2643 = vrot.lane.b32.xlu0 %v1019, 48
    %v2644 = vpop.permute.xlu0 %2643
    %2645 = vrot.lane.b32.xlu0 %v1163, 48
    %v2646 = vpop.permute.xlu0 %2645
    %2647 = vrot.lane.b32.xlu0 %v1022, 48
    %v2648 = vpop.permute.xlu0 %2647
    %2649 = vrot.lane.b32.xlu0 %v1164, 48
    %v2650 = vpop.permute.xlu0 %2649
    %2651 = vrot.lane.b32.xlu0 %v1025, 48
    %v2652 = vpop.permute.xlu0 %2651
    %2653 = vrot.lane.b32.xlu0 %v1165, 48
    %v2654 = vpop.permute.xlu0 %2653
    %2655 = vrot.lane.b32.xlu0 %v1028, 48
    %v2656 = vpop.permute.xlu0 %2655
    %2657 = vrot.lane.b32.xlu0 %v1166, 48
    %v2658 = vpop.permute.xlu0 %2657
    %2659 = vrot.lane.b32.xlu0 %v1031, 48
    %v2660 = vpop.permute.xlu0 %2659
    %2661 = vrot.lane.b32.xlu0 %v1167, 48
    %v2662 = vpop.permute.xlu0 %2661
    %2663 = vrot.lane.b32.xlu0 %v1034, 48
    %v2664 = vpop.permute.xlu0 %2663
    %2665 = vrot.lane.b32.xlu0 %v1168, 48
    %v2666 = vpop.permute.xlu0 %2665
    %2667 = vrot.lane.b32.xlu0 %v1037, 48
    %v2668 = vpop.permute.xlu0 %2667
    %2669 = vrot.lane.b32.xlu0 %v1169, 48
    %v2670 = vpop.permute.xlu0 %2669
    %2671 = vrot.lane.b32.xlu0 %v1040, 48
    %v2672 = vpop.permute.xlu0 %2671
    %2735 = vrot.lane.b32.xlu0 %v1278, 56
    %v2736 = vpop.permute.xlu0 %2735
    %2737 = vrot.lane.b32.xlu0 %v1280, 56
    %v2738 = vpop.permute.xlu0 %2737
    %2739 = vrot.lane.b32.xlu0 %v1283, 56
    %v2740 = vpop.permute.xlu0 %2739
    %2741 = vrot.lane.b32.xlu0 %v1285, 56
    %v2742 = vpop.permute.xlu0 %2741
    %2743 = vrot.lane.b32.xlu0 %v1288, 56
    %v2744 = vpop.permute.xlu0 %2743
    %2745 = vrot.lane.b32.xlu0 %v1290, 56
    %v2746 = vpop.permute.xlu0 %2745
    %2747 = vrot.lane.b32.xlu0 %v1293, 56
    %v2748 = vpop.permute.xlu0 %2747
    %2749 = vrot.lane.b32.xlu0 %v1295, 56
    %v2750 = vpop.permute.xlu0 %2749
    %2751 = vrot.lane.b32.xlu0 %v1298, 56
    %v2752 = vpop.permute.xlu0 %2751
    %2753 = vrot.lane.b32.xlu0 %v1300, 56
    %v2754 = vpop.permute.xlu0 %2753
    %2755 = vrot.lane.b32.xlu0 %v1303, 56
    %v2756 = vpop.permute.xlu0 %2755
    %2757 = vrot.lane.b32.xlu0 %v1305, 56
    %v2758 = vpop.permute.xlu0 %2757
    %2759 = vrot.lane.b32.xlu0 %v1308, 56
    %v2760 = vpop.permute.xlu0 %2759
    %2761 = vrot.lane.b32.xlu0 %v1310, 56
    %v2762 = vpop.permute.xlu0 %2761
    %2763 = vrot.lane.b32.xlu0 %v1313, 56
    %v2764 = vpop.permute.xlu0 %2763
    %2765 = vrot.lane.b32.xlu0 %v1315, 56
    %v2766 = vpop.permute.xlu0 %2765
    %2767 = vrot.lane.b32.xlu0 %v1318, 56
    %v2768 = vpop.permute.xlu0 %2767
    %2769 = vrot.lane.b32.xlu0 %v1320, 56
    %v2770 = vpop.permute.xlu0 %2769
    %2771 = vrot.lane.b32.xlu0 %v1323, 56
    %v2772 = vpop.permute.xlu0 %2771
    %2773 = vrot.lane.b32.xlu0 %v1325, 56
    %v2774 = vpop.permute.xlu0 %2773
    %2775 = vrot.lane.b32.xlu0 %v1328, 56
    %v2776 = vpop.permute.xlu0 %2775
    %2777 = vrot.lane.b32.xlu0 %v1330, 56
    %v2778 = vpop.permute.xlu0 %2777
    %2779 = vrot.lane.b32.xlu0 %v1333, 56
    %v2780 = vpop.permute.xlu0 %2779
    %2781 = vrot.lane.b32.xlu0 %v1335, 56
    %v2782 = vpop.permute.xlu0 %2781
    %2783 = vrot.lane.b32.xlu0 %v1338, 56
    %v2784 = vpop.permute.xlu0 %2783
    %2785 = vrot.lane.b32.xlu0 %v1340, 56
    %v2786 = vpop.permute.xlu0 %2785
    %2787 = vrot.lane.b32.xlu0 %v1343, 56
    %v2788 = vpop.permute.xlu0 %2787
    %2789 = vrot.lane.b32.xlu0 %v1345, 56
    %v2790 = vpop.permute.xlu0 %2789
    %2791 = vrot.lane.b32.xlu0 %v2147, 56
    %v2792 = vpop.permute.xlu0 %2791
    %2793 = vrot.lane.b32.xlu0 %v2149, 56
    %v2794 = vpop.permute.xlu0 %2793
    %2795 = vrot.lane.b32.xlu0 %v1268, 56
    %v2796 = vpop.permute.xlu0 %2795
    %2797 = vrot.lane.b32.xlu0 %v1270, 56
    %v2798 = vpop.permute.xlu0 %2797
    %2799 = vrot.lane.b32.xlu0 %v1353, 56
    %v2800 = vpop.permute.xlu0 %2799
    %2801 = vrot.lane.b32.xlu0 %v1355, 56
    %v2802 = vpop.permute.xlu0 %2801
    %2803 = vrot.lane.b32.xlu0 %v1358, 56
    %v2804 = vpop.permute.xlu0 %2803
    %2805 = vrot.lane.b32.xlu0 %v1360, 56
    %v2806 = vpop.permute.xlu0 %2805
    %2807 = vrot.lane.b32.xlu0 %v1363, 56
    %v2808 = vpop.permute.xlu0 %2807
    %2809 = vrot.lane.b32.xlu0 %v1365, 56
    %v2810 = vpop.permute.xlu0 %2809
    %2811 = vrot.lane.b32.xlu0 %v1368, 56
    %v2812 = vpop.permute.xlu0 %2811
    %2813 = vrot.lane.b32.xlu0 %v1370, 56
    %v2814 = vpop.permute.xlu0 %2813
    %2815 = vrot.lane.b32.xlu0 %v1373, 56
    %v2816 = vpop.permute.xlu0 %2815
    %2817 = vrot.lane.b32.xlu0 %v1375, 56
    %v2818 = vpop.permute.xlu0 %2817
    %2819 = vrot.lane.b32.xlu0 %v1378, 56
    %v2820 = vpop.permute.xlu0 %2819
    %2821 = vrot.lane.b32.xlu0 %v1380, 56
    %v2822 = vpop.permute.xlu0 %2821
    %2823 = vrot.lane.b32.xlu0 %v1383, 56
    %v2824 = vpop.permute.xlu0 %2823
    %2825 = vrot.lane.b32.xlu0 %v1385, 56
    %v2826 = vpop.permute.xlu0 %2825
    %2827 = vrot.lane.b32.xlu0 %v1388, 56
    %v2828 = vpop.permute.xlu0 %2827
    %2829 = vrot.lane.b32.xlu0 %v1390, 56
    %v2830 = vpop.permute.xlu0 %2829
    %2831 = vrot.lane.b32.xlu0 %v1393, 56
    %v2832 = vpop.permute.xlu0 %2831
    %2833 = vrot.lane.b32.xlu0 %v1395, 56
    %v2834 = vpop.permute.xlu0 %2833
    %2835 = vrot.lane.b32.xlu0 %v1398, 56
    %v2836 = vpop.permute.xlu0 %2835
    %2837 = vrot.lane.b32.xlu0 %v1400, 56
    %v2838 = vpop.permute.xlu0 %2837
    %2839 = vrot.lane.b32.xlu0 %v1403, 56
    %v2840 = vpop.permute.xlu0 %2839
    %2841 = vrot.lane.b32.xlu0 %v1405, 56
    %v2842 = vpop.permute.xlu0 %2841
    %2843 = vrot.lane.b32.xlu0 %v1408, 56
    %v2844 = vpop.permute.xlu0 %2843
    %2845 = vrot.lane.b32.xlu0 %v1410, 56
    %v2846 = vpop.permute.xlu0 %2845
    %2847 = vrot.lane.b32.xlu0 %v1413, 56
    %v2848 = vpop.permute.xlu0 %2847
    %2849 = vrot.lane.b32.xlu0 %v1415, 56
    %v2850 = vpop.permute.xlu0 %2849
    %2851 = vrot.lane.b32.xlu0 %v1418, 56
    %v2852 = vpop.permute.xlu0 %2851
    %2853 = vrot.lane.b32.xlu0 %v1420, 56
    %v2854 = vpop.permute.xlu0 %2853
    %2855 = vrot.lane.b32.xlu0 %v2152, 56
    %v2856 = vpop.permute.xlu0 %2855
    %2857 = vrot.lane.b32.xlu0 %v2154, 56
    %v2858 = vpop.permute.xlu0 %2857
    %2921 = vrot.lane.b32.xlu0 %v1620, 64
    %v2922 = vpop.permute.xlu0 %2921
    %2923 = vrot.lane.b32.xlu0 %v1622, 64
    %v2924 = vpop.permute.xlu0 %2923
    %2925 = vrot.lane.b32.xlu0 %v1625, 64
    %v2926 = vpop.permute.xlu0 %2925
    %2927 = vrot.lane.b32.xlu0 %v1627, 64
    %v2928 = vpop.permute.xlu0 %2927
    %2929 = vrot.lane.b32.xlu0 %v1630, 64
    %v2930 = vpop.permute.xlu0 %2929
    %2931 = vrot.lane.b32.xlu0 %v1632, 64
    %v2932 = vpop.permute.xlu0 %2931
    %2933 = vrot.lane.b32.xlu0 %v1635, 64
    %v2934 = vpop.permute.xlu0 %2933
    %2935 = vrot.lane.b32.xlu0 %v1637, 64
    %v2936 = vpop.permute.xlu0 %2935
    %2937 = vrot.lane.b32.xlu0 %v1640, 64
    %v2938 = vpop.permute.xlu0 %2937
    %2939 = vrot.lane.b32.xlu0 %v1642, 64
    %v2940 = vpop.permute.xlu0 %2939
    %2941 = vrot.lane.b32.xlu0 %v1645, 64
    %v2942 = vpop.permute.xlu0 %2941
    %2943 = vrot.lane.b32.xlu0 %v1647, 64
    %v2944 = vpop.permute.xlu0 %2943
    %2945 = vrot.lane.b32.xlu0 %v1650, 64
    %v2946 = vpop.permute.xlu0 %2945
    %2947 = vrot.lane.b32.xlu0 %v1652, 64
    %v2948 = vpop.permute.xlu0 %2947
    %2949 = vrot.lane.b32.xlu0 %v1655, 64
    %v2950 = vpop.permute.xlu0 %2949
    %2951 = vrot.lane.b32.xlu0 %v1657, 64
    %v2952 = vpop.permute.xlu0 %2951
    %2953 = vrot.lane.b32.xlu0 %v1660, 64
    %v2954 = vpop.permute.xlu0 %2953
    %2955 = vrot.lane.b32.xlu0 %v1662, 64
    %v2956 = vpop.permute.xlu0 %2955
    %2957 = vrot.lane.b32.xlu0 %v1665, 64
    %v2958 = vpop.permute.xlu0 %2957
    %2959 = vrot.lane.b32.xlu0 %v1667, 64
    %v2960 = vpop.permute.xlu0 %2959
    %2961 = vrot.lane.b32.xlu0 %v1670, 64
    %v2962 = vpop.permute.xlu0 %2961
    %2963 = vrot.lane.b32.xlu0 %v1672, 64
    %v2964 = vpop.permute.xlu0 %2963
    %2965 = vrot.lane.b32.xlu0 %v1675, 64
    %v2966 = vpop.permute.xlu0 %2965
    %2967 = vrot.lane.b32.xlu0 %v1677, 64
    %v2968 = vpop.permute.xlu0 %2967
    %2969 = vrot.lane.b32.xlu0 %v1680, 64
    %v2970 = vpop.permute.xlu0 %2969
    %2971 = vrot.lane.b32.xlu0 %v1682, 64
    %v2972 = vpop.permute.xlu0 %2971
    %2973 = vrot.lane.b32.xlu0 %v1685, 64
    %v2974 = vpop.permute.xlu0 %2973
    %2975 = vrot.lane.b32.xlu0 %v1687, 64
    %v2976 = vpop.permute.xlu0 %2975
    %2977 = vrot.lane.b32.xlu0 %v2349, 64
    %v2978 = vpop.permute.xlu0 %2977
    %2979 = vrot.lane.b32.xlu0 %v2351, 64
    %v2980 = vpop.permute.xlu0 %2979
    %2981 = vrot.lane.b32.xlu0 %v1610, 64
    %v2982 = vpop.permute.xlu0 %2981
    %2983 = vrot.lane.b32.xlu0 %v1612, 64
    %v2984 = vpop.permute.xlu0 %2983
    %2985 = vrot.lane.b32.xlu0 %v1695, 64
    %v2986 = vpop.permute.xlu0 %2985
    %2987 = vrot.lane.b32.xlu0 %v1697, 64
    %v2988 = vpop.permute.xlu0 %2987
    %2989 = vrot.lane.b32.xlu0 %v1700, 64
    %v2990 = vpop.permute.xlu0 %2989
    %2991 = vrot.lane.b32.xlu0 %v1702, 64
    %v2992 = vpop.permute.xlu0 %2991
    %2993 = vrot.lane.b32.xlu0 %v1705, 64
    %v2994 = vpop.permute.xlu0 %2993
    %2995 = vrot.lane.b32.xlu0 %v1707, 64
    %v2996 = vpop.permute.xlu0 %2995
    %2997 = vrot.lane.b32.xlu0 %v1710, 64
    %v2998 = vpop.permute.xlu0 %2997
    %2999 = vrot.lane.b32.xlu0 %v1712, 64
    %v3000 = vpop.permute.xlu0 %2999
    %3001 = vrot.lane.b32.xlu0 %v1715, 64
    %v3002 = vpop.permute.xlu0 %3001
    %3003 = vrot.lane.b32.xlu0 %v1717, 64
    %v3004 = vpop.permute.xlu0 %3003
    %3005 = vrot.lane.b32.xlu0 %v1720, 64
    %v3006 = vpop.permute.xlu0 %3005
    %3007 = vrot.lane.b32.xlu0 %v1722, 64
    %v3008 = vpop.permute.xlu0 %3007
    %3009 = vrot.lane.b32.xlu0 %v1725, 64
    %v3010 = vpop.permute.xlu0 %3009
    %3011 = vrot.lane.b32.xlu0 %v1727, 64
    %v3012 = vpop.permute.xlu0 %3011
    %3013 = vrot.lane.b32.xlu0 %v1730, 64
    %v3014 = vpop.permute.xlu0 %3013
    %3015 = vrot.lane.b32.xlu0 %v1732, 64
    %v3016 = vpop.permute.xlu0 %3015
    %3017 = vrot.lane.b32.xlu0 %v1735, 64
    %v3018 = vpop.permute.xlu0 %3017
    %3019 = vrot.lane.b32.xlu0 %v1737, 64
    %v3020 = vpop.permute.xlu0 %3019
    %3021 = vrot.lane.b32.xlu0 %v1740, 64
    %v3022 = vpop.permute.xlu0 %3021
    %3023 = vrot.lane.b32.xlu0 %v1742, 64
    %v3024 = vpop.permute.xlu0 %3023
    %3025 = vrot.lane.b32.xlu0 %v1745, 64
    %v3026 = vpop.permute.xlu0 %3025
    %3027 = vrot.lane.b32.xlu0 %v1747, 64
    %v3028 = vpop.permute.xlu0 %3027
    %3029 = vrot.lane.b32.xlu0 %v1750, 64
    %v3030 = vpop.permute.xlu0 %3029
    %3031 = vrot.lane.b32.xlu0 %v1752, 64
    %v3032 = vpop.permute.xlu0 %3031
    %3033 = vrot.lane.b32.xlu0 %v1755, 64
    %v3034 = vpop.permute.xlu0 %3033
    %3035 = vrot.lane.b32.xlu0 %v1757, 64
    %v3036 = vpop.permute.xlu0 %3035
    %3037 = vrot.lane.b32.xlu0 %v1760, 64
    %v3038 = vpop.permute.xlu0 %3037
    %3039 = vrot.lane.b32.xlu0 %v1762, 64
    %v3040 = vpop.permute.xlu0 %3039
    %3041 = vrot.lane.b32.xlu0 %v2354, 64
    %v3042 = vpop.permute.xlu0 %3041
    %3043 = vrot.lane.b32.xlu0 %v2356, 64
    %v3044 = vpop.permute.xlu0 %3043
    %vm3107 = vcmask 64512
    %v3108 = vsel %vm3107, %v1137, %v1422
    %v3109 = vsel %vm3107, %v944, %v1424
    %v3110 = vsel %vm3107, %v1138, %v1426
    %v3111 = vsel %vm3107, %v947, %v1428
    %v3112 = vsel %vm3107, %v1139, %v1430
    %v3113 = vsel %vm3107, %v950, %v1432
    %v3114 = vsel %vm3107, %v1140, %v1434
    %v3115 = vsel %vm3107, %v953, %v1436
    %v3116 = vsel %vm3107, %v1141, %v1438
    %v3117 = vsel %vm3107, %v956, %v1440
    %v3118 = vsel %vm3107, %v1142, %v1442
    %v3119 = vsel %vm3107, %v959, %v1444
    %v3120 = vsel %vm3107, %v1143, %v1446
    %v3121 = vsel %vm3107, %v962, %v1448
    %v3122 = vsel %vm3107, %v1144, %v1450
    %v3123 = vsel %vm3107, %v965, %v1452
    %v3124 = vsel %vm3107, %v1145, %v1454
    %v3125 = vsel %vm3107, %v968, %v1456
    %v3126 = vsel %vm3107, %v1146, %v1458
    %v3127 = vsel %vm3107, %v971, %v1460
    %v3128 = vsel %vm3107, %v1147, %v1462
    %v3129 = vsel %vm3107, %v974, %v1464
    %v3130 = vsel %vm3107, %v1148, %v1466
    %v3131 = vsel %vm3107, %v977, %v1468
    %v3132 = vsel %vm3107, %v1149, %v1470
    %v3133 = vsel %vm3107, %v980, %v1472
    %v3134 = vsel %vm3107, %v1150, %v1474
    %v3135 = vsel %vm3107, %v983, %v1476
    %v3136 = vsel %vm3107, %v1151, %v1478
    %v3137 = vsel %vm3107, %v986, %v1480
    %v3138 = vsel %vm3107, %v1152, %v1482
    %v3139 = vsel %vm3107, %v989, %v1484
    %v3140 = vsel %vm3107, %v1154, %v1486
    %v3141 = vsel %vm3107, %v995, %v1488
    %v3142 = vsel %vm3107, %v1155, %v1490
    %v3143 = vsel %vm3107, %v998, %v1492
    %v3144 = vsel %vm3107, %v1156, %v1494
    %v3145 = vsel %vm3107, %v1001, %v1496
    %v3146 = vsel %vm3107, %v1157, %v1498
    %v3147 = vsel %vm3107, %v1004, %v1500
    %v3148 = vsel %vm3107, %v1158, %v1502
    %v3149 = vsel %vm3107, %v1007, %v1504
    %v3150 = vsel %vm3107, %v1159, %v1506
    %v3151 = vsel %vm3107, %v1010, %v1508
    %v3152 = vsel %vm3107, %v1160, %v1510
    %v3153 = vsel %vm3107, %v1013, %v1512
    %v3154 = vsel %vm3107, %v1161, %v1514
    %v3155 = vsel %vm3107, %v1016, %v1516
    %v3156 = vsel %vm3107, %v1162, %v1518
    %v3157 = vsel %vm3107, %v1019, %v1520
    %v3158 = vsel %vm3107, %v1163, %v1522
    %v3159 = vsel %vm3107, %v1022, %v1524
    %v3160 = vsel %vm3107, %v1164, %v1526
    %v3161 = vsel %vm3107, %v1025, %v1528
    %v3162 = vsel %vm3107, %v1165, %v1530
    %v3163 = vsel %vm3107, %v1028, %v1532
    %v3164 = vsel %vm3107, %v1166, %v1534
    %v3165 = vsel %vm3107, %v1031, %v1536
    %v3166 = vsel %vm3107, %v1167, %v1538
    %v3167 = vsel %vm3107, %v1034, %v1540
    %v3168 = vsel %vm3107, %v1168, %v1542
    %v3169 = vsel %vm3107, %v1037, %v1544
    %vm3170 = vcmask 130048
    %v3171 = vsel %vm3170, %v3108, %v1764
    %v3172 = vsel %vm3170, %v3109, %v1766
    %v3173 = vsel %vm3170, %v3110, %v1768
    %v3174 = vsel %vm3170, %v3111, %v1770
    %v3175 = vsel %vm3170, %v3112, %v1772
    %v3176 = vsel %vm3170, %v3113, %v1774
    %v3177 = vsel %vm3170, %v3114, %v1776
    %v3178 = vsel %vm3170, %v3115, %v1778
    %v3179 = vsel %vm3170, %v3116, %v1780
    %v3180 = vsel %vm3170, %v3117, %v1782
    %v3181 = vsel %vm3170, %v3118, %v1784
    %v3182 = vsel %vm3170, %v3119, %v1786
    %v3183 = vsel %vm3170, %v3120, %v1788
    %v3184 = vsel %vm3170, %v3121, %v1790
    %v3185 = vsel %vm3170, %v3122, %v1792
    %v3186 = vsel %vm3170, %v3123, %v1794
    %v3187 = vsel %vm3170, %v3124, %v1796
    %v3188 = vsel %vm3170, %v3125, %v1798
    %v3189 = vsel %vm3170, %v3126, %v1800
    %v3190 = vsel %vm3170, %v3127, %v1802
    %v3191 = vsel %vm3170, %v3128, %v1804
    %v3192 = vsel %vm3170, %v3129, %v1806
    %v3193 = vsel %vm3170, %v3130, %v1808
    %v3194 = vsel %vm3170, %v3131, %v1810
    %v3195 = vsel %vm3170, %v3132, %v1812
    %v3196 = vsel %vm3170, %v3133, %v1814
    %v3197 = vsel %vm3170, %v3134, %v1816
    %v3198 = vsel %vm3170, %v3135, %v1818
    %v3199 = vsel %vm3170, %v3136, %v1820
    %v3200 = vsel %vm3170, %v3137, %v1822
    %v3201 = vsel %vm3170, %v3138, %v1824
    %v3202 = vsel %vm3170, %v3139, %v1826
    %v3203 = vsel %vm3170, %v3140, %v1828
    %v3204 = vsel %vm3170, %v3141, %v1830
    %v3205 = vsel %vm3170, %v3142, %v1832
    %v3206 = vsel %vm3170, %v3143, %v1834
    %v3207 = vsel %vm3170, %v3144, %v1836
    %v3208 = vsel %vm3170, %v3145, %v1838
    %v3209 = vsel %vm3170, %v3146, %v1840
    %v3210 = vsel %vm3170, %v3147, %v1842
    %v3211 = vsel %vm3170, %v3148, %v1844
    %v3212 = vsel %vm3170, %v3149, %v1846
    %v3213 = vsel %vm3170, %v3150, %v1848
    %v3214 = vsel %vm3170, %v3151, %v1850
    %v3215 = vsel %vm3170, %v3152, %v1852
    %v3216 = vsel %vm3170, %v3153, %v1854
    %v3217 = vsel %vm3170, %v3154, %v1856
    %v3218 = vsel %vm3170, %v3155, %v1858
    %v3219 = vsel %vm3170, %v3156, %v1860
    %v3220 = vsel %vm3170, %v3157, %v1862
    %v3221 = vsel %vm3170, %v3158, %v1864
    %v3222 = vsel %vm3170, %v3159, %v1866
    %v3223 = vsel %vm3170, %v3160, %v1868
    %v3224 = vsel %vm3170, %v3161, %v1870
    %v3225 = vsel %vm3170, %v3162, %v1872
    %v3226 = vsel %vm3170, %v3163, %v1874
    %v3227 = vsel %vm3170, %v3164, %v1876
    %v3228 = vsel %vm3170, %v3165, %v1878
    %v3229 = vsel %vm3170, %v3166, %v1880
    %v3230 = vsel %vm3170, %v3167, %v1882
    %v3231 = vsel %vm3170, %v3168, %v1884
    %v3232 = vsel %vm3170, %v3169, %v1886
    %vm3233 = vcmask 195584
    %v3234 = vsel %vm3233, %v3171, %v1952
    %v3235 = vsel %vm3233, %v3172, %v1954
    %v3236 = vsel %vm3233, %v3173, %v1956
    %v3237 = vsel %vm3233, %v3174, %v1958
    %v3238 = vsel %vm3233, %v3175, %v1960
    %v3239 = vsel %vm3233, %v3176, %v1962
    %v3240 = vsel %vm3233, %v3177, %v1964
    %v3241 = vsel %vm3233, %v3178, %v1966
    %v3242 = vsel %vm3233, %v3179, %v1968
    %v3243 = vsel %vm3233, %v3180, %v1970
    %v3244 = vsel %vm3233, %v3181, %v1972
    %v3245 = vsel %vm3233, %v3182, %v1974
    %v3246 = vsel %vm3233, %v3183, %v1976
    %v3247 = vsel %vm3233, %v3184, %v1978
    %v3248 = vsel %vm3233, %v3185, %v1980
    %v3249 = vsel %vm3233, %v3186, %v1982
    %v3250 = vsel %vm3233, %v3187, %v1984
    %v3251 = vsel %vm3233, %v3188, %v1986
    %v3252 = vsel %vm3233, %v3189, %v1988
    %v3253 = vsel %vm3233, %v3190, %v1990
    %v3254 = vsel %vm3233, %v3191, %v1992
    %v3255 = vsel %vm3233, %v3192, %v1994
    %v3256 = vsel %vm3233, %v3193, %v1996
    %v3257 = vsel %vm3233, %v3194, %v1998
    %v3258 = vsel %vm3233, %v3195, %v2000
    %v3259 = vsel %vm3233, %v3196, %v2002
    %v3260 = vsel %vm3233, %v3197, %v2004
    %v3261 = vsel %vm3233, %v3198, %v2006
    %v3262 = vsel %vm3233, %v3199, %v2008
    %v3263 = vsel %vm3233, %v3200, %v2010
    %v3264 = vsel %vm3233, %v3201, %v2012
    %v3265 = vsel %vm3233, %v3202, %v2014
    %v3266 = vsel %vm3233, %v3171, %v2016
    %v3267 = vsel %vm3233, %v3172, %v2018
    %v3268 = vsel %vm3233, %v3203, %v2020
    %v3269 = vsel %vm3233, %v3204, %v2022
    %v3270 = vsel %vm3233, %v3205, %v2024
    %v3271 = vsel %vm3233, %v3206, %v2026
    %v3272 = vsel %vm3233, %v3207, %v2028
    %v3273 = vsel %vm3233, %v3208, %v2030
    %v3274 = vsel %vm3233, %v3209, %v2032
    %v3275 = vsel %vm3233, %v3210, %v2034
    %v3276 = vsel %vm3233, %v3211, %v2036
    %v3277 = vsel %vm3233, %v3212, %v2038
    %v3278 = vsel %vm3233, %v3213, %v2040
    %v3279 = vsel %vm3233, %v3214, %v2042
    %v3280 = vsel %vm3233, %v3215, %v2044
    %v3281 = vsel %vm3233, %v3216, %v2046
    %v3282 = vsel %vm3233, %v3217, %v2048
    %v3283 = vsel %vm3233, %v3218, %v2050
    %v3284 = vsel %vm3233, %v3219, %v2052
    %v3285 = vsel %vm3233, %v3220, %v2054
    %v3286 = vsel %vm3233, %v3221, %v2056
    %v3287 = vsel %vm3233, %v3222, %v2058
    %v3288 = vsel %vm3233, %v3223, %v2060
    %v3289 = vsel %vm3233, %v3224, %v2062
    %v3290 = vsel %vm3233, %v3225, %v2064
    %v3291 = vsel %vm3233, %v3226, %v2066
    %v3292 = vsel %vm3233, %v3227, %v2068
    %v3293 = vsel %vm3233, %v3228, %v2070
    %v3294 = vsel %vm3233, %v3229, %v2072
    %v3295 = vsel %vm3233, %v3230, %v2074
    %v3296 = vsel %vm3233, %v3231, %v2076
    %v3297 = vsel %vm3233, %v3232, %v2078
    %vm3298 = vcmask 261120
    %v3299 = vsel %vm3298, %v3234, %v2156
    %v3300 = vsel %vm3298, %v3235, %v2158
    %v3301 = vsel %vm3298, %v3236, %v2160
    %v3302 = vsel %vm3298, %v3237, %v2162
    %v3303 = vsel %vm3298, %v3238, %v2164
    %v3304 = vsel %vm3298, %v3239, %v2166
    %v3305 = vsel %vm3298, %v3240, %v2168
    %v3306 = vsel %vm3298, %v3241, %v2170
    %v3307 = vsel %vm3298, %v3242, %v2172
    %v3308 = vsel %vm3298, %v3243, %v2174
    %v3309 = vsel %vm3298, %v3244, %v2176
    %v3310 = vsel %vm3298, %v3245, %v2178
    %v3311 = vsel %vm3298, %v3246, %v2180
    %v3312 = vsel %vm3298, %v3247, %v2182
    %v3313 = vsel %vm3298, %v3248, %v2184
    %v3314 = vsel %vm3298, %v3249, %v2186
    %v3315 = vsel %vm3298, %v3250, %v2188
    %v3316 = vsel %vm3298, %v3251, %v2190
    %v3317 = vsel %vm3298, %v3252, %v2192
    %v3318 = vsel %vm3298, %v3253, %v2194
    %v3319 = vsel %vm3298, %v3254, %v2196
    %v3320 = vsel %vm3298, %v3255, %v2198
    %v3321 = vsel %vm3298, %v3256, %v2200
    %v3322 = vsel %vm3298, %v3257, %v2202
    %v3323 = vsel %vm3298, %v3258, %v2204
    %v3324 = vsel %vm3298, %v3259, %v2206
    %v3325 = vsel %vm3298, %v3260, %v2208
    %v3326 = vsel %vm3298, %v3261, %v2210
    %v3327 = vsel %vm3298, %v3262, %v2212
    %v3328 = vsel %vm3298, %v3263, %v2214
    %v3329 = vsel %vm3298, %v3264, %v2216
    %v3330 = vsel %vm3298, %v3265, %v2218
    %v3331 = vsel %vm3298, %v3266, %v2220
    %v3332 = vsel %vm3298, %v3267, %v2222
    %v3333 = vsel %vm3298, %v3268, %v2224
    %v3334 = vsel %vm3298, %v3269, %v2226
    %v3335 = vsel %vm3298, %v3270, %v2228
    %v3336 = vsel %vm3298, %v3271, %v2230
    %v3337 = vsel %vm3298, %v3272, %v2232
    %v3338 = vsel %vm3298, %v3273, %v2234
    %v3339 = vsel %vm3298, %v3274, %v2236
    %v3340 = vsel %vm3298, %v3275, %v2238
    %v3341 = vsel %vm3298, %v3276, %v2240
    %v3342 = vsel %vm3298, %v3277, %v2242
    %v3343 = vsel %vm3298, %v3278, %v2244
    %v3344 = vsel %vm3298, %v3279, %v2246
    %v3345 = vsel %vm3298, %v3280, %v2248
    %v3346 = vsel %vm3298, %v3281, %v2250
    %v3347 = vsel %vm3298, %v3282, %v2252
    %v3348 = vsel %vm3298, %v3283, %v2254
    %v3349 = vsel %vm3298, %v3284, %v2256
    %v3350 = vsel %vm3298, %v3285, %v2258
    %v3351 = vsel %vm3298, %v3286, %v2260
    %v3352 = vsel %vm3298, %v3287, %v2262
    %v3353 = vsel %vm3298, %v3288, %v2264
    %v3354 = vsel %vm3298, %v3289, %v2266
    %v3355 = vsel %vm3298, %v3290, %v2268
    %v3356 = vsel %vm3298, %v3291, %v2270
    %v3357 = vsel %vm3298, %v3292, %v2272
    %v3358 = vsel %vm3298, %v3293, %v2274
    %v3359 = vsel %vm3298, %v3294, %v2276
    %v3360 = vsel %vm3298, %v3295, %v2278
    %v3361 = vsel %vm3298, %v3296, %v2280
    %v3362 = vsel %vm3298, %v3297, %v2282
    %vm3363 = vcmask 326656
    %v3364 = vsel %vm3363, %v3299, %v2358
    %v3365 = vsel %vm3363, %v3300, %v2360
    %v3366 = vsel %vm3363, %v3301, %v2362
    %v3367 = vsel %vm3363, %v3302, %v2364
    %v3368 = vsel %vm3363, %v3303, %v2366
    %v3369 = vsel %vm3363, %v3304, %v2368
    %v3370 = vsel %vm3363, %v3305, %v2370
    %v3371 = vsel %vm3363, %v3306, %v2372
    %v3372 = vsel %vm3363, %v3307, %v2374
    %v3373 = vsel %vm3363, %v3308, %v2376
    %v3374 = vsel %vm3363, %v3309, %v2378
    %v3375 = vsel %vm3363, %v3310, %v2380
    %v3376 = vsel %vm3363, %v3311, %v2382
    %v3377 = vsel %vm3363, %v3312, %v2384
    %v3378 = vsel %vm3363, %v3313, %v2386
    %v3379 = vsel %vm3363, %v3314, %v2388
    %v3380 = vsel %vm3363, %v3315, %v2390
    %v3381 = vsel %vm3363, %v3316, %v2392
    %v3382 = vsel %vm3363, %v3317, %v2394
    %v3383 = vsel %vm3363, %v3318, %v2396
    %v3384 = vsel %vm3363, %v3319, %v2398
    %v3385 = vsel %vm3363, %v3320, %v2400
    %v3386 = vsel %vm3363, %v3321, %v2402
    %v3387 = vsel %vm3363, %v3322, %v2404
    %v3388 = vsel %vm3363, %v3323, %v2406
    %v3389 = vsel %vm3363, %v3324, %v2408
    %v3390 = vsel %vm3363, %v3325, %v2410
    %v3391 = vsel %vm3363, %v3326, %v2412
    %v3392 = vsel %vm3363, %v3327, %v2414
    %v3393 = vsel %vm3363, %v3328, %v2416
    %v3394 = vsel %vm3363, %v3329, %v2418
    %v3395 = vsel %vm3363, %v3330, %v2420
    %v3396 = vsel %vm3363, %v3331, %v2422
    %v3397 = vsel %vm3363, %v3332, %v2424
    %v3398 = vsel %vm3363, %v3333, %v2426
    %v3399 = vsel %vm3363, %v3334, %v2428
    %v3400 = vsel %vm3363, %v3335, %v2430
    %v3401 = vsel %vm3363, %v3336, %v2432
    %v3402 = vsel %vm3363, %v3337, %v2434
    %v3403 = vsel %vm3363, %v3338, %v2436
    %v3404 = vsel %vm3363, %v3339, %v2438
    %v3405 = vsel %vm3363, %v3340, %v2440
    %v3406 = vsel %vm3363, %v3341, %v2442
    %v3407 = vsel %vm3363, %v3342, %v2444
    %v3408 = vsel %vm3363, %v3343, %v2446
    %v3409 = vsel %vm3363, %v3344, %v2448
    %v3410 = vsel %vm3363, %v3345, %v2450
    %v3411 = vsel %vm3363, %v3346, %v2452
    %v3412 = vsel %vm3363, %v3347, %v2454
    %v3413 = vsel %vm3363, %v3348, %v2456
    %v3414 = vsel %vm3363, %v3349, %v2458
    %v3415 = vsel %vm3363, %v3350, %v2460
    %v3416 = vsel %vm3363, %v3351, %v2462
    %v3417 = vsel %vm3363, %v3352, %v2464
    %v3418 = vsel %vm3363, %v3353, %v2466
    %v3419 = vsel %vm3363, %v3354, %v2468
    %v3420 = vsel %vm3363, %v3355, %v2470
    %v3421 = vsel %vm3363, %v3356, %v2472
    %v3422 = vsel %vm3363, %v3357, %v2474
    %v3423 = vsel %vm3363, %v3358, %v2476
    %v3424 = vsel %vm3363, %v3359, %v2478
    %v3425 = vsel %vm3363, %v3360, %v2480
    %v3426 = vsel %vm3363, %v3361, %v2482
    %v3427 = vsel %vm3363, %v3362, %v2484
    %vm3428 = vcmask 392192
    %v3429 = vsel %vm3428, %v3364, %v2550
    %v3430 = vsel %vm3428, %v3365, %v2552
    %v3431 = vsel %vm3428, %v3366, %v2554
    %v3432 = vsel %vm3428, %v3367, %v2556
    %v3433 = vsel %vm3428, %v3368, %v2558
    %v3434 = vsel %vm3428, %v3369, %v2560
    %v3435 = vsel %vm3428, %v3370, %v2562
    %v3436 = vsel %vm3428, %v3371, %v2564
    %v3437 = vsel %vm3428, %v3372, %v2566
    %v3438 = vsel %vm3428, %v3373, %v2568
    %v3439 = vsel %vm3428, %v3374, %v2570
    %v3440 = vsel %vm3428, %v3375, %v2572
    %v3441 = vsel %vm3428, %v3376, %v2574
    %v3442 = vsel %vm3428, %v3377, %v2576
    %v3443 = vsel %vm3428, %v3378, %v2578
    %v3444 = vsel %vm3428, %v3379, %v2580
    %v3445 = vsel %vm3428, %v3380, %v2582
    %v3446 = vsel %vm3428, %v3381, %v2584
    %v3447 = vsel %vm3428, %v3382, %v2586
    %v3448 = vsel %vm3428, %v3383, %v2588
    %v3449 = vsel %vm3428, %v3384, %v2590
    %v3450 = vsel %vm3428, %v3385, %v2592
    %v3451 = vsel %vm3428, %v3386, %v2594
    %v3452 = vsel %vm3428, %v3387, %v2596
    %v3453 = vsel %vm3428, %v3388, %v2598
    %v3454 = vsel %vm3428, %v3389, %v2600
    %v3455 = vsel %vm3428, %v3390, %v2602
    %v3456 = vsel %vm3428, %v3391, %v2604
    %v3457 = vsel %vm3428, %v3392, %v2606
    %v3458 = vsel %vm3428, %v3393, %v2608
    %v3459 = vsel %vm3428, %v3394, %v2610
    %v3460 = vsel %vm3428, %v3395, %v2612
    %v3461 = vsel %vm3428, %v3396, %v2614
    %v3462 = vsel %vm3428, %v3397, %v2616
    %v3463 = vsel %vm3428, %v3398, %v2618
    %v3464 = vsel %vm3428, %v3399, %v2620
    %v3465 = vsel %vm3428, %v3400, %v2622
    %v3466 = vsel %vm3428, %v3401, %v2624
    %v3467 = vsel %vm3428, %v3402, %v2626
    %v3468 = vsel %vm3428, %v3403, %v2628
    %v3469 = vsel %vm3428, %v3404, %v2630
    %v3470 = vsel %vm3428, %v3405, %v2632
    %v3471 = vsel %vm3428, %v3406, %v2634
    %v3472 = vsel %vm3428, %v3407, %v2636
    %v3473 = vsel %vm3428, %v3408, %v2638
    %v3474 = vsel %vm3428, %v3409, %v2640
    %v3475 = vsel %vm3428, %v3410, %v2642
    %v3476 = vsel %vm3428, %v3411, %v2644
    %v3477 = vsel %vm3428, %v3412, %v2646
    %v3478 = vsel %vm3428, %v3413, %v2648
    %v3479 = vsel %vm3428, %v3414, %v2650
    %v3480 = vsel %vm3428, %v3415, %v2652
    %v3481 = vsel %vm3428, %v3416, %v2654
    %v3482 = vsel %vm3428, %v3417, %v2656
    %v3483 = vsel %vm3428, %v3418, %v2658
    %v3484 = vsel %vm3428, %v3419, %v2660
    %v3485 = vsel %vm3428, %v3420, %v2662
    %v3486 = vsel %vm3428, %v3421, %v2664
    %v3487 = vsel %vm3428, %v3422, %v2666
    %v3488 = vsel %vm3428, %v3423, %v2668
    %v3489 = vsel %vm3428, %v3424, %v2670
    %v3490 = vsel %vm3428, %v3425, %v2672
    %v3491 = vsel %vm3428, %v3426, %v2610
    %v3492 = vsel %vm3428, %v3427, %v2612
    %vm3493 = vcmask 457728
    %v3494 = vsel %vm3493, %v3429, %v2736
    %v3495 = vsel %vm3493, %v3430, %v2738
    %v3496 = vsel %vm3493, %v3431, %v2740
    %v3497 = vsel %vm3493, %v3432, %v2742
    %v3498 = vsel %vm3493, %v3433, %v2744
    %v3499 = vsel %vm3493, %v3434, %v2746
    %v3500 = vsel %vm3493, %v3435, %v2748
    %v3501 = vsel %vm3493, %v3436, %v2750
    %v3502 = vsel %vm3493, %v3437, %v2752
    %v3503 = vsel %vm3493, %v3438, %v2754
    %v3504 = vsel %vm3493, %v3439, %v2756
    %v3505 = vsel %vm3493, %v3440, %v2758
    %v3506 = vsel %vm3493, %v3441, %v2760
    %v3507 = vsel %vm3493, %v3442, %v2762
    %v3508 = vsel %vm3493, %v3443, %v2764
    %v3509 = vsel %vm3493, %v3444, %v2766
    %v3510 = vsel %vm3493, %v3445, %v2768
    %v3511 = vsel %vm3493, %v3446, %v2770
    %v3512 = vsel %vm3493, %v3447, %v2772
    %v3513 = vsel %vm3493, %v3448, %v2774
    %v3514 = vsel %vm3493, %v3449, %v2776
    %v3515 = vsel %vm3493, %v3450, %v2778
    %v3516 = vsel %vm3493, %v3451, %v2780
    %v3517 = vsel %vm3493, %v3452, %v2782
    %v3518 = vsel %vm3493, %v3453, %v2784
    %v3519 = vsel %vm3493, %v3454, %v2786
    %v3520 = vsel %vm3493, %v3455, %v2788
    %v3521 = vsel %vm3493, %v3456, %v2790
    %v3522 = vsel %vm3493, %v3457, %v2792
    %v3523 = vsel %vm3493, %v3458, %v2794
    %v3524 = vsel %vm3493, %v3459, %v2796
    %v3525 = vsel %vm3493, %v3460, %v2798
    %v3526 = vsel %vm3493, %v3461, %v2800
    %v3527 = vsel %vm3493, %v3462, %v2802
    %v3528 = vsel %vm3493, %v3463, %v2804
    %v3529 = vsel %vm3493, %v3464, %v2806
    %v3530 = vsel %vm3493, %v3465, %v2808
    %v3531 = vsel %vm3493, %v3466, %v2810
    %v3532 = vsel %vm3493, %v3467, %v2812
    %v3533 = vsel %vm3493, %v3468, %v2814
    %v3534 = vsel %vm3493, %v3469, %v2816
    %v3535 = vsel %vm3493, %v3470, %v2818
    %v3536 = vsel %vm3493, %v3471, %v2820
    %v3537 = vsel %vm3493, %v3472, %v2822
    %v3538 = vsel %vm3493, %v3473, %v2824
    %v3539 = vsel %vm3493, %v3474, %v2826
    %v3540 = vsel %vm3493, %v3475, %v2828
    %v3541 = vsel %vm3493, %v3476, %v2830
    %v3542 = vsel %vm3493, %v3477, %v2832
    %v3543 = vsel %vm3493, %v3478, %v2834
    %v3544 = vsel %vm3493, %v3479, %v2836
    %v3545 = vsel %vm3493, %v3480, %v2838
    %v3546 = vsel %vm3493, %v3481, %v2840
    %v3547 = vsel %vm3493, %v3482, %v2842
    %v3548 = vsel %vm3493, %v3483, %v2844
    %v3549 = vsel %vm3493, %v3484, %v2846
    %v3550 = vsel %vm3493, %v3485, %v2848
    %v3551 = vsel %vm3493, %v3486, %v2850
    %v3552 = vsel %vm3493, %v3487, %v2852
    %v3553 = vsel %vm3493, %v3488, %v2854
    %v3554 = vsel %vm3493, %v3489, %v2856
    %v3555 = vsel %vm3493, %v3490, %v2858
    %v3556 = vsel %vm3493, %v3491, %v2796
    %v3557 = vsel %vm3493, %v3492, %v2798
    %vm3558 = vcmask 523264
    %v3559 = vsel %vm3558, %v3494, %v2922
    %v3560 = vsel %vm3558, %v3495, %v2924
    %v3561 = vsel %vm3558, %v3496, %v2926
    %v3562 = vsel %vm3558, %v3497, %v2928
    %v3563 = vsel %vm3558, %v3498, %v2930
    %v3564 = vsel %vm3558, %v3499, %v2932
    %v3565 = vsel %vm3558, %v3500, %v2934
    %v3566 = vsel %vm3558, %v3501, %v2936
    %v3567 = vsel %vm3558, %v3502, %v2938
    %v3568 = vsel %vm3558, %v3503, %v2940
    %v3569 = vsel %vm3558, %v3504, %v2942
    %v3570 = vsel %vm3558, %v3505, %v2944
    %v3571 = vsel %vm3558, %v3506, %v2946
    %v3572 = vsel %vm3558, %v3507, %v2948
    %v3573 = vsel %vm3558, %v3508, %v2950
    %v3574 = vsel %vm3558, %v3509, %v2952
    %v3575 = vsel %vm3558, %v3510, %v2954
    %v3576 = vsel %vm3558, %v3511, %v2956
    %v3577 = vsel %vm3558, %v3512, %v2958
    %v3578 = vsel %vm3558, %v3513, %v2960
    %v3579 = vsel %vm3558, %v3514, %v2962
    %v3580 = vsel %vm3558, %v3515, %v2964
    %v3581 = vsel %vm3558, %v3516, %v2966
    %v3582 = vsel %vm3558, %v3517, %v2968
    %v3583 = vsel %vm3558, %v3518, %v2970
    %v3584 = vsel %vm3558, %v3519, %v2972
    %v3585 = vsel %vm3558, %v3520, %v2974
    %v3586 = vsel %vm3558, %v3521, %v2976
    %v3587 = vsel %vm3558, %v3522, %v2978
    %v3588 = vsel %vm3558, %v3523, %v2980
    %v3589 = vsel %vm3558, %v3524, %v2982
    %v3590 = vsel %vm3558, %v3525, %v2984
    %v3591 = vsel %vm3558, %v3526, %v2986
    %v3592 = vsel %vm3558, %v3527, %v2988
    %v3593 = vsel %vm3558, %v3528, %v2990
    %v3594 = vsel %vm3558, %v3529, %v2992
    %v3595 = vsel %vm3558, %v3530, %v2994
    %v3596 = vsel %vm3558, %v3531, %v2996
    %v3597 = vsel %vm3558, %v3532, %v2998
    %v3598 = vsel %vm3558, %v3533, %v3000
    %v3599 = vsel %vm3558, %v3534, %v3002
    %v3600 = vsel %vm3558, %v3535, %v3004
    %v3601 = vsel %vm3558, %v3536, %v3006
    %v3602 = vsel %vm3558, %v3537, %v3008
    %v3603 = vsel %vm3558, %v3538, %v3010
    %v3604 = vsel %vm3558, %v3539, %v3012
    %v3605 = vsel %vm3558, %v3540, %v3014
    %v3606 = vsel %vm3558, %v3541, %v3016
    %v3607 = vsel %vm3558, %v3542, %v3018
    %v3608 = vsel %vm3558, %v3543, %v3020
    %v3609 = vsel %vm3558, %v3544, %v3022
    %v3610 = vsel %vm3558, %v3545, %v3024
    %v3611 = vsel %vm3558, %v3546, %v3026
    %v3612 = vsel %vm3558, %v3547, %v3028
    %v3613 = vsel %vm3558, %v3548, %v3030
    %v3614 = vsel %vm3558, %v3549, %v3032
    %v3615 = vsel %vm3558, %v3550, %v3034
    %v3616 = vsel %vm3558, %v3551, %v3036
    %v3617 = vsel %vm3558, %v3552, %v3038
    %v3618 = vsel %vm3558, %v3553, %v3040
    %v3619 = vsel %vm3558, %v3554, %v3042
    %v3620 = vsel %vm3558, %v3555, %v3044
    %v3621 = vsel %vm3558, %v3556, %v2982
    %v3622 = vsel %vm3558, %v3557, %v2984
    %v3623 = vld [vmem:[%s3] sm:$0xff]
    %v3624 = vld [vmem:[%s3 + $0x8] sm:$0xff]
    %v3625 = vld [vmem:[%s3 + $0x10] sm:$0xff]
    %v3626 = vld [vmem:[%s3 + $0x18] sm:$0xff]
    %v3627 = vld [vmem:[%s3 + $0x20] sm:$0xff]
    %v3628 = vld [vmem:[%s3 + $0x28] sm:$0xff]
    %v3629 = vld [vmem:[%s3 + $0x30] sm:$0xff]
    %v3630 = vld [vmem:[%s3 + $0x38] sm:$0xff]
    %v3631 = vld [vmem:[%s3 + $0x40] sm:$0xff]
    %v3632 = vld [vmem:[%s4] sm:$0x1]
    %v3634 = vlaneseq
    %v3635 = vshrl.u32 %v3634, 7
    %v3636 = vsub.s32 0, %v3635
    %v3637 = vrot.slane %v3632, %v3636
    %vm3639 = vcmask 588800
    %v3641 = vsel %vm3639, %v3559, 0
    %v3644 = vsel %vm3639, %v3560, 0
    %v3647 = vsel %vm3639, %v3561, 0
    %v3650 = vsel %vm3639, %v3562, 0
    %v3653 = vsel %vm3639, %v3563, 0
    %v3656 = vsel %vm3639, %v3564, 0
    %v3659 = vsel %vm3639, %v3565, 0
    %v3662 = vsel %vm3639, %v3566, 0
    %v3665 = vsel %vm3639, %v3567, 0
    %v3668 = vsel %vm3639, %v3568, 0
    %v3671 = vsel %vm3639, %v3569, 0
    %v3674 = vsel %vm3639, %v3570, 0
    %v3677 = vsel %vm3639, %v3571, 0
    %v3680 = vsel %vm3639, %v3572, 0
    %v3683 = vsel %vm3639, %v3573, 0
    %v3686 = vsel %vm3639, %v3574, 0
    %v3689 = vsel %vm3639, %v3575, 0
    %v3692 = vsel %vm3639, %v3576, 0
    %v3695 = vsel %vm3639, %v3577, 0
    %v3698 = vsel %vm3639, %v3578, 0
    %v3701 = vsel %vm3639, %v3579, 0
    %v3704 = vsel %vm3639, %v3580, 0
    %v3707 = vsel %vm3639, %v3581, 0
    %v3710 = vsel %vm3639, %v3582, 0
    %v3713 = vsel %vm3639, %v3583, 0
    %v3716 = vsel %vm3639, %v3584, 0
    %v3719 = vsel %vm3639, %v3585, 0
    %v3722 = vsel %vm3639, %v3586, 0
    %v3725 = vsel %vm3639, %v3587, 0
    %v3728 = vsel %vm3639, %v3588, 0
    %v3731 = vsel %vm3639, %v3589, 0
    %v3734 = vsel %vm3639, %v3590, 0
    %v3737 = vsel %vm3639, %v3591, 0
    %v3740 = vsel %vm3639, %v3592, 0
    %v3743 = vsel %vm3639, %v3593, 0
    %v3746 = vsel %vm3639, %v3594, 0
    %v3749 = vsel %vm3639, %v3595, 0
    %v3752 = vsel %vm3639, %v3596, 0
    %v3755 = vsel %vm3639, %v3597, 0
    %v3758 = vsel %vm3639, %v3598, 0
    %v3761 = vsel %vm3639, %v3599, 0
    %v3764 = vsel %vm3639, %v3600, 0
    %v3767 = vsel %vm3639, %v3601, 0
    %v3770 = vsel %vm3639, %v3602, 0
    %v3773 = vsel %vm3639, %v3603, 0
    %v3776 = vsel %vm3639, %v3604, 0
    %v3779 = vsel %vm3639, %v3605, 0
    %v3782 = vsel %vm3639, %v3606, 0
    %v3785 = vsel %vm3639, %v3607, 0
    %v3788 = vsel %vm3639, %v3608, 0
    %v3791 = vsel %vm3639, %v3609, 0
    %v3794 = vsel %vm3639, %v3610, 0
    %v3797 = vsel %vm3639, %v3611, 0
    %v3800 = vsel %vm3639, %v3612, 0
    %v3803 = vsel %vm3639, %v3613, 0
    %v3806 = vsel %vm3639, %v3614, 0
    %v3809 = vsel %vm3639, %v3615, 0
    %v3812 = vsel %vm3639, %v3616, 0
    %v3815 = vsel %vm3639, %v3617, 0
    %v3818 = vsel %vm3639, %v3618, 0
    %v3821 = vsel %vm3639, %v3619, 0
    %v3824 = vsel %vm3639, %v3620, 0
    %v3827 = vsel %vm3639, %v3621, 0
    %v3830 = vsel %vm3639, %v3622, 0
    %3832 = vmatprep.subr.mxu0 0.0
    %3833 = vmatpush1.msra.mxu0 %v3623
    %3834 = vmatprep.subr.mxu0 0.0
    %3835 = vmatpush1.msra.mxu0 %v3624
    %3836 = vmatprep.subr.mxu0 0.0
    %3837 = vmatpush1.msra.mxu0 %v3625
    %3838 = vmatprep.subr.mxu0 0.0
    %3839 = vmatpush1.msra.mxu0 %v3626
    %3840 = vmatprep.subr.mxu0 0.0
    %3841 = vmatpush1.msra.mxu0 %v3627
    %3842 = vmatprep.subr.mxu0 0.0
    %3843 = vmatpush1.msra.mxu0 %v3628
    %3844 = vmatprep.subr.mxu0 0.0
    %3845 = vmatpush1.msra.mxu0 %v3629
    %3846 = vmatprep.subr.mxu0 0.0
    %3847 = vmatpush1.msra.mxu0 %v3630
    %3848 = vmatprep.subr.mxu0 0.0
    %3849 = vmatpush1.msra.mxu0 %v3631
    %3850 = vmatprep.subr.mxu0 0.0
    %3851 = vmatpush1.msra.mxu0 0.0
    %3852 = vmatprep.subr.mxu0 0.0
    %3853 = vmatpush1.msra.mxu0 0.0
    %3854 = vmatprep.subr.mxu0 0.0
    %3855 = vmatpush1.msra.mxu0 0.0
    %3856 = vmatprep.subr.mxu0 0.0
    %3857 = vmatpush1.msra.mxu0 0.0
    %3858 = vmatprep.subr.mxu0 0.0
    %3859 = vmatpush1.msra.mxu0 0.0
    %3860 = vmatprep.subr.mxu0 0.0
    %3861 = vmatpush1.msra.mxu0 0.0
    %3862 = vmatprep.subr.mxu0 0.0
    %3863 = vmatpush1.msra.mxu0 0.0
    %3864 = vmatprep.subr.mxu0 0.0
    %3865 = vmatpush1.msra.mxu0 0.0
    %3866 = vmatprep.subr.mxu0 0.0
    %3867 = vmatpush1.msra.mxu0 0.0
    %3868 = vmatprep.subr.mxu0 0.0
    %3869 = vmatpush1.msra.mxu0 0.0
    %3870 = vmatprep.subr.mxu0 0.0
    %3871 = vmatpush1.msra.mxu0 0.0
    %3872 = vmatprep.subr.mxu0 0.0
    %3873 = vmatpush1.msra.mxu0 0.0
    %3874 = vmatprep.subr.mxu0 0.0
    %3875 = vmatpush1.msra.mxu0 0.0
    %3876 = vmatprep.subr.mxu0 0.0
    %3877 = vmatpush1.msra.mxu0 0.0
    %3878 = vmatprep.subr.mxu0 0.0
    %3879 = vmatpush1.msra.mxu0 0.0
    %3880 = vmatprep.subr.mxu0 0.0
    %3881 = vmatpush1.msra.mxu0 0.0
    %3882 = vmatprep.subr.mxu0 0.0
    %3883 = vmatpush1.msra.mxu0 0.0
    %3884 = vmatprep.subr.mxu0 0.0
    %3885 = vmatpush1.msra.mxu0 0.0
    %3886 = vmatprep.subr.mxu0 0.0
    %3887 = vmatpush1.msra.mxu0 0.0
    %3888 = vmatprep.subr.mxu0 0.0
    %3889 = vmatpush1.msra.mxu0 0.0
    %3890 = vmatprep.subr.mxu0 0.0
    %3891 = vmatpush1.msra.mxu0 0.0
    %3892 = vmatprep.subr.mxu0 0.0
    %3893 = vmatpush1.msra.mxu0 0.0
    %3894 = vmatprep.subr.mxu0 0.0
    %3895 = vmatpush1.msra.mxu0 0.0
    %3896 = vmatprep.mubr.f32.mxu0 0.0
    %3897 = vmatmul.mubr.f32.gmra.mrb[0].mxu0 %v3641
    %v3898 = vpop.f32.mrb[0].mxu0
    %v3899 = vadd.f32 %v3637, %v3898
    %v3900 = vpop.f32.mrb[0].mxu0
    %3901 = vmatprep.mubr.f32.mxu0 0.0
    %3902 = vmatmul.mubr.f32.gmra.mrb[0].mxu0 %v3644
    %v3903 = vpop.f32.mrb[0].mxu0
    %v3904 = vadd.f32 %v3637, %v3903
    %v3905 = vpop.f32.mrb[0].mxu0
    %3906 = vmatprep.mubr.f32.mxu0 0.0
    %3907 = vmatmul.mubr.f32.gmra.mrb[0].mxu0 %v3647
    %v3908 = vpop.f32.mrb[0].mxu0
    %v3909 = vadd.f32 %v3637, %v3908
    %v3910 = vpop.f32.mrb[0].mxu0
    %3911 = vmatprep.mubr.f32.mxu0 0.0
    %3912 = vmatmul.mubr.f32.gmra.mrb[0].mxu0 %v3650
    %v3913 = vpop.f32.mrb[0].mxu0
    %v3914 = vadd.f32 %v3637, %v3913
    %v3915 = vpop.f32.mrb[0].mxu0
    %3916 = vmatprep.mubr.f32.mxu0 0.0
    %3917 = vmatmul.mubr.f32.gmra.mrb[0].mxu0 %v3653
    %v3918 = vpop.f32.mrb[0].mxu0
    %v3919 = vadd.f32 %v3637, %v3918
    %v3920 = vpop.f32.mrb[0].mxu0
    %3921 = vmatprep.mubr.f32.mxu0 0.0
    %3922 = vmatmul.mubr.f32.gmra.mrb[0].mxu0 %v3656
    %v3923 = vpop.f32.mrb[0].mxu0
    %v3924 = vadd.f32 %v3637, %v3923
    %v3925 = vpop.f32.mrb[0].mxu0
    %3926 = vmatprep.mubr.f32.mxu0 0.0
    %3927 = vmatmul.mubr.f32.gmra.mrb[0].mxu0 %v3659
    %v3928 = vpop.f32.mrb[0].mxu0
    %v3929 = vadd.f32 %v3637, %v3928
    %v3930 = vpop.f32.mrb[0].mxu0
    %3931 = vmatprep.mubr.f32.mxu0 0.0
    %3932 = vmatmul.mubr.f32.gmra.mrb[0].mxu0 %v3662
    %v3933 = vpop.f32.mrb[0].mxu0
    %v3934 = vadd.f32 %v3637, %v3933
    %v3935 = vpop.f32.mrb[0].mxu0
    %3936 = vmatprep.mubr.f32.mxu0 0.0
    %3937 = vmatmul.mubr.f32.gmra.mrb[0].mxu0 %v3665
    %v3938 = vpop.f32.mrb[0].mxu0
    %v3939 = vadd.f32 %v3637, %v3938
    %v3940 = vpop.f32.mrb[0].mxu0
    %3941 = vmatprep.mubr.f32.mxu0 0.0
    %3942 = vmatmul.mubr.f32.gmra.mrb[0].mxu0 %v3668
    %v3943 = vpop.f32.mrb[0].mxu0
    %v3944 = vadd.f32 %v3637, %v3943
    %v3945 = vpop.f32.mrb[0].mxu0
    %3946 = vmatprep.mubr.f32.mxu0 0.0
    %3947 = vmatmul.mubr.f32.gmra.mrb[0].mxu0 %v3671
    %v3948 = vpop.f32.mrb[0].mxu0
    %v3949 = vadd.f32 %v3637, %v3948
    %v3950 = vpop.f32.mrb[0].mxu0
    %3951 = vmatprep.mubr.f32.mxu0 0.0
    %3952 = vmatmul.mubr.f32.gmra.mrb[0].mxu0 %v3674
    %v3953 = vpop.f32.mrb[0].mxu0
    %v3954 = vadd.f32 %v3637, %v3953
    %v3955 = vpop.f32.mrb[0].mxu0
    %3956 = vmatprep.mubr.f32.mxu0 0.0
    %3957 = vmatmul.mubr.f32.gmra.mrb[0].mxu0 %v3677
    %v3958 = vpop.f32.mrb[0].mxu0
    %v3959 = vadd.f32 %v3637, %v3958
    %v3960 = vpop.f32.mrb[0].mxu0
    %3961 = vmatprep.mubr.f32.mxu0 0.0
    %3962 = vmatmul.mubr.f32.gmra.mrb[0].mxu0 %v3680
    %v3963 = vpop.f32.mrb[0].mxu0
    %v3964 = vadd.f32 %v3637, %v3963
    %v3965 = vpop.f32.mrb[0].mxu0
    %3966 = vmatprep.mubr.f32.mxu0 0.0
    %3967 = vmatmul.mubr.f32.gmra.mrb[0].mxu0 %v3683
    %v3968 = vpop.f32.mrb[0].mxu0
    %v3969 = vadd.f32 %v3637, %v3968
    %v3970 = vpop.f32.mrb[0].mxu0
    %3971 = vmatprep.mubr.f32.mxu0 0.0
    %3972 = vmatmul.mubr.f32.gmra.mrb[0].mxu0 %v3686
    %v3973 = vpop.f32.mrb[0].mxu0
    %v3974 = vadd.f32 %v3637, %v3973
    %v3975 = vpop.f32.mrb[0].mxu0
    %3976 = vmatprep.mubr.f32.mxu0 0.0
    %3977 = vmatmul.mubr.f32.gmra.mrb[0].mxu0 %v3689
    %v3978 = vpop.f32.mrb[0].mxu0
    %v3979 = vadd.f32 %v3637, %v3978
    %v3980 = vpop.f32.mrb[0].mxu0
    %3981 = vmatprep.mubr.f32.mxu0 0.0
    %3982 = vmatmul.mubr.f32.gmra.mrb[0].mxu0 %v3692
    %v3983 = vpop.f32.mrb[0].mxu0
    %v3984 = vadd.f32 %v3637, %v3983
    %v3985 = vpop.f32.mrb[0].mxu0
    %3986 = vmatprep.mubr.f32.mxu0 0.0
    %3987 = vmatmul.mubr.f32.gmra.mrb[0].mxu0 %v3695
    %v3988 = vpop.f32.mrb[0].mxu0
    %v3989 = vadd.f32 %v3637, %v3988
    %v3990 = vpop.f32.mrb[0].mxu0
    %3991 = vmatprep.mubr.f32.mxu0 0.0
    %3992 = vmatmul.mubr.f32.gmra.mrb[0].mxu0 %v3698
    %v3993 = vpop.f32.mrb[0].mxu0
    %v3994 = vadd.f32 %v3637, %v3993
    %v3995 = vpop.f32.mrb[0].mxu0
    %3996 = vmatprep.mubr.f32.mxu0 0.0
    %3997 = vmatmul.mubr.f32.gmra.mrb[0].mxu0 %v3701
    %v3998 = vpop.f32.mrb[0].mxu0
    %v3999 = vadd.f32 %v3637, %v3998
    %v4000 = vpop.f32.mrb[0].mxu0
    %4001 = vmatprep.mubr.f32.mxu0 0.0
    %4002 = vmatmul.mubr.f32.gmra.mrb[0].mxu0 %v3704
    %v4003 = vpop.f32.mrb[0].mxu0
    %v4004 = vadd.f32 %v3637, %v4003
    %v4005 = vpop.f32.mrb[0].mxu0
    %4006 = vmatprep.mubr.f32.mxu0 0.0
    %4007 = vmatmul.mubr.f32.gmra.mrb[0].mxu0 %v3707
    %v4008 = vpop.f32.mrb[0].mxu0
    %v4009 = vadd.f32 %v3637, %v4008
    %v4010 = vpop.f32.mrb[0].mxu0
    %4011 = vmatprep.mubr.f32.mxu0 0.0
    %4012 = vmatmul.mubr.f32.gmra.mrb[0].mxu0 %v3710
    %v4013 = vpop.f32.mrb[0].mxu0
    %v4014 = vadd.f32 %v3637, %v4013
    %v4015 = vpop.f32.mrb[0].mxu0
    %4016 = vmatprep.mubr.f32.mxu0 0.0
    %4017 = vmatmul.mubr.f32.gmra.mrb[0].mxu0 %v3713
    %v4018 = vpop.f32.mrb[0].mxu0
    %v4019 = vadd.f32 %v3637, %v4018
    %v4020 = vpop.f32.mrb[0].mxu0
    %4021 = vmatprep.mubr.f32.mxu0 0.0
    %4022 = vmatmul.mubr.f32.gmra.mrb[0].mxu0 %v3716
    %v4023 = vpop.f32.mrb[0].mxu0
    %v4024 = vadd.f32 %v3637, %v4023
    %v4025 = vpop.f32.mrb[0].mxu0
    %4026 = vmatprep.mubr.f32.mxu0 0.0
    %4027 = vmatmul.mubr.f32.gmra.mrb[0].mxu0 %v3719
    %v4028 = vpop.f32.mrb[0].mxu0
    %v4029 = vadd.f32 %v3637, %v4028
    %v4030 = vpop.f32.mrb[0].mxu0
    %4031 = vmatprep.mubr.f32.mxu0 0.0
    %4032 = vmatmul.mubr.f32.gmra.mrb[0].mxu0 %v3722
    %v4033 = vpop.f32.mrb[0].mxu0
    %v4034 = vadd.f32 %v3637, %v4033
    %v4035 = vpop.f32.mrb[0].mxu0
    %4036 = vmatprep.mubr.f32.mxu0 0.0
    %4037 = vmatmul.mubr.f32.gmra.mrb[0].mxu0 %v3725
    %v4038 = vpop.f32.mrb[0].mxu0
    %v4039 = vadd.f32 %v3637, %v4038
    %v4040 = vpop.f32.mrb[0].mxu0
    %4041 = vmatprep.mubr.f32.mxu0 0.0
    %4042 = vmatmul.mubr.f32.gmra.mrb[0].mxu0 %v3728
    %v4043 = vpop.f32.mrb[0].mxu0
    %v4044 = vadd.f32 %v3637, %v4043
    %v4045 = vpop.f32.mrb[0].mxu0
    %4046 = vmatprep.mubr.f32.mxu0 0.0
    %4047 = vmatmul.mubr.f32.gmra.mrb[0].mxu0 %v3731
    %v4048 = vpop.f32.mrb[0].mxu0
    %v4049 = vadd.f32 %v3637, %v4048
    %v4050 = vpop.f32.mrb[0].mxu0
    %4051 = vmatprep.mubr.f32.mxu0 0.0
    %4052 = vmatmul.mubr.f32.gmra.mrb[0].mxu0 %v3734
    %v4053 = vpop.f32.mrb[0].mxu0
    %v4054 = vadd.f32 %v3637, %v4053
    %v4055 = vpop.f32.mrb[0].mxu0
    %4056 = vmatprep.mubr.f32.mxu0 0.0
    %4057 = vmatmul.mubr.f32.gmra.mrb[0].mxu0 %v3737
    %v4058 = vpop.f32.mrb[0].mxu0
    %v4059 = vadd.f32 %v3637, %v4058
    %v4060 = vpop.f32.mrb[0].mxu0
    %4061 = vmatprep.mubr.f32.mxu0 0.0
    %4062 = vmatmul.mubr.f32.gmra.mrb[0].mxu0 %v3740
    %v4063 = vpop.f32.mrb[0].mxu0
    %v4064 = vadd.f32 %v3637, %v4063
    %v4065 = vpop.f32.mrb[0].mxu0
    %4066 = vmatprep.mubr.f32.mxu0 0.0
    %4067 = vmatmul.mubr.f32.gmra.mrb[0].mxu0 %v3743
    %v4068 = vpop.f32.mrb[0].mxu0
    %v4069 = vadd.f32 %v3637, %v4068
    %v4070 = vpop.f32.mrb[0].mxu0
    %4071 = vmatprep.mubr.f32.mxu0 0.0
    %4072 = vmatmul.mubr.f32.gmra.mrb[0].mxu0 %v3746
    %v4073 = vpop.f32.mrb[0].mxu0
    %v4074 = vadd.f32 %v3637, %v4073
    %v4075 = vpop.f32.mrb[0].mxu0
    %4076 = vmatprep.mubr.f32.mxu0 0.0
    %4077 = vmatmul.mubr.f32.gmra.mrb[0].mxu0 %v3749
    %v4078 = vpop.f32.mrb[0].mxu0
    %v4079 = vadd.f32 %v3637, %v4078
    %v4080 = vpop.f32.mrb[0].mxu0
    %4081 = vmatprep.mubr.f32.mxu0 0.0
    %4082 = vmatmul.mubr.f32.gmra.mrb[0].mxu0 %v3752
    %v4083 = vpop.f32.mrb[0].mxu0
    %v4084 = vadd.f32 %v3637, %v4083
    %v4085 = vpop.f32.mrb[0].mxu0
    %4086 = vmatprep.mubr.f32.mxu0 0.0
    %4087 = vmatmul.mubr.f32.gmra.mrb[0].mxu0 %v3755
    %v4088 = vpop.f32.mrb[0].mxu0
    %v4089 = vadd.f32 %v3637, %v4088
    %v4090 = vpop.f32.mrb[0].mxu0
    %4091 = vmatprep.mubr.f32.mxu0 0.0
    %4092 = vmatmul.mubr.f32.gmra.mrb[0].mxu0 %v3758
    %v4093 = vpop.f32.mrb[0].mxu0
    %v4094 = vadd.f32 %v3637, %v4093
    %v4095 = vpop.f32.mrb[0].mxu0
    %4096 = vmatprep.mubr.f32.mxu0 0.0
    %4097 = vmatmul.mubr.f32.gmra.mrb[0].mxu0 %v3761
    %v4098 = vpop.f32.mrb[0].mxu0
    %v4099 = vadd.f32 %v3637, %v4098
    %v4100 = vpop.f32.mrb[0].mxu0
    %4101 = vmatprep.mubr.f32.mxu0 0.0
    %4102 = vmatmul.mubr.f32.gmra.mrb[0].mxu0 %v3764
    %v4103 = vpop.f32.mrb[0].mxu0
    %v4104 = vadd.f32 %v3637, %v4103
    %v4105 = vpop.f32.mrb[0].mxu0
    %4106 = vmatprep.mubr.f32.mxu0 0.0
    %4107 = vmatmul.mubr.f32.gmra.mrb[0].mxu0 %v3767
    %v4108 = vpop.f32.mrb[0].mxu0
    %v4109 = vadd.f32 %v3637, %v4108
    %v4110 = vpop.f32.mrb[0].mxu0
    %4111 = vmatprep.mubr.f32.mxu0 0.0
    %4112 = vmatmul.mubr.f32.gmra.mrb[0].mxu0 %v3770
    %v4113 = vpop.f32.mrb[0].mxu0
    %v4114 = vadd.f32 %v3637, %v4113
    %v4115 = vpop.f32.mrb[0].mxu0
    %4116 = vmatprep.mubr.f32.mxu0 0.0
    %4117 = vmatmul.mubr.f32.gmra.mrb[0].mxu0 %v3773
    %v4118 = vpop.f32.mrb[0].mxu0
    %v4119 = vadd.f32 %v3637, %v4118
    %v4120 = vpop.f32.mrb[0].mxu0
    %4121 = vmatprep.mubr.f32.mxu0 0.0
    %4122 = vmatmul.mubr.f32.gmra.mrb[0].mxu0 %v3776
    %v4123 = vpop.f32.mrb[0].mxu0
    %v4124 = vadd.f32 %v3637, %v4123
    %v4125 = vpop.f32.mrb[0].mxu0
    %4126 = vmatprep.mubr.f32.mxu0 0.0
    %4127 = vmatmul.mubr.f32.gmra.mrb[0].mxu0 %v3779
    %v4128 = vpop.f32.mrb[0].mxu0
    %v4129 = vadd.f32 %v3637, %v4128
    %v4130 = vpop.f32.mrb[0].mxu0
    %4131 = vmatprep.mubr.f32.mxu0 0.0
    %4132 = vmatmul.mubr.f32.gmra.mrb[0].mxu0 %v3782
    %v4133 = vpop.f32.mrb[0].mxu0
    %v4134 = vadd.f32 %v3637, %v4133
    %v4135 = vpop.f32.mrb[0].mxu0
    %4136 = vmatprep.mubr.f32.mxu0 0.0
    %4137 = vmatmul.mubr.f32.gmra.mrb[0].mxu0 %v3785
    %v4138 = vpop.f32.mrb[0].mxu0
    %v4139 = vadd.f32 %v3637, %v4138
    %v4140 = vpop.f32.mrb[0].mxu0
    %4141 = vmatprep.mubr.f32.mxu0 0.0
    %4142 = vmatmul.mubr.f32.gmra.mrb[0].mxu0 %v3788
    %v4143 = vpop.f32.mrb[0].mxu0
    %v4144 = vadd.f32 %v3637, %v4143
    %v4145 = vpop.f32.mrb[0].mxu0
    %4146 = vmatprep.mubr.f32.mxu0 0.0
    %4147 = vmatmul.mubr.f32.gmra.mrb[0].mxu0 %v3791
    %v4148 = vpop.f32.mrb[0].mxu0
    %v4149 = vadd.f32 %v3637, %v4148
    %v4150 = vpop.f32.mrb[0].mxu0
    %4151 = vmatprep.mubr.f32.mxu0 0.0
    %4152 = vmatmul.mubr.f32.gmra.mrb[0].mxu0 %v3794
    %v4153 = vpop.f32.mrb[0].mxu0
    %v4154 = vadd.f32 %v3637, %v4153
    %v4155 = vpop.f32.mrb[0].mxu0
    %4156 = vmatprep.mubr.f32.mxu0 0.0
    %4157 = vmatmul.mubr.f32.gmra.mrb[0].mxu0 %v3797
    %v4158 = vpop.f32.mrb[0].mxu0
    %v4159 = vadd.f32 %v3637, %v4158
    %v4160 = vpop.f32.mrb[0].mxu0
    %4161 = vmatprep.mubr.f32.mxu0 0.0
    %4162 = vmatmul.mubr.f32.gmra.mrb[0].mxu0 %v3800
    %v4163 = vpop.f32.mrb[0].mxu0
    %v4164 = vadd.f32 %v3637, %v4163
    %v4165 = vpop.f32.mrb[0].mxu0
    %4166 = vmatprep.mubr.f32.mxu0 0.0
    %4167 = vmatmul.mubr.f32.gmra.mrb[0].mxu0 %v3803
    %v4168 = vpop.f32.mrb[0].mxu0
    %v4169 = vadd.f32 %v3637, %v4168
    %v4170 = vpop.f32.mrb[0].mxu0
    %4171 = vmatprep.mubr.f32.mxu0 0.0
    %4172 = vmatmul.mubr.f32.gmra.mrb[0].mxu0 %v3806
    %v4173 = vpop.f32.mrb[0].mxu0
    %v4174 = vadd.f32 %v3637, %v4173
    %v4175 = vpop.f32.mrb[0].mxu0
    %4176 = vmatprep.mubr.f32.mxu0 0.0
    %4177 = vmatmul.mubr.f32.gmra.mrb[0].mxu0 %v3809
    %v4178 = vpop.f32.mrb[0].mxu0
    %v4179 = vadd.f32 %v3637, %v4178
    %v4180 = vpop.f32.mrb[0].mxu0
    %4181 = vmatprep.mubr.f32.mxu0 0.0
    %4182 = vmatmul.mubr.f32.gmra.mrb[0].mxu0 %v3812
    %v4183 = vpop.f32.mrb[0].mxu0
    %v4184 = vadd.f32 %v3637, %v4183
    %v4185 = vpop.f32.mrb[0].mxu0
    %4186 = vmatprep.mubr.f32.mxu0 0.0
    %4187 = vmatmul.mubr.f32.gmra.mrb[0].mxu0 %v3815
    %v4188 = vpop.f32.mrb[0].mxu0
    %v4189 = vadd.f32 %v3637, %v4188
    %v4190 = vpop.f32.mrb[0].mxu0
    %4191 = vmatprep.mubr.f32.mxu0 0.0
    %4192 = vmatmul.mubr.f32.gmra.mrb[0].mxu0 %v3818
    %v4193 = vpop.f32.mrb[0].mxu0
    %v4194 = vadd.f32 %v3637, %v4193
    %v4195 = vpop.f32.mrb[0].mxu0
    %4196 = vmatprep.mubr.f32.mxu0 0.0
    %4197 = vmatmul.mubr.f32.gmra.mrb[0].mxu0 %v3821
    %v4198 = vpop.f32.mrb[0].mxu0
    %v4199 = vadd.f32 %v3637, %v4198
    %v4200 = vpop.f32.mrb[0].mxu0
    %4201 = vmatprep.mubr.f32.mxu0 0.0
    %4202 = vmatmul.mubr.f32.gmra.mrb[0].mxu0 %v3824
    %v4203 = vpop.f32.mrb[0].mxu0
    %v4204 = vadd.f32 %v3637, %v4203
    %v4205 = vpop.f32.mrb[0].mxu0
    %4206 = vmatprep.mubr.f32.mxu0 0.0
    %4207 = vmatmul.mubr.f32.gmra.mrb[0].mxu0 %v3827
    %v4208 = vpop.f32.mrb[0].mxu0
    %v4209 = vadd.f32 %v3637, %v4208
    %v4210 = vpop.f32.mrb[0].mxu0
    %4211 = vmatprep.mubr.f32.mxu0 0.0
    %4212 = vmatmul.mubr.f32.gmra.mrb[0].mxu0 %v3830
    %v4213 = vpop.f32.mrb[0].mxu0
    %v4214 = vadd.f32 %v3637, %v4213
    %v4215 = vpop.f32.mrb[0].mxu0
    %4216 = vdwg.mxu0
    %vm4217 = vcmp.gt.f32.partialorder %v3899, 0.0
    %vm4218 = vcmp.gt.f32.partialorder %v3904, 0.0
    %vm4219 = vcmp.gt.f32.partialorder %v3909, 0.0
    %vm4220 = vcmp.gt.f32.partialorder %v3914, 0.0
    %vm4221 = vcmp.gt.f32.partialorder %v3919, 0.0
    %vm4222 = vcmp.gt.f32.partialorder %v3924, 0.0
    %vm4223 = vcmp.gt.f32.partialorder %v3929, 0.0
    %vm4224 = vcmp.gt.f32.partialorder %v3934, 0.0
    %vm4225 = vcmp.gt.f32.partialorder %v3939, 0.0
    %vm4226 = vcmp.gt.f32.partialorder %v3944, 0.0
    %vm4227 = vcmp.gt.f32.partialorder %v3949, 0.0
    %vm4228 = vcmp.gt.f32.partialorder %v3954, 0.0
    %vm4229 = vcmp.gt.f32.partialorder %v3959, 0.0
    %vm4230 = vcmp.gt.f32.partialorder %v3964, 0.0
    %vm4231 = vcmp.gt.f32.partialorder %v3969, 0.0
    %vm4232 = vcmp.gt.f32.partialorder %v3974, 0.0
    %vm4233 = vcmp.gt.f32.partialorder %v3979, 0.0
    %vm4234 = vcmp.gt.f32.partialorder %v3984, 0.0
    %vm4235 = vcmp.gt.f32.partialorder %v3989, 0.0
    %vm4236 = vcmp.gt.f32.partialorder %v3994, 0.0
    %vm4237 = vcmp.gt.f32.partialorder %v3999, 0.0
    %vm4238 = vcmp.gt.f32.partialorder %v4004, 0.0
    %vm4239 = vcmp.gt.f32.partialorder %v4009, 0.0
    %vm4240 = vcmp.gt.f32.partialorder %v4014, 0.0
    %vm4241 = vcmp.gt.f32.partialorder %v4019, 0.0
    %vm4242 = vcmp.gt.f32.partialorder %v4024, 0.0
    %vm4243 = vcmp.gt.f32.partialorder %v4029, 0.0
    %vm4244 = vcmp.gt.f32.partialorder %v4034, 0.0
    %vm4245 = vcmp.gt.f32.partialorder %v4039, 0.0
    %vm4246 = vcmp.gt.f32.partialorder %v4044, 0.0
    %vm4247 = vcmp.gt.f32.partialorder %v4049, 0.0
    %vm4248 = vcmp.gt.f32.partialorder %v4054, 0.0
    %vm4249 = vcmp.gt.f32.partialorder %v4059, 0.0
    %vm4250 = vcmp.gt.f32.partialorder %v4064, 0.0
    %vm4251 = vcmp.gt.f32.partialorder %v4069, 0.0
    %vm4252 = vcmp.gt.f32.partialorder %v4074, 0.0
    %vm4253 = vcmp.gt.f32.partialorder %v4079, 0.0
    %vm4254 = vcmp.gt.f32.partialorder %v4084, 0.0
    %vm4255 = vcmp.gt.f32.partialorder %v4089, 0.0
    %vm4256 = vcmp.gt.f32.partialorder %v4094, 0.0
    %vm4257 = vcmp.gt.f32.partialorder %v4099, 0.0
    %vm4258 = vcmp.gt.f32.partialorder %v4104, 0.0
    %vm4259 = vcmp.gt.f32.partialorder %v4109, 0.0
    %vm4260 = vcmp.gt.f32.partialorder %v4114, 0.0
    %vm4261 = vcmp.gt.f32.partialorder %v4119, 0.0
    %vm4262 = vcmp.gt.f32.partialorder %v4124, 0.0
    %vm4263 = vcmp.gt.f32.partialorder %v4129, 0.0
    %vm4264 = vcmp.gt.f32.partialorder %v4134, 0.0
    %vm4265 = vcmp.gt.f32.partialorder %v4139, 0.0
    %vm4266 = vcmp.gt.f32.partialorder %v4144, 0.0
    %vm4267 = vcmp.gt.f32.partialorder %v4149, 0.0
    %vm4268 = vcmp.gt.f32.partialorder %v4154, 0.0
    %vm4269 = vcmp.gt.f32.partialorder %v4159, 0.0
    %vm4270 = vcmp.gt.f32.partialorder %v4164, 0.0
    %vm4271 = vcmp.gt.f32.partialorder %v4169, 0.0
    %vm4272 = vcmp.gt.f32.partialorder %v4174, 0.0
    %vm4273 = vcmp.gt.f32.partialorder %v4179, 0.0
    %vm4274 = vcmp.gt.f32.partialorder %v4184, 0.0
    %vm4275 = vcmp.gt.f32.partialorder %v4189, 0.0
    %vm4276 = vcmp.gt.f32.partialorder %v4194, 0.0
    %vm4277 = vcmp.gt.f32.partialorder %v4199, 0.0
    %vm4278 = vcmp.gt.f32.partialorder %v4204, 0.0
    %vm4279 = vcmp.gt.f32.partialorder %v4209, 0.0
    %vm4280 = vcmp.gt.f32.partialorder %v4214, 0.0
    %v4281 = vmul.f32 %v3899, 1.442695
    %v4282 = vpow.pop %v4281
    %v4283 = vmul.f32 %v3904, 1.442695
    %v4284 = vpow.pop %v4283
    %v4285 = vmul.f32 %v3909, 1.442695
    %v4286 = vpow.pop %v4285
    %v4287 = vmul.f32 %v3914, 1.442695
    %v4288 = vpow.pop %v4287
    %v4289 = vmul.f32 %v3919, 1.442695
    %v4290 = vpow.pop %v4289
    %v4291 = vmul.f32 %v3924, 1.442695
    %v4292 = vpow.pop %v4291
    %v4293 = vmul.f32 %v3929, 1.442695
    %v4294 = vpow.pop %v4293
    %v4295 = vmul.f32 %v3934, 1.442695
    %v4296 = vpow.pop %v4295
    %v4297 = vmul.f32 %v3939, 1.442695
    %v4298 = vpow.pop %v4297
    %v4299 = vmul.f32 %v3944, 1.442695
    %v4300 = vpow.pop %v4299
    %v4301 = vmul.f32 %v3949, 1.442695
    %v4302 = vpow.pop %v4301
    %v4303 = vmul.f32 %v3954, 1.442695
    %v4304 = vpow.pop %v4303
    %v4305 = vmul.f32 %v3959, 1.442695
    %v4306 = vpow.pop %v4305
    %v4307 = vmul.f32 %v3964, 1.442695
    %v4308 = vpow.pop %v4307
    %v4309 = vmul.f32 %v3969, 1.442695
    %v4310 = vpow.pop %v4309
    %v4311 = vmul.f32 %v3974, 1.442695
    %v4312 = vpow.pop %v4311
    %v4313 = vmul.f32 %v3979, 1.442695
    %v4314 = vpow.pop %v4313
    %v4315 = vmul.f32 %v3984, 1.442695
    %v4316 = vpow.pop %v4315
    %v4317 = vmul.f32 %v3989, 1.442695
    %v4318 = vpow.pop %v4317
    %v4319 = vmul.f32 %v3994, 1.442695
    %v4320 = vpow.pop %v4319
    %v4321 = vmul.f32 %v3999, 1.442695
    %v4322 = vpow.pop %v4321
    %v4323 = vmul.f32 %v4004, 1.442695
    %v4324 = vpow.pop %v4323
    %v4325 = vmul.f32 %v4009, 1.442695
    %v4326 = vpow.pop %v4325
    %v4327 = vmul.f32 %v4014, 1.442695
    %v4328 = vpow.pop %v4327
    %v4329 = vmul.f32 %v4019, 1.442695
    %v4330 = vpow.pop %v4329
    %v4331 = vmul.f32 %v4024, 1.442695
    %v4332 = vpow.pop %v4331
    %v4333 = vmul.f32 %v4029, 1.442695
    %v4334 = vpow.pop %v4333
    %v4335 = vmul.f32 %v4034, 1.442695
    %v4336 = vpow.pop %v4335
    %v4337 = vmul.f32 %v4039, 1.442695
    %v4338 = vpow.pop %v4337
    %v4339 = vmul.f32 %v4044, 1.442695
    %v4340 = vpow.pop %v4339
    %v4341 = vmul.f32 %v4049, 1.442695
    %v4342 = vpow.pop %v4341
    %v4343 = vmul.f32 %v4054, 1.442695
    %v4344 = vpow.pop %v4343
    %v4345 = vmul.f32 %v4059, 1.442695
    %v4346 = vpow.pop %v4345
    %v4347 = vmul.f32 %v4064, 1.442695
    %v4348 = vpow.pop %v4347
    %v4349 = vmul.f32 %v4069, 1.442695
    %v4350 = vpow.pop %v4349
    %v4351 = vmul.f32 %v4074, 1.442695
    %v4352 = vpow.pop %v4351
    %v4353 = vmul.f32 %v4079, 1.442695
    %v4354 = vpow.pop %v4353
    %v4355 = vmul.f32 %v4084, 1.442695
    %v4356 = vpow.pop %v4355
    %v4357 = vmul.f32 %v4089, 1.442695
    %v4358 = vpow.pop %v4357
    %v4359 = vmul.f32 %v4094, 1.442695
    %v4360 = vpow.pop %v4359
    %v4361 = vmul.f32 %v4099, 1.442695
    %v4362 = vpow.pop %v4361
    %v4363 = vmul.f32 %v4104, 1.442695
    %v4364 = vpow.pop %v4363
    %v4365 = vmul.f32 %v4109, 1.442695
    %v4366 = vpow.pop %v4365
    %v4367 = vmul.f32 %v4114, 1.442695
    %v4368 = vpow.pop %v4367
    %v4369 = vmul.f32 %v4119, 1.442695
    %v4370 = vpow.pop %v4369
    %v4371 = vmul.f32 %v4124, 1.442695
    %v4372 = vpow.pop %v4371
    %v4373 = vmul.f32 %v4129, 1.442695
    %v4374 = vpow.pop %v4373
    %v4375 = vmul.f32 %v4134, 1.442695
    %v4376 = vpow.pop %v4375
    %v4377 = vmul.f32 %v4139, 1.442695
    %v4378 = vpow.pop %v4377
    %v4379 = vmul.f32 %v4144, 1.442695
    %v4380 = vpow.pop %v4379
    %v4381 = vmul.f32 %v4149, 1.442695
    %v4382 = vpow.pop %v4381
    %v4383 = vmul.f32 %v4154, 1.442695
    %v4384 = vpow.pop %v4383
    %v4385 = vmul.f32 %v4159, 1.442695
    %v4386 = vpow.pop %v4385
    %v4387 = vmul.f32 %v4164, 1.442695
    %v4388 = vpow.pop %v4387
    %v4389 = vmul.f32 %v4169, 1.442695
    %v4390 = vpow.pop %v4389
    %v4391 = vmul.f32 %v4174, 1.442695
    %v4392 = vpow.pop %v4391
    %v4393 = vmul.f32 %v4179, 1.442695
    %v4394 = vpow.pop %v4393
    %v4395 = vmul.f32 %v4184, 1.442695
    %v4396 = vpow.pop %v4395
    %v4397 = vmul.f32 %v4189, 1.442695
    %v4398 = vpow.pop %v4397
    %v4399 = vmul.f32 %v4194, 1.442695
    %v4400 = vpow.pop %v4399
    %v4401 = vmul.f32 %v4199, 1.442695
    %v4402 = vpow.pop %v4401
    %v4403 = vmul.f32 %v4204, 1.442695
    %v4404 = vpow.pop %v4403
    %v4405 = vmul.f32 %v4209, 1.442695
    %v4406 = vpow.pop %v4405
    %v4407 = vmul.f32 %v4214, 1.442695
    %v4408 = vpow.pop %v4407
    %v4409 = vsub.f32 %v4282, 1.0
    %v4410 = vsub.f32 %v4284, 1.0
    %v4411 = vsub.f32 %v4286, 1.0
    %v4412 = vsub.f32 %v4288, 1.0
    %v4413 = vsub.f32 %v4290, 1.0
    %v4414 = vsub.f32 %v4292, 1.0
    %v4415 = vsub.f32 %v4294, 1.0
    %v4416 = vsub.f32 %v4296, 1.0
    %v4417 = vsub.f32 %v4298, 1.0
    %v4418 = vsub.f32 %v4300, 1.0
    %v4419 = vsub.f32 %v4302, 1.0
    %v4420 = vsub.f32 %v4304, 1.0
    %v4421 = vsub.f32 %v4306, 1.0
    %v4422 = vsub.f32 %v4308, 1.0
    %v4423 = vsub.f32 %v4310, 1.0
    %v4424 = vsub.f32 %v4312, 1.0
    %v4425 = vsub.f32 %v4314, 1.0
    %v4426 = vsub.f32 %v4316, 1.0
    %v4427 = vsub.f32 %v4318, 1.0
    %v4428 = vsub.f32 %v4320, 1.0
    %v4429 = vsub.f32 %v4322, 1.0
    %v4430 = vsub.f32 %v4324, 1.0
    %v4431 = vsub.f32 %v4326, 1.0
    %v4432 = vsub.f32 %v4328, 1.0
    %v4433 = vsub.f32 %v4330, 1.0
    %v4434 = vsub.f32 %v4332, 1.0
    %v4435 = vsub.f32 %v4334, 1.0
    %v4436 = vsub.f32 %v4336, 1.0
    %v4437 = vsub.f32 %v4338, 1.0
    %v4438 = vsub.f32 %v4340, 1.0
    %v4439 = vsub.f32 %v4342, 1.0
    %v4440 = vsub.f32 %v4344, 1.0
    %v4441 = vsub.f32 %v4346, 1.0
    %v4442 = vsub.f32 %v4348, 1.0
    %v4443 = vsub.f32 %v4350, 1.0
    %v4444 = vsub.f32 %v4352, 1.0
    %v4445 = vsub.f32 %v4354, 1.0
    %v4446 = vsub.f32 %v4356, 1.0
    %v4447 = vsub.f32 %v4358, 1.0
    %v4448 = vsub.f32 %v4360, 1.0
    %v4449 = vsub.f32 %v4362, 1.0
    %v4450 = vsub.f32 %v4364, 1.0
    %v4451 = vsub.f32 %v4366, 1.0
    %v4452 = vsub.f32 %v4368, 1.0
    %v4453 = vsub.f32 %v4370, 1.0
    %v4454 = vsub.f32 %v4372, 1.0
    %v4455 = vsub.f32 %v4374, 1.0
    %v4456 = vsub.f32 %v4376, 1.0
    %v4457 = vsub.f32 %v4378, 1.0
    %v4458 = vsub.f32 %v4380, 1.0
    %v4459 = vsub.f32 %v4382, 1.0
    %v4460 = vsub.f32 %v4384, 1.0
    %v4461 = vsub.f32 %v4386, 1.0
    %v4462 = vsub.f32 %v4388, 1.0
    %v4463 = vsub.f32 %v4390, 1.0
    %v4464 = vsub.f32 %v4392, 1.0
    %v4465 = vsub.f32 %v4394, 1.0
    %v4466 = vsub.f32 %v4396, 1.0
    %v4467 = vsub.f32 %v4398, 1.0
    %v4468 = vsub.f32 %v4400, 1.0
    %v4469 = vsub.f32 %v4402, 1.0
    %v4470 = vsub.f32 %v4404, 1.0
    %v4471 = vsub.f32 %v4406, 1.0
    %v4472 = vsub.f32 %v4408, 1.0
    %v4473 = vmul.f32 %v4409, 1.6732632
    %v4474 = vmul.f32 %v4410, 1.6732632
    %v4475 = vmul.f32 %v4411, 1.6732632
    %v4476 = vmul.f32 %v4412, 1.6732632
    %v4477 = vmul.f32 %v4413, 1.6732632
    %v4478 = vmul.f32 %v4414, 1.6732632
    %v4479 = vmul.f32 %v4415, 1.6732632
    %v4480 = vmul.f32 %v4416, 1.6732632
    %v4481 = vmul.f32 %v4417, 1.6732632
    %v4482 = vmul.f32 %v4418, 1.6732632
    %v4483 = vmul.f32 %v4419, 1.6732632
    %v4484 = vmul.f32 %v4420, 1.6732632
    %v4485 = vmul.f32 %v4421, 1.6732632
    %v4486 = vmul.f32 %v4422, 1.6732632
    %v4487 = vmul.f32 %v4423, 1.6732632
    %v4488 = vmul.f32 %v4424, 1.6732632
    %v4489 = vmul.f32 %v4425, 1.6732632
    %v4490 = vmul.f32 %v4426, 1.6732632
    %v4491 = vmul.f32 %v4427, 1.6732632
    %v4492 = vmul.f32 %v4428, 1.6732632
    %v4493 = vmul.f32 %v4429, 1.6732632
    %v4494 = vmul.f32 %v4430, 1.6732632
    %v4495 = vmul.f32 %v4431, 1.6732632
    %v4496 = vmul.f32 %v4432, 1.6732632
    %v4497 = vmul.f32 %v4433, 1.6732632
    %v4498 = vmul.f32 %v4434, 1.6732632
    %v4499 = vmul.f32 %v4435, 1.6732632
    %v4500 = vmul.f32 %v4436, 1.6732632
    %v4501 = vmul.f32 %v4437, 1.6732632
    %v4502 = vmul.f32 %v4438, 1.6732632
    %v4503 = vmul.f32 %v4439, 1.6732632
    %v4504 = vmul.f32 %v4440, 1.6732632
    %v4505 = vmul.f32 %v4441, 1.6732632
    %v4506 = vmul.f32 %v4442, 1.6732632
    %v4507 = vmul.f32 %v4443, 1.6732632
    %v4508 = vmul.f32 %v4444, 1.6732632
    %v4509 = vmul.f32 %v4445, 1.6732632
    %v4510 = vmul.f32 %v4446, 1.6732632
    %v4511 = vmul.f32 %v4447, 1.6732632
    %v4512 = vmul.f32 %v4448, 1.6732632
    %v4513 = vmul.f32 %v4449, 1.6732632
    %v4514 = vmul.f32 %v4450, 1.6732632
    %v4515 = vmul.f32 %v4451, 1.6732632
    %v4516 = vmul.f32 %v4452, 1.6732632
    %v4517 = vmul.f32 %v4453, 1.6732632
    %v4518 = vmul.f32 %v4454, 1.6732632
    %v4519 = vmul.f32 %v4455, 1.6732632
    %v4520 = vmul.f32 %v4456, 1.6732632
    %v4521 = vmul.f32 %v4457, 1.6732632
    %v4522 = vmul.f32 %v4458, 1.6732632
    %v4523 = vmul.f32 %v4459, 1.6732632
    %v4524 = vmul.f32 %v4460, 1.6732632
    %v4525 = vmul.f32 %v4461, 1.6732632
    %v4526 = vmul.f32 %v4462, 1.6732632
    %v4527 = vmul.f32 %v4463, 1.6732632
    %v4528 = vmul.f32 %v4464, 1.6732632
    %v4529 = vmul.f32 %v4465, 1.6732632
    %v4530 = vmul.f32 %v4466, 1.6732632
    %v4531 = vmul.f32 %v4467, 1.6732632
    %v4532 = vmul.f32 %v4468, 1.6732632
    %v4533 = vmul.f32 %v4469, 1.6732632
    %v4534 = vmul.f32 %v4470, 1.6732632
    %v4535 = vmul.f32 %v4471, 1.6732632
    %v4536 = vmul.f32 %v4472, 1.6732632
    %v4537 = vsel %vm4217, %v3899, %v4473
    %v4538 = vsel %vm4218, %v3904, %v4474
    %v4539 = vsel %vm4219, %v3909, %v4475
    %v4540 = vsel %vm4220, %v3914, %v4476
    %v4541 = vsel %vm4221, %v3919, %v4477
    %v4542 = vsel %vm4222, %v3924, %v4478
    %v4543 = vsel %vm4223, %v3929, %v4479
    %v4544 = vsel %vm4224, %v3934, %v4480
    %v4545 = vsel %vm4225, %v3939, %v4481
    %v4546 = vsel %vm4226, %v3944, %v4482
    %v4547 = vsel %vm4227, %v3949, %v4483
    %v4548 = vsel %vm4228, %v3954, %v4484
    %v4549 = vsel %vm4229, %v3959, %v4485
    %v4550 = vsel %vm4230, %v3964, %v4486
    %v4551 = vsel %vm4231, %v3969, %v4487
    %v4552 = vsel %vm4232, %v3974, %v4488
    %v4553 = vsel %vm4233, %v3979, %v4489
    %v4554 = vsel %vm4234, %v3984, %v4490
    %v4555 = vsel %vm4235, %v3989, %v4491
    %v4556 = vsel %vm4236, %v3994, %v4492
    %v4557 = vsel %vm4237, %v3999, %v4493
    %v4558 = vsel %vm4238, %v4004, %v4494
    %v4559 = vsel %vm4239, %v4009, %v4495
    %v4560 = vsel %vm4240, %v4014, %v4496
    %v4561 = vsel %vm4241, %v4019, %v4497
    %v4562 = vsel %vm4242, %v4024, %v4498
    %v4563 = vsel %vm4243, %v4029, %v4499
    %v4564 = vsel %vm4244, %v4034, %v4500
    %v4565 = vsel %vm4245, %v4039, %v4501
    %v4566 = vsel %vm4246, %v4044, %v4502
    %v4567 = vsel %vm4247, %v4049, %v4503
    %v4568 = vsel %vm4248, %v4054, %v4504
    %v4569 = vsel %vm4249, %v4059, %v4505
    %v4570 = vsel %vm4250, %v4064, %v4506
    %v4571 = vsel %vm4251, %v4069, %v4507
    %v4572 = vsel %vm4252, %v4074, %v4508
    %v4573 = vsel %vm4253, %v4079, %v4509
    %v4574 = vsel %vm4254, %v4084, %v4510
    %v4575 = vsel %vm4255, %v4089, %v4511
    %v4576 = vsel %vm4256, %v4094, %v4512
    %v4577 = vsel %vm4257, %v4099, %v4513
    %v4578 = vsel %vm4258, %v4104, %v4514
    %v4579 = vsel %vm4259, %v4109, %v4515
    %v4580 = vsel %vm4260, %v4114, %v4516
    %v4581 = vsel %vm4261, %v4119, %v4517
    %v4582 = vsel %vm4262, %v4124, %v4518
    %v4583 = vsel %vm4263, %v4129, %v4519
    %v4584 = vsel %vm4264, %v4134, %v4520
    %v4585 = vsel %vm4265, %v4139, %v4521
    %v4586 = vsel %vm4266, %v4144, %v4522
    %v4587 = vsel %vm4267, %v4149, %v4523
    %v4588 = vsel %vm4268, %v4154, %v4524
    %v4589 = vsel %vm4269, %v4159, %v4525
    %v4590 = vsel %vm4270, %v4164, %v4526
    %v4591 = vsel %vm4271, %v4169, %v4527
    %v4592 = vsel %vm4272, %v4174, %v4528
    %v4593 = vsel %vm4273, %v4179, %v4529
    %v4594 = vsel %vm4274, %v4184, %v4530
    %v4595 = vsel %vm4275, %v4189, %v4531
    %v4596 = vsel %vm4276, %v4194, %v4532
    %v4597 = vsel %vm4277, %v4199, %v4533
    %v4598 = vsel %vm4278, %v4204, %v4534
    %v4599 = vsel %vm4279, %v4209, %v4535
    %v4600 = vsel %vm4280, %v4214, %v4536
    %v4601 = vmul.f32 %v4537, 1.050701
    %v4602 = vmul.f32 %v4538, 1.050701
    %v4603 = vmul.f32 %v4539, 1.050701
    %v4604 = vmul.f32 %v4540, 1.050701
    %v4605 = vmul.f32 %v4541, 1.050701
    %v4606 = vmul.f32 %v4542, 1.050701
    %v4607 = vmul.f32 %v4543, 1.050701
    %v4608 = vmul.f32 %v4544, 1.050701
    %v4609 = vmul.f32 %v4545, 1.050701
    %v4610 = vmul.f32 %v4546, 1.050701
    %v4611 = vmul.f32 %v4547, 1.050701
    %v4612 = vmul.f32 %v4548, 1.050701
    %v4613 = vmul.f32 %v4549, 1.050701
    %v4614 = vmul.f32 %v4550, 1.050701
    %v4615 = vmul.f32 %v4551, 1.050701
    %v4616 = vmul.f32 %v4552, 1.050701
    %v4617 = vmul.f32 %v4553, 1.050701
    %v4618 = vmul.f32 %v4554, 1.050701
    %v4619 = vmul.f32 %v4555, 1.050701
    %v4620 = vmul.f32 %v4556, 1.050701
    %v4621 = vmul.f32 %v4557, 1.050701
    %v4622 = vmul.f32 %v4558, 1.050701
    %v4623 = vmul.f32 %v4559, 1.050701
    %v4624 = vmul.f32 %v4560, 1.050701
    %v4625 = vmul.f32 %v4561, 1.050701
    %v4626 = vmul.f32 %v4562, 1.050701
    %v4627 = vmul.f32 %v4563, 1.050701
    %v4628 = vmul.f32 %v4564, 1.050701
    %v4629 = vmul.f32 %v4565, 1.050701
    %v4630 = vmul.f32 %v4566, 1.050701
    %v4631 = vmul.f32 %v4567, 1.050701
    %v4632 = vmul.f32 %v4568, 1.050701
    %v4633 = vmul.f32 %v4569, 1.050701
    %v4634 = vmul.f32 %v4570, 1.050701
    %v4635 = vmul.f32 %v4571, 1.050701
    %v4636 = vmul.f32 %v4572, 1.050701
    %v4637 = vmul.f32 %v4573, 1.050701
    %v4638 = vmul.f32 %v4574, 1.050701
    %v4639 = vmul.f32 %v4575, 1.050701
    %v4640 = vmul.f32 %v4576, 1.050701
    %v4641 = vmul.f32 %v4577, 1.050701
    %v4642 = vmul.f32 %v4578, 1.050701
    %v4643 = vmul.f32 %v4579, 1.050701
    %v4644 = vmul.f32 %v4580, 1.050701
    %v4645 = vmul.f32 %v4581, 1.050701
    %v4646 = vmul.f32 %v4582, 1.050701
    %v4647 = vmul.f32 %v4583, 1.050701
    %v4648 = vmul.f32 %v4584, 1.050701
    %v4649 = vmul.f32 %v4585, 1.050701
    %v4650 = vmul.f32 %v4586, 1.050701
    %v4651 = vmul.f32 %v4587, 1.050701
    %v4652 = vmul.f32 %v4588, 1.050701
    %v4653 = vmul.f32 %v4589, 1.050701
    %v4654 = vmul.f32 %v4590, 1.050701
    %v4655 = vmul.f32 %v4591, 1.050701
    %v4656 = vmul.f32 %v4592, 1.050701
    %v4657 = vmul.f32 %v4593, 1.050701
    %v4658 = vmul.f32 %v4594, 1.050701
    %v4659 = vmul.f32 %v4595, 1.050701
    %v4660 = vmul.f32 %v4596, 1.050701
    %v4661 = vmul.f32 %v4597, 1.050701
    %v4662 = vmul.f32 %v4598, 1.050701
    %v4663 = vmul.f32 %v4599, 1.050701
    %v4664 = vmul.f32 %v4600, 1.050701
    %v4729 = vrot.slane %v4601, 7
    %v4730 = vrot.slane %v4602, 7
    %v4731 = vsel %vm942, %v4729, %v4730
    %v4732 = vrot.slane %v4603, 7
    %v4733 = vrot.slane %v4604, 7
    %v4734 = vsel %vm942, %v4732, %v4733
    %v4735 = vrot.slane %v4605, 7
    %v4736 = vrot.slane %v4606, 7
    %v4737 = vsel %vm942, %v4735, %v4736
    %v4738 = vrot.slane %v4607, 7
    %v4739 = vrot.slane %v4608, 7
    %v4740 = vsel %vm942, %v4738, %v4739
    %v4741 = vrot.slane %v4609, 7
    %v4742 = vrot.slane %v4610, 7
    %v4743 = vsel %vm942, %v4741, %v4742
    %v4744 = vrot.slane %v4611, 7
    %v4745 = vrot.slane %v4612, 7
    %v4746 = vsel %vm942, %v4744, %v4745
    %v4747 = vrot.slane %v4613, 7
    %v4748 = vrot.slane %v4614, 7
    %v4749 = vsel %vm942, %v4747, %v4748
    %v4750 = vrot.slane %v4615, 7
    %v4751 = vrot.slane %v4616, 7
    %v4752 = vsel %vm942, %v4750, %v4751
    %v4753 = vrot.slane %v4617, 7
    %v4754 = vrot.slane %v4618, 7
    %v4755 = vsel %vm942, %v4753, %v4754
    %v4756 = vrot.slane %v4619, 7
    %v4757 = vrot.slane %v4620, 7
    %v4758 = vsel %vm942, %v4756, %v4757
    %v4759 = vrot.slane %v4621, 7
    %v4760 = vrot.slane %v4622, 7
    %v4761 = vsel %vm942, %v4759, %v4760
    %v4762 = vrot.slane %v4623, 7
    %v4763 = vrot.slane %v4624, 7
    %v4764 = vsel %vm942, %v4762, %v4763
    %v4765 = vrot.slane %v4625, 7
    %v4766 = vrot.slane %v4626, 7
    %v4767 = vsel %vm942, %v4765, %v4766
    %v4768 = vrot.slane %v4627, 7
    %v4769 = vrot.slane %v4628, 7
    %v4770 = vsel %vm942, %v4768, %v4769
    %v4771 = vrot.slane %v4629, 7
    %v4772 = vrot.slane %v4630, 7
    %v4773 = vsel %vm942, %v4771, %v4772
    %v4774 = vrot.slane %v4631, 7
    %v4775 = vrot.slane %v4632, 7
    %v4776 = vsel %vm942, %v4774, %v4775
    %v4777 = vrot.slane %v4633, 7
    %v4778 = vrot.slane %v4634, 7
    %v4779 = vsel %vm942, %v4777, %v4778
    %v4780 = vrot.slane %v4635, 7
    %v4781 = vrot.slane %v4636, 7
    %v4782 = vsel %vm942, %v4780, %v4781
    %v4783 = vrot.slane %v4637, 7
    %v4784 = vrot.slane %v4638, 7
    %v4785 = vsel %vm942, %v4783, %v4784
    %v4786 = vrot.slane %v4639, 7
    %v4787 = vrot.slane %v4640, 7
    %v4788 = vsel %vm942, %v4786, %v4787
    %v4789 = vrot.slane %v4641, 7
    %v4790 = vrot.slane %v4642, 7
    %v4791 = vsel %vm942, %v4789, %v4790
    %v4792 = vrot.slane %v4643, 7
    %v4793 = vrot.slane %v4644, 7
    %v4794 = vsel %vm942, %v4792, %v4793
    %v4795 = vrot.slane %v4645, 7
    %v4796 = vrot.slane %v4646, 7
    %v4797 = vsel %vm942, %v4795, %v4796
    %v4798 = vrot.slane %v4647, 7
    %v4799 = vrot.slane %v4648, 7
    %v4800 = vsel %vm942, %v4798, %v4799
    %v4801 = vrot.slane %v4649, 7
    %v4802 = vrot.slane %v4650, 7
    %v4803 = vsel %vm942, %v4801, %v4802
    %v4804 = vrot.slane %v4651, 7
    %v4805 = vrot.slane %v4652, 7
    %v4806 = vsel %vm942, %v4804, %v4805
    %v4807 = vrot.slane %v4653, 7
    %v4808 = vrot.slane %v4654, 7
    %v4809 = vsel %vm942, %v4807, %v4808
    %v4810 = vrot.slane %v4655, 7
    %v4811 = vrot.slane %v4656, 7
    %v4812 = vsel %vm942, %v4810, %v4811
    %v4813 = vrot.slane %v4657, 7
    %v4814 = vrot.slane %v4658, 7
    %v4815 = vsel %vm942, %v4813, %v4814
    %v4816 = vrot.slane %v4659, 7
    %v4817 = vrot.slane %v4660, 7
    %v4818 = vsel %vm942, %v4816, %v4817
    %v4819 = vrot.slane %v4661, 7
    %v4820 = vrot.slane %v4662, 7
    %v4821 = vsel %vm942, %v4819, %v4820
    %v4822 = vrot.slane %v4663, 7
    %v4823 = vrot.slane %v4664, 7
    %v4824 = vsel %vm942, %v4822, %v4823
    %v4919 = vsel %vm942, 0.0, %v4729
    %v4920 = vsel %vm942, 0.0, %v4732
    %v4921 = vsel %vm942, 0.0, %v4735
    %v4922 = vsel %vm942, 0.0, %v4738
    %v4923 = vsel %vm942, 0.0, %v4741
    %v4924 = vsel %vm942, 0.0, %v4744
    %v4925 = vsel %vm942, 0.0, %v4747
    %v4926 = vsel %vm942, 0.0, %v4750
    %v4927 = vsel %vm942, 0.0, %v4753
    %v4928 = vsel %vm942, 0.0, %v4756
    %v4929 = vsel %vm942, 0.0, %v4759
    %v4930 = vsel %vm942, 0.0, %v4762
    %v4931 = vsel %vm942, 0.0, %v4765
    %v4932 = vsel %vm942, 0.0, %v4768
    %v4933 = vsel %vm942, 0.0, %v4771
    %v4934 = vsel %vm942, 0.0, %v4774
    %v4935 = vsel %vm942, 0.0, %v4777
    %v4936 = vsel %vm942, 0.0, %v4780
    %v4937 = vsel %vm942, 0.0, %v4783
    %v4938 = vsel %vm942, 0.0, %v4786
    %v4939 = vsel %vm942, 0.0, %v4789
    %v4940 = vsel %vm942, 0.0, %v4792
    %v4941 = vsel %vm942, 0.0, %v4795
    %v4942 = vsel %vm942, 0.0, %v4798
    %v4943 = vsel %vm942, 0.0, %v4801
    %v4944 = vsel %vm942, 0.0, %v4804
    %v4945 = vsel %vm942, 0.0, %v4807
    %v4946 = vsel %vm942, 0.0, %v4810
    %v4947 = vsel %vm942, 0.0, %v4813
    %v4948 = vsel %vm942, 0.0, %v4816
    %v4949 = vsel %vm942, 0.0, %v4819
    %v4950 = vsel %vm942, 0.0, %v4822
    %v4951 = vsel %vm942, %v4730, 0.0
    %v4952 = vsel %vm942, %v4733, 0.0
    %v4953 = vsel %vm942, %v4736, 0.0
    %v4954 = vsel %vm942, %v4739, 0.0
    %v4955 = vsel %vm942, %v4742, 0.0
    %v4956 = vsel %vm942, %v4745, 0.0
    %v4957 = vsel %vm942, %v4748, 0.0
    %v4958 = vsel %vm942, %v4751, 0.0
    %v4959 = vsel %vm942, %v4754, 0.0
    %v4960 = vsel %vm942, %v4757, 0.0
    %v4961 = vsel %vm942, %v4760, 0.0
    %v4962 = vsel %vm942, %v4763, 0.0
    %v4963 = vsel %vm942, %v4766, 0.0
    %v4964 = vsel %vm942, %v4769, 0.0
    %v4965 = vsel %vm942, %v4772, 0.0
    %v4966 = vsel %vm942, %v4775, 0.0
    %v4967 = vsel %vm942, %v4778, 0.0
    %v4968 = vsel %vm942, %v4781, 0.0
    %v4969 = vsel %vm942, %v4784, 0.0
    %v4970 = vsel %vm942, %v4787, 0.0
    %v4971 = vsel %vm942, %v4790, 0.0
    %v4972 = vsel %vm942, %v4793, 0.0
    %v4973 = vsel %vm942, %v4796, 0.0
    %v4974 = vsel %vm942, %v4799, 0.0
    %v4975 = vsel %vm942, %v4802, 0.0
    %v4976 = vsel %vm942, %v4805, 0.0
    %v4977 = vsel %vm942, %v4808, 0.0
    %v4978 = vsel %vm942, %v4811, 0.0
    %v4979 = vsel %vm942, %v4814, 0.0
    %v4980 = vsel %vm942, %v4817, 0.0
    %v4981 = vsel %vm942, %v4820, 0.0
    %v4982 = vsel %vm942, %v4823, 0.0
    %v5043 = vrot.slane %v4919, 1
    %v5044 = vrot.slane %v4731, 1
    %v5045 = vsel %vm1265, %v5043, %v5044
    %v5046 = vrot.slane %v4951, 1
    %v5047 = vsel %vm1265, %v5044, %v5046
    %v5048 = vrot.slane %v4920, 1
    %v5049 = vrot.slane %v4734, 1
    %v5050 = vsel %vm1265, %v5048, %v5049
    %v5051 = vrot.slane %v4952, 1
    %v5052 = vsel %vm1265, %v5049, %v5051
    %v5053 = vrot.slane %v4921, 1
    %v5054 = vrot.slane %v4737, 1
    %v5055 = vsel %vm1265, %v5053, %v5054
    %v5056 = vrot.slane %v4953, 1
    %v5057 = vsel %vm1265, %v5054, %v5056
    %v5058 = vrot.slane %v4922, 1
    %v5059 = vrot.slane %v4740, 1
    %v5060 = vsel %vm1265, %v5058, %v5059
    %v5061 = vrot.slane %v4954, 1
    %v5062 = vsel %vm1265, %v5059, %v5061
    %v5063 = vrot.slane %v4923, 1
    %v5064 = vrot.slane %v4743, 1
    %v5065 = vsel %vm1265, %v5063, %v5064
    %v5066 = vrot.slane %v4955, 1
    %v5067 = vsel %vm1265, %v5064, %v5066
    %v5068 = vrot.slane %v4924, 1
    %v5069 = vrot.slane %v4746, 1
    %v5070 = vsel %vm1265, %v5068, %v5069
    %v5071 = vrot.slane %v4956, 1
    %v5072 = vsel %vm1265, %v5069, %v5071
    %v5073 = vrot.slane %v4925, 1
    %v5074 = vrot.slane %v4749, 1
    %v5075 = vsel %vm1265, %v5073, %v5074
    %v5076 = vrot.slane %v4957, 1
    %v5077 = vsel %vm1265, %v5074, %v5076
    %v5078 = vrot.slane %v4926, 1
    %v5079 = vrot.slane %v4752, 1
    %v5080 = vsel %vm1265, %v5078, %v5079
    %v5081 = vrot.slane %v4958, 1
    %v5082 = vsel %vm1265, %v5079, %v5081
    %v5083 = vrot.slane %v4927, 1
    %v5084 = vrot.slane %v4755, 1
    %v5085 = vsel %vm1265, %v5083, %v5084
    %v5086 = vrot.slane %v4959, 1
    %v5087 = vsel %vm1265, %v5084, %v5086
    %v5088 = vrot.slane %v4928, 1
    %v5089 = vrot.slane %v4758, 1
    %v5090 = vsel %vm1265, %v5088, %v5089
    %v5091 = vrot.slane %v4960, 1
    %v5092 = vsel %vm1265, %v5089, %v5091
    %v5093 = vrot.slane %v4929, 1
    %v5094 = vrot.slane %v4761, 1
    %v5095 = vsel %vm1265, %v5093, %v5094
    %v5096 = vrot.slane %v4961, 1
    %v5097 = vsel %vm1265, %v5094, %v5096
    %v5098 = vrot.slane %v4930, 1
    %v5099 = vrot.slane %v4764, 1
    %v5100 = vsel %vm1265, %v5098, %v5099
    %v5101 = vrot.slane %v4962, 1
    %v5102 = vsel %vm1265, %v5099, %v5101
    %v5103 = vrot.slane %v4931, 1
    %v5104 = vrot.slane %v4767, 1
    %v5105 = vsel %vm1265, %v5103, %v5104
    %v5106 = vrot.slane %v4963, 1
    %v5107 = vsel %vm1265, %v5104, %v5106
    %v5108 = vrot.slane %v4932, 1
    %v5109 = vrot.slane %v4770, 1
    %v5110 = vsel %vm1265, %v5108, %v5109
    %v5111 = vrot.slane %v4964, 1
    %v5112 = vsel %vm1265, %v5109, %v5111
    %v5113 = vrot.slane %v4933, 1
    %v5114 = vrot.slane %v4773, 1
    %v5115 = vsel %vm1265, %v5113, %v5114
    %v5116 = vrot.slane %v4965, 1
    %v5117 = vsel %vm1265, %v5114, %v5116
    %v5118 = vrot.slane %v4935, 1
    %v5119 = vrot.slane %v4779, 1
    %v5120 = vsel %vm1265, %v5118, %v5119
    %v5121 = vrot.slane %v4967, 1
    %v5122 = vsel %vm1265, %v5119, %v5121
    %v5123 = vrot.slane %v4936, 1
    %v5124 = vrot.slane %v4782, 1
    %v5125 = vsel %vm1265, %v5123, %v5124
    %v5126 = vrot.slane %v4968, 1
    %v5127 = vsel %vm1265, %v5124, %v5126
    %v5128 = vrot.slane %v4937, 1
    %v5129 = vrot.slane %v4785, 1
    %v5130 = vsel %vm1265, %v5128, %v5129
    %v5131 = vrot.slane %v4969, 1
    %v5132 = vsel %vm1265, %v5129, %v5131
    %v5133 = vrot.slane %v4938, 1
    %v5134 = vrot.slane %v4788, 1
    %v5135 = vsel %vm1265, %v5133, %v5134
    %v5136 = vrot.slane %v4970, 1
    %v5137 = vsel %vm1265, %v5134, %v5136
    %v5138 = vrot.slane %v4939, 1
    %v5139 = vrot.slane %v4791, 1
    %v5140 = vsel %vm1265, %v5138, %v5139
    %v5141 = vrot.slane %v4971, 1
    %v5142 = vsel %vm1265, %v5139, %v5141
    %v5143 = vrot.slane %v4940, 1
    %v5144 = vrot.slane %v4794, 1
    %v5145 = vsel %vm1265, %v5143, %v5144
    %v5146 = vrot.slane %v4972, 1
    %v5147 = vsel %vm1265, %v5144, %v5146
    %v5148 = vrot.slane %v4941, 1
    %v5149 = vrot.slane %v4797, 1
    %v5150 = vsel %vm1265, %v5148, %v5149
    %v5151 = vrot.slane %v4973, 1
    %v5152 = vsel %vm1265, %v5149, %v5151
    %v5153 = vrot.slane %v4942, 1
    %v5154 = vrot.slane %v4800, 1
    %v5155 = vsel %vm1265, %v5153, %v5154
    %v5156 = vrot.slane %v4974, 1
    %v5157 = vsel %vm1265, %v5154, %v5156
    %v5158 = vrot.slane %v4943, 1
    %v5159 = vrot.slane %v4803, 1
    %v5160 = vsel %vm1265, %v5158, %v5159
    %v5161 = vrot.slane %v4975, 1
    %v5162 = vsel %vm1265, %v5159, %v5161
    %v5163 = vrot.slane %v4944, 1
    %v5164 = vrot.slane %v4806, 1
    %v5165 = vsel %vm1265, %v5163, %v5164
    %v5166 = vrot.slane %v4976, 1
    %v5167 = vsel %vm1265, %v5164, %v5166
    %v5168 = vrot.slane %v4945, 1
    %v5169 = vrot.slane %v4809, 1
    %v5170 = vsel %vm1265, %v5168, %v5169
    %v5171 = vrot.slane %v4977, 1
    %v5172 = vsel %vm1265, %v5169, %v5171
    %v5173 = vrot.slane %v4946, 1
    %v5174 = vrot.slane %v4812, 1
    %v5175 = vsel %vm1265, %v5173, %v5174
    %v5176 = vrot.slane %v4978, 1
    %v5177 = vsel %vm1265, %v5174, %v5176
    %v5178 = vrot.slane %v4947, 1
    %v5179 = vrot.slane %v4815, 1
    %v5180 = vsel %vm1265, %v5178, %v5179
    %v5181 = vrot.slane %v4979, 1
    %v5182 = vsel %vm1265, %v5179, %v5181
    %v5183 = vrot.slane %v4948, 1
    %v5184 = vrot.slane %v4818, 1
    %v5185 = vsel %vm1265, %v5183, %v5184
    %v5186 = vrot.slane %v4980, 1
    %v5187 = vsel %vm1265, %v5184, %v5186
    %v5188 = vrot.slane %v4949, 1
    %v5189 = vrot.slane %v4821, 1
    %v5190 = vsel %vm1265, %v5188, %v5189
    %v5191 = vrot.slane %v4981, 1
    %v5192 = vsel %vm1265, %v5189, %v5191
    %5193 = vrot.lane.b32.xlu0 %v1268, 4
    %v5194 = vpop.permute.xlu0 %5193
    %5195 = vrot.lane.b32.xlu0 %v1270, 4
    %v5196 = vpop.permute.xlu0 %5195
    %5197 = vrot.lane.b32.xlu0 %v5045, 4
    %v5198 = vpop.permute.xlu0 %5197
    %5199 = vrot.lane.b32.xlu0 %v5047, 4
    %v5200 = vpop.permute.xlu0 %5199
    %5201 = vrot.lane.b32.xlu0 %v5050, 4
    %v5202 = vpop.permute.xlu0 %5201
    %5203 = vrot.lane.b32.xlu0 %v5052, 4
    %v5204 = vpop.permute.xlu0 %5203
    %5205 = vrot.lane.b32.xlu0 %v5055, 4
    %v5206 = vpop.permute.xlu0 %5205
    %5207 = vrot.lane.b32.xlu0 %v5057, 4
    %v5208 = vpop.permute.xlu0 %5207
    %5209 = vrot.lane.b32.xlu0 %v5060, 4
    %v5210 = vpop.permute.xlu0 %5209
    %5211 = vrot.lane.b32.xlu0 %v5062, 4
    %v5212 = vpop.permute.xlu0 %5211
    %5213 = vrot.lane.b32.xlu0 %v5065, 4
    %v5214 = vpop.permute.xlu0 %5213
    %5215 = vrot.lane.b32.xlu0 %v5067, 4
    %v5216 = vpop.permute.xlu0 %5215
    %5217 = vrot.lane.b32.xlu0 %v5070, 4
    %v5218 = vpop.permute.xlu0 %5217
    %5219 = vrot.lane.b32.xlu0 %v5072, 4
    %v5220 = vpop.permute.xlu0 %5219
    %5221 = vrot.lane.b32.xlu0 %v5075, 4
    %v5222 = vpop.permute.xlu0 %5221
    %5223 = vrot.lane.b32.xlu0 %v5077, 4
    %v5224 = vpop.permute.xlu0 %5223
    %5225 = vrot.lane.b32.xlu0 %v5080, 4
    %v5226 = vpop.permute.xlu0 %5225
    %5227 = vrot.lane.b32.xlu0 %v5082, 4
    %v5228 = vpop.permute.xlu0 %5227
    %5229 = vrot.lane.b32.xlu0 %v5085, 4
    %v5230 = vpop.permute.xlu0 %5229
    %5231 = vrot.lane.b32.xlu0 %v5087, 4
    %v5232 = vpop.permute.xlu0 %5231
    %5233 = vrot.lane.b32.xlu0 %v5090, 4
    %v5234 = vpop.permute.xlu0 %5233
    %5235 = vrot.lane.b32.xlu0 %v5092, 4
    %v5236 = vpop.permute.xlu0 %5235
    %5237 = vrot.lane.b32.xlu0 %v5095, 4
    %v5238 = vpop.permute.xlu0 %5237
    %5239 = vrot.lane.b32.xlu0 %v5097, 4
    %v5240 = vpop.permute.xlu0 %5239
    %5241 = vrot.lane.b32.xlu0 %v5100, 4
    %v5242 = vpop.permute.xlu0 %5241
    %5243 = vrot.lane.b32.xlu0 %v5102, 4
    %v5244 = vpop.permute.xlu0 %5243
    %5245 = vrot.lane.b32.xlu0 %v5105, 4
    %v5246 = vpop.permute.xlu0 %5245
    %5247 = vrot.lane.b32.xlu0 %v5107, 4
    %v5248 = vpop.permute.xlu0 %5247
    %5249 = vrot.lane.b32.xlu0 %v5110, 4
    %v5250 = vpop.permute.xlu0 %5249
    %5251 = vrot.lane.b32.xlu0 %v5112, 4
    %v5252 = vpop.permute.xlu0 %5251
    %5253 = vrot.lane.b32.xlu0 %v5115, 4
    %v5254 = vpop.permute.xlu0 %5253
    %5255 = vrot.lane.b32.xlu0 %v5117, 4
    %v5256 = vpop.permute.xlu0 %5255
    %5257 = vrot.lane.b32.xlu0 %v5120, 4
    %v5258 = vpop.permute.xlu0 %5257
    %5259 = vrot.lane.b32.xlu0 %v5122, 4
    %v5260 = vpop.permute.xlu0 %5259
    %5261 = vrot.lane.b32.xlu0 %v5125, 4
    %v5262 = vpop.permute.xlu0 %5261
    %5263 = vrot.lane.b32.xlu0 %v5127, 4
    %v5264 = vpop.permute.xlu0 %5263
    %5265 = vrot.lane.b32.xlu0 %v5130, 4
    %v5266 = vpop.permute.xlu0 %5265
    %5267 = vrot.lane.b32.xlu0 %v5132, 4
    %v5268 = vpop.permute.xlu0 %5267
    %5269 = vrot.lane.b32.xlu0 %v5135, 4
    %v5270 = vpop.permute.xlu0 %5269
    %5271 = vrot.lane.b32.xlu0 %v5137, 4
    %v5272 = vpop.permute.xlu0 %5271
    %5273 = vrot.lane.b32.xlu0 %v5140, 4
    %v5274 = vpop.permute.xlu0 %5273
    %5275 = vrot.lane.b32.xlu0 %v5142, 4
    %v5276 = vpop.permute.xlu0 %5275
    %5277 = vrot.lane.b32.xlu0 %v5145, 4
    %v5278 = vpop.permute.xlu0 %5277
    %5279 = vrot.lane.b32.xlu0 %v5147, 4
    %v5280 = vpop.permute.xlu0 %5279
    %5281 = vrot.lane.b32.xlu0 %v5150, 4
    %v5282 = vpop.permute.xlu0 %5281
    %5283 = vrot.lane.b32.xlu0 %v5152, 4
    %v5284 = vpop.permute.xlu0 %5283
    %5285 = vrot.lane.b32.xlu0 %v5155, 4
    %v5286 = vpop.permute.xlu0 %5285
    %5287 = vrot.lane.b32.xlu0 %v5157, 4
    %v5288 = vpop.permute.xlu0 %5287
    %5289 = vrot.lane.b32.xlu0 %v5160, 4
    %v5290 = vpop.permute.xlu0 %5289
    %5291 = vrot.lane.b32.xlu0 %v5162, 4
    %v5292 = vpop.permute.xlu0 %5291
    %5293 = vrot.lane.b32.xlu0 %v5165, 4
    %v5294 = vpop.permute.xlu0 %5293
    %5295 = vrot.lane.b32.xlu0 %v5167, 4
    %v5296 = vpop.permute.xlu0 %5295
    %5297 = vrot.lane.b32.xlu0 %v5170, 4
    %v5298 = vpop.permute.xlu0 %5297
    %5299 = vrot.lane.b32.xlu0 %v5172, 4
    %v5300 = vpop.permute.xlu0 %5299
    %5301 = vrot.lane.b32.xlu0 %v5175, 4
    %v5302 = vpop.permute.xlu0 %5301
    %5303 = vrot.lane.b32.xlu0 %v5177, 4
    %v5304 = vpop.permute.xlu0 %5303
    %5305 = vrot.lane.b32.xlu0 %v5180, 4
    %v5306 = vpop.permute.xlu0 %5305
    %5307 = vrot.lane.b32.xlu0 %v5182, 4
    %v5308 = vpop.permute.xlu0 %5307
    %5309 = vrot.lane.b32.xlu0 %v5185, 4
    %v5310 = vpop.permute.xlu0 %5309
    %5311 = vrot.lane.b32.xlu0 %v5187, 4
    %v5312 = vpop.permute.xlu0 %5311
    %5313 = vrot.lane.b32.xlu0 %v5190, 4
    %v5314 = vpop.permute.xlu0 %5313
    %5315 = vrot.lane.b32.xlu0 %v5192, 4
    %v5316 = vpop.permute.xlu0 %5315
    %v5379 = vrot.slane %v4919, 2
    %v5380 = vrot.slane %v4731, 2
    %v5381 = vsel %vm1607, %v5379, %v5380
    %v5382 = vrot.slane %v4951, 2
    %v5383 = vsel %vm1607, %v5380, %v5382
    %v5384 = vrot.slane %v4920, 2
    %v5385 = vrot.slane %v4734, 2
    %v5386 = vsel %vm1607, %v5384, %v5385
    %v5387 = vrot.slane %v4952, 2
    %v5388 = vsel %vm1607, %v5385, %v5387
    %v5389 = vrot.slane %v4921, 2
    %v5390 = vrot.slane %v4737, 2
    %v5391 = vsel %vm1607, %v5389, %v5390
    %v5392 = vrot.slane %v4953, 2
    %v5393 = vsel %vm1607, %v5390, %v5392
    %v5394 = vrot.slane %v4922, 2
    %v5395 = vrot.slane %v4740, 2
    %v5396 = vsel %vm1607, %v5394, %v5395
    %v5397 = vrot.slane %v4954, 2
    %v5398 = vsel %vm1607, %v5395, %v5397
    %v5399 = vrot.slane %v4923, 2
    %v5400 = vrot.slane %v4743, 2
    %v5401 = vsel %vm1607, %v5399, %v5400
    %v5402 = vrot.slane %v4955, 2
    %v5403 = vsel %vm1607, %v5400, %v5402
    %v5404 = vrot.slane %v4924, 2
    %v5405 = vrot.slane %v4746, 2
    %v5406 = vsel %vm1607, %v5404, %v5405
    %v5407 = vrot.slane %v4956, 2
    %v5408 = vsel %vm1607, %v5405, %v5407
    %v5409 = vrot.slane %v4925, 2
    %v5410 = vrot.slane %v4749, 2
    %v5411 = vsel %vm1607, %v5409, %v5410
    %v5412 = vrot.slane %v4957, 2
    %v5413 = vsel %vm1607, %v5410, %v5412
    %v5414 = vrot.slane %v4926, 2
    %v5415 = vrot.slane %v4752, 2
    %v5416 = vsel %vm1607, %v5414, %v5415
    %v5417 = vrot.slane %v4958, 2
    %v5418 = vsel %vm1607, %v5415, %v5417
    %v5419 = vrot.slane %v4927, 2
    %v5420 = vrot.slane %v4755, 2
    %v5421 = vsel %vm1607, %v5419, %v5420
    %v5422 = vrot.slane %v4959, 2
    %v5423 = vsel %vm1607, %v5420, %v5422
    %v5424 = vrot.slane %v4928, 2
    %v5425 = vrot.slane %v4758, 2
    %v5426 = vsel %vm1607, %v5424, %v5425
    %v5427 = vrot.slane %v4960, 2
    %v5428 = vsel %vm1607, %v5425, %v5427
    %v5429 = vrot.slane %v4929, 2
    %v5430 = vrot.slane %v4761, 2
    %v5431 = vsel %vm1607, %v5429, %v5430
    %v5432 = vrot.slane %v4961, 2
    %v5433 = vsel %vm1607, %v5430, %v5432
    %v5434 = vrot.slane %v4930, 2
    %v5435 = vrot.slane %v4764, 2
    %v5436 = vsel %vm1607, %v5434, %v5435
    %v5437 = vrot.slane %v4962, 2
    %v5438 = vsel %vm1607, %v5435, %v5437
    %v5439 = vrot.slane %v4931, 2
    %v5440 = vrot.slane %v4767, 2
    %v5441 = vsel %vm1607, %v5439, %v5440
    %v5442 = vrot.slane %v4963, 2
    %v5443 = vsel %vm1607, %v5440, %v5442
    %v5444 = vrot.slane %v4932, 2
    %v5445 = vrot.slane %v4770, 2
    %v5446 = vsel %vm1607, %v5444, %v5445
    %v5447 = vrot.slane %v4964, 2
    %v5448 = vsel %vm1607, %v5445, %v5447
    %v5449 = vrot.slane %v4933, 2
    %v5450 = vrot.slane %v4773, 2
    %v5451 = vsel %vm1607, %v5449, %v5450
    %v5452 = vrot.slane %v4965, 2
    %v5453 = vsel %vm1607, %v5450, %v5452
    %v5454 = vrot.slane %v4935, 2
    %v5455 = vrot.slane %v4779, 2
    %v5456 = vsel %vm1607, %v5454, %v5455
    %v5457 = vrot.slane %v4967, 2
    %v5458 = vsel %vm1607, %v5455, %v5457
    %v5459 = vrot.slane %v4936, 2
    %v5460 = vrot.slane %v4782, 2
    %v5461 = vsel %vm1607, %v5459, %v5460
    %v5462 = vrot.slane %v4968, 2
    %v5463 = vsel %vm1607, %v5460, %v5462
    %v5464 = vrot.slane %v4937, 2
    %v5465 = vrot.slane %v4785, 2
    %v5466 = vsel %vm1607, %v5464, %v5465
    %v5467 = vrot.slane %v4969, 2
    %v5468 = vsel %vm1607, %v5465, %v5467
    %v5469 = vrot.slane %v4938, 2
    %v5470 = vrot.slane %v4788, 2
    %v5471 = vsel %vm1607, %v5469, %v5470
    %v5472 = vrot.slane %v4970, 2
    %v5473 = vsel %vm1607, %v5470, %v5472
    %v5474 = vrot.slane %v4939, 2
    %v5475 = vrot.slane %v4791, 2
    %v5476 = vsel %vm1607, %v5474, %v5475
    %v5477 = vrot.slane %v4971, 2
    %v5478 = vsel %vm1607, %v5475, %v5477
    %v5479 = vrot.slane %v4940, 2
    %v5480 = vrot.slane %v4794, 2
    %v5481 = vsel %vm1607, %v5479, %v5480
    %v5482 = vrot.slane %v4972, 2
    %v5483 = vsel %vm1607, %v5480, %v5482
    %v5484 = vrot.slane %v4941, 2
    %v5485 = vrot.slane %v4797, 2
    %v5486 = vsel %vm1607, %v5484, %v5485
    %v5487 = vrot.slane %v4973, 2
    %v5488 = vsel %vm1607, %v5485, %v5487
    %v5489 = vrot.slane %v4942, 2
    %v5490 = vrot.slane %v4800, 2
    %v5491 = vsel %vm1607, %v5489, %v5490
    %v5492 = vrot.slane %v4974, 2
    %v5493 = vsel %vm1607, %v5490, %v5492
    %v5494 = vrot.slane %v4943, 2
    %v5495 = vrot.slane %v4803, 2
    %v5496 = vsel %vm1607, %v5494, %v5495
    %v5497 = vrot.slane %v4975, 2
    %v5498 = vsel %vm1607, %v5495, %v5497
    %v5499 = vrot.slane %v4944, 2
    %v5500 = vrot.slane %v4806, 2
    %v5501 = vsel %vm1607, %v5499, %v5500
    %v5502 = vrot.slane %v4976, 2
    %v5503 = vsel %vm1607, %v5500, %v5502
    %v5504 = vrot.slane %v4945, 2
    %v5505 = vrot.slane %v4809, 2
    %v5506 = vsel %vm1607, %v5504, %v5505
    %v5507 = vrot.slane %v4977, 2
    %v5508 = vsel %vm1607, %v5505, %v5507
    %v5509 = vrot.slane %v4946, 2
    %v5510 = vrot.slane %v4812, 2
    %v5511 = vsel %vm1607, %v5509, %v5510
    %v5512 = vrot.slane %v4978, 2
    %v5513 = vsel %vm1607, %v5510, %v5512
    %v5514 = vrot.slane %v4947, 2
    %v5515 = vrot.slane %v4815, 2
    %v5516 = vsel %vm1607, %v5514, %v5515
    %v5517 = vrot.slane %v4979, 2
    %v5518 = vsel %vm1607, %v5515, %v5517
    %v5519 = vrot.slane %v4948, 2
    %v5520 = vrot.slane %v4818, 2
    %v5521 = vsel %vm1607, %v5519, %v5520
    %v5522 = vrot.slane %v4980, 2
    %v5523 = vsel %vm1607, %v5520, %v5522
    %v5524 = vrot.slane %v4949, 2
    %v5525 = vrot.slane %v4821, 2
    %v5526 = vsel %vm1607, %v5524, %v5525
    %v5527 = vrot.slane %v4981, 2
    %v5528 = vsel %vm1607, %v5525, %v5527
    %5529 = vrot.lane.b32.xlu0 %v1610, 8
    %v5530 = vpop.permute.xlu0 %5529
    %5531 = vrot.lane.b32.xlu0 %v1612, 8
    %v5532 = vpop.permute.xlu0 %5531
    %5533 = vrot.lane.b32.xlu0 %v5381, 8
    %v5534 = vpop.permute.xlu0 %5533
    %5535 = vrot.lane.b32.xlu0 %v5383, 8
    %v5536 = vpop.permute.xlu0 %5535
    %5537 = vrot.lane.b32.xlu0 %v5386, 8
    %v5538 = vpop.permute.xlu0 %5537
    %5539 = vrot.lane.b32.xlu0 %v5388, 8
    %v5540 = vpop.permute.xlu0 %5539
    %5541 = vrot.lane.b32.xlu0 %v5391, 8
    %v5542 = vpop.permute.xlu0 %5541
    %5543 = vrot.lane.b32.xlu0 %v5393, 8
    %v5544 = vpop.permute.xlu0 %5543
    %5545 = vrot.lane.b32.xlu0 %v5396, 8
    %v5546 = vpop.permute.xlu0 %5545
    %5547 = vrot.lane.b32.xlu0 %v5398, 8
    %v5548 = vpop.permute.xlu0 %5547
    %5549 = vrot.lane.b32.xlu0 %v5401, 8
    %v5550 = vpop.permute.xlu0 %5549
    %5551 = vrot.lane.b32.xlu0 %v5403, 8
    %v5552 = vpop.permute.xlu0 %5551
    %5553 = vrot.lane.b32.xlu0 %v5406, 8
    %v5554 = vpop.permute.xlu0 %5553
    %5555 = vrot.lane.b32.xlu0 %v5408, 8
    %v5556 = vpop.permute.xlu0 %5555
    %5557 = vrot.lane.b32.xlu0 %v5411, 8
    %v5558 = vpop.permute.xlu0 %5557
    %5559 = vrot.lane.b32.xlu0 %v5413, 8
    %v5560 = vpop.permute.xlu0 %5559
    %5561 = vrot.lane.b32.xlu0 %v5416, 8
    %v5562 = vpop.permute.xlu0 %5561
    %5563 = vrot.lane.b32.xlu0 %v5418, 8
    %v5564 = vpop.permute.xlu0 %5563
    %5565 = vrot.lane.b32.xlu0 %v5421, 8
    %v5566 = vpop.permute.xlu0 %5565
    %5567 = vrot.lane.b32.xlu0 %v5423, 8
    %v5568 = vpop.permute.xlu0 %5567
    %5569 = vrot.lane.b32.xlu0 %v5426, 8
    %v5570 = vpop.permute.xlu0 %5569
    %5571 = vrot.lane.b32.xlu0 %v5428, 8
    %v5572 = vpop.permute.xlu0 %5571
    %5573 = vrot.lane.b32.xlu0 %v5431, 8
    %v5574 = vpop.permute.xlu0 %5573
    %5575 = vrot.lane.b32.xlu0 %v5433, 8
    %v5576 = vpop.permute.xlu0 %5575
    %5577 = vrot.lane.b32.xlu0 %v5436, 8
    %v5578 = vpop.permute.xlu0 %5577
    %5579 = vrot.lane.b32.xlu0 %v5438, 8
    %v5580 = vpop.permute.xlu0 %5579
    %5581 = vrot.lane.b32.xlu0 %v5441, 8
    %v5582 = vpop.permute.xlu0 %5581
    %5583 = vrot.lane.b32.xlu0 %v5443, 8
    %v5584 = vpop.permute.xlu0 %5583
    %5585 = vrot.lane.b32.xlu0 %v5446, 8
    %v5586 = vpop.permute.xlu0 %5585
    %5587 = vrot.lane.b32.xlu0 %v5448, 8
    %v5588 = vpop.permute.xlu0 %5587
    %5589 = vrot.lane.b32.xlu0 %v5451, 8
    %v5590 = vpop.permute.xlu0 %5589
    %5591 = vrot.lane.b32.xlu0 %v5453, 8
    %v5592 = vpop.permute.xlu0 %5591
    %5593 = vrot.lane.b32.xlu0 %v5456, 8
    %v5594 = vpop.permute.xlu0 %5593
    %5595 = vrot.lane.b32.xlu0 %v5458, 8
    %v5596 = vpop.permute.xlu0 %5595
    %5597 = vrot.lane.b32.xlu0 %v5461, 8
    %v5598 = vpop.permute.xlu0 %5597
    %5599 = vrot.lane.b32.xlu0 %v5463, 8
    %v5600 = vpop.permute.xlu0 %5599
    %5601 = vrot.lane.b32.xlu0 %v5466, 8
    %v5602 = vpop.permute.xlu0 %5601
    %5603 = vrot.lane.b32.xlu0 %v5468, 8
    %v5604 = vpop.permute.xlu0 %5603
    %5605 = vrot.lane.b32.xlu0 %v5471, 8
    %v5606 = vpop.permute.xlu0 %5605
    %5607 = vrot.lane.b32.xlu0 %v5473, 8
    %v5608 = vpop.permute.xlu0 %5607
    %5609 = vrot.lane.b32.xlu0 %v5476, 8
    %v5610 = vpop.permute.xlu0 %5609
    %5611 = vrot.lane.b32.xlu0 %v5478, 8
    %v5612 = vpop.permute.xlu0 %5611
    %5613 = vrot.lane.b32.xlu0 %v5481, 8
    %v5614 = vpop.permute.xlu0 %5613
    %5615 = vrot.lane.b32.xlu0 %v5483, 8
    %v5616 = vpop.permute.xlu0 %5615
    %5617 = vrot.lane.b32.xlu0 %v5486, 8
    %v5618 = vpop.permute.xlu0 %5617
    %5619 = vrot.lane.b32.xlu0 %v5488, 8
    %v5620 = vpop.permute.xlu0 %5619
    %5621 = vrot.lane.b32.xlu0 %v5491, 8
    %v5622 = vpop.permute.xlu0 %5621
    %5623 = vrot.lane.b32.xlu0 %v5493, 8
    %v5624 = vpop.permute.xlu0 %5623
    %5625 = vrot.lane.b32.xlu0 %v5496, 8
    %v5626 = vpop.permute.xlu0 %5625
    %5627 = vrot.lane.b32.xlu0 %v5498, 8
    %v5628 = vpop.permute.xlu0 %5627
    %5629 = vrot.lane.b32.xlu0 %v5501, 8
    %v5630 = vpop.permute.xlu0 %5629
    %5631 = vrot.lane.b32.xlu0 %v5503, 8
    %v5632 = vpop.permute.xlu0 %5631
    %5633 = vrot.lane.b32.xlu0 %v5506, 8
    %v5634 = vpop.permute.xlu0 %5633
    %5635 = vrot.lane.b32.xlu0 %v5508, 8
    %v5636 = vpop.permute.xlu0 %5635
    %5637 = vrot.lane.b32.xlu0 %v5511, 8
    %v5638 = vpop.permute.xlu0 %5637
    %5639 = vrot.lane.b32.xlu0 %v5513, 8
    %v5640 = vpop.permute.xlu0 %5639
    %5641 = vrot.lane.b32.xlu0 %v5516, 8
    %v5642 = vpop.permute.xlu0 %5641
    %5643 = vrot.lane.b32.xlu0 %v5518, 8
    %v5644 = vpop.permute.xlu0 %5643
    %5645 = vrot.lane.b32.xlu0 %v5521, 8
    %v5646 = vpop.permute.xlu0 %5645
    %5647 = vrot.lane.b32.xlu0 %v5523, 8
    %v5648 = vpop.permute.xlu0 %5647
    %5649 = vrot.lane.b32.xlu0 %v5526, 8
    %v5650 = vpop.permute.xlu0 %5649
    %5651 = vrot.lane.b32.xlu0 %v5528, 8
    %v5652 = vpop.permute.xlu0 %5651
    %5717 = vrot.lane.b32.xlu0 %v4919, 12
    %v5718 = vpop.permute.xlu0 %5717
    %5719 = vrot.lane.b32.xlu0 %v4731, 12
    %v5720 = vpop.permute.xlu0 %5719
    %5721 = vrot.lane.b32.xlu0 %v4920, 12
    %v5722 = vpop.permute.xlu0 %5721
    %5723 = vrot.lane.b32.xlu0 %v4734, 12
    %v5724 = vpop.permute.xlu0 %5723
    %5725 = vrot.lane.b32.xlu0 %v4921, 12
    %v5726 = vpop.permute.xlu0 %5725
    %5727 = vrot.lane.b32.xlu0 %v4737, 12
    %v5728 = vpop.permute.xlu0 %5727
    %5729 = vrot.lane.b32.xlu0 %v4922, 12
    %v5730 = vpop.permute.xlu0 %5729
    %5731 = vrot.lane.b32.xlu0 %v4740, 12
    %v5732 = vpop.permute.xlu0 %5731
    %5733 = vrot.lane.b32.xlu0 %v4923, 12
    %v5734 = vpop.permute.xlu0 %5733
    %5735 = vrot.lane.b32.xlu0 %v4743, 12
    %v5736 = vpop.permute.xlu0 %5735
    %5737 = vrot.lane.b32.xlu0 %v4924, 12
    %v5738 = vpop.permute.xlu0 %5737
    %5739 = vrot.lane.b32.xlu0 %v4746, 12
    %v5740 = vpop.permute.xlu0 %5739
    %5741 = vrot.lane.b32.xlu0 %v4925, 12
    %v5742 = vpop.permute.xlu0 %5741
    %5743 = vrot.lane.b32.xlu0 %v4749, 12
    %v5744 = vpop.permute.xlu0 %5743
    %5745 = vrot.lane.b32.xlu0 %v4926, 12
    %v5746 = vpop.permute.xlu0 %5745
    %5747 = vrot.lane.b32.xlu0 %v4752, 12
    %v5748 = vpop.permute.xlu0 %5747
    %5749 = vrot.lane.b32.xlu0 %v4927, 12
    %v5750 = vpop.permute.xlu0 %5749
    %5751 = vrot.lane.b32.xlu0 %v4755, 12
    %v5752 = vpop.permute.xlu0 %5751
    %5753 = vrot.lane.b32.xlu0 %v4928, 12
    %v5754 = vpop.permute.xlu0 %5753
    %5755 = vrot.lane.b32.xlu0 %v4758, 12
    %v5756 = vpop.permute.xlu0 %5755
    %5757 = vrot.lane.b32.xlu0 %v4929, 12
    %v5758 = vpop.permute.xlu0 %5757
    %5759 = vrot.lane.b32.xlu0 %v4761, 12
    %v5760 = vpop.permute.xlu0 %5759
    %5761 = vrot.lane.b32.xlu0 %v4930, 12
    %v5762 = vpop.permute.xlu0 %5761
    %5763 = vrot.lane.b32.xlu0 %v4764, 12
    %v5764 = vpop.permute.xlu0 %5763
    %5765 = vrot.lane.b32.xlu0 %v4931, 12
    %v5766 = vpop.permute.xlu0 %5765
    %5767 = vrot.lane.b32.xlu0 %v4767, 12
    %v5768 = vpop.permute.xlu0 %5767
    %5769 = vrot.lane.b32.xlu0 %v4932, 12
    %v5770 = vpop.permute.xlu0 %5769
    %5771 = vrot.lane.b32.xlu0 %v4770, 12
    %v5772 = vpop.permute.xlu0 %5771
    %5773 = vrot.lane.b32.xlu0 %v4933, 12
    %v5774 = vpop.permute.xlu0 %5773
    %5775 = vrot.lane.b32.xlu0 %v4773, 12
    %v5776 = vpop.permute.xlu0 %5775
    %5777 = vrot.lane.b32.xlu0 %v4934, 12
    %v5778 = vpop.permute.xlu0 %5777
    %5779 = vrot.lane.b32.xlu0 %v4776, 12
    %v5780 = vpop.permute.xlu0 %5779
    %5781 = vrot.lane.b32.xlu0 %v4935, 12
    %v5782 = vpop.permute.xlu0 %5781
    %5783 = vrot.lane.b32.xlu0 %v4779, 12
    %v5784 = vpop.permute.xlu0 %5783
    %5785 = vrot.lane.b32.xlu0 %v4936, 12
    %v5786 = vpop.permute.xlu0 %5785
    %5787 = vrot.lane.b32.xlu0 %v4782, 12
    %v5788 = vpop.permute.xlu0 %5787
    %5789 = vrot.lane.b32.xlu0 %v4937, 12
    %v5790 = vpop.permute.xlu0 %5789
    %5791 = vrot.lane.b32.xlu0 %v4785, 12
    %v5792 = vpop.permute.xlu0 %5791
    %5793 = vrot.lane.b32.xlu0 %v4938, 12
    %v5794 = vpop.permute.xlu0 %5793
    %5795 = vrot.lane.b32.xlu0 %v4788, 12
    %v5796 = vpop.permute.xlu0 %5795
    %5797 = vrot.lane.b32.xlu0 %v4939, 12
    %v5798 = vpop.permute.xlu0 %5797
    %5799 = vrot.lane.b32.xlu0 %v4791, 12
    %v5800 = vpop.permute.xlu0 %5799
    %5801 = vrot.lane.b32.xlu0 %v4940, 12
    %v5802 = vpop.permute.xlu0 %5801
    %5803 = vrot.lane.b32.xlu0 %v4794, 12
    %v5804 = vpop.permute.xlu0 %5803
    %5805 = vrot.lane.b32.xlu0 %v4941, 12
    %v5806 = vpop.permute.xlu0 %5805
    %5807 = vrot.lane.b32.xlu0 %v4797, 12
    %v5808 = vpop.permute.xlu0 %5807
    %5809 = vrot.lane.b32.xlu0 %v4942, 12
    %v5810 = vpop.permute.xlu0 %5809
    %5811 = vrot.lane.b32.xlu0 %v4800, 12
    %v5812 = vpop.permute.xlu0 %5811
    %5813 = vrot.lane.b32.xlu0 %v4943, 12
    %v5814 = vpop.permute.xlu0 %5813
    %5815 = vrot.lane.b32.xlu0 %v4803, 12
    %v5816 = vpop.permute.xlu0 %5815
    %5817 = vrot.lane.b32.xlu0 %v4944, 12
    %v5818 = vpop.permute.xlu0 %5817
    %5819 = vrot.lane.b32.xlu0 %v4806, 12
    %v5820 = vpop.permute.xlu0 %5819
    %5821 = vrot.lane.b32.xlu0 %v4945, 12
    %v5822 = vpop.permute.xlu0 %5821
    %5823 = vrot.lane.b32.xlu0 %v4809, 12
    %v5824 = vpop.permute.xlu0 %5823
    %5825 = vrot.lane.b32.xlu0 %v4946, 12
    %v5826 = vpop.permute.xlu0 %5825
    %5827 = vrot.lane.b32.xlu0 %v4812, 12
    %v5828 = vpop.permute.xlu0 %5827
    %5829 = vrot.lane.b32.xlu0 %v4947, 12
    %v5830 = vpop.permute.xlu0 %5829
    %5831 = vrot.lane.b32.xlu0 %v4815, 12
    %v5832 = vpop.permute.xlu0 %5831
    %5833 = vrot.lane.b32.xlu0 %v4948, 12
    %v5834 = vpop.permute.xlu0 %5833
    %5835 = vrot.lane.b32.xlu0 %v4818, 12
    %v5836 = vpop.permute.xlu0 %5835
    %5837 = vrot.lane.b32.xlu0 %v4949, 12
    %v5838 = vpop.permute.xlu0 %5837
    %5839 = vrot.lane.b32.xlu0 %v4821, 12
    %v5840 = vpop.permute.xlu0 %5839
    %5841 = vrot.lane.b32.xlu0 %v4950, 12
    %v5842 = vpop.permute.xlu0 %5841
    %5843 = vrot.lane.b32.xlu0 %v4824, 12
    %v5844 = vpop.permute.xlu0 %5843
    %v5911 = vrot.slane %v4934, 1
    %v5912 = vrot.slane %v4776, 1
    %v5913 = vsel %vm1265, %v5911, %v5912
    %v5914 = vrot.slane %v4966, 1
    %v5915 = vsel %vm1265, %v5912, %v5914
    %v5916 = vrot.slane %v4950, 1
    %v5917 = vrot.slane %v4824, 1
    %v5918 = vsel %vm1265, %v5916, %v5917
    %v5919 = vrot.slane %v4982, 1
    %v5920 = vsel %vm1265, %v5917, %v5919
    %5921 = vrot.lane.b32.xlu0 %v5045, 16
    %v5922 = vpop.permute.xlu0 %5921
    %5923 = vrot.lane.b32.xlu0 %v5047, 16
    %v5924 = vpop.permute.xlu0 %5923
    %5925 = vrot.lane.b32.xlu0 %v5050, 16
    %v5926 = vpop.permute.xlu0 %5925
    %5927 = vrot.lane.b32.xlu0 %v5052, 16
    %v5928 = vpop.permute.xlu0 %5927
    %5929 = vrot.lane.b32.xlu0 %v5055, 16
    %v5930 = vpop.permute.xlu0 %5929
    %5931 = vrot.lane.b32.xlu0 %v5057, 16
    %v5932 = vpop.permute.xlu0 %5931
    %5933 = vrot.lane.b32.xlu0 %v5060, 16
    %v5934 = vpop.permute.xlu0 %5933
    %5935 = vrot.lane.b32.xlu0 %v5062, 16
    %v5936 = vpop.permute.xlu0 %5935
    %5937 = vrot.lane.b32.xlu0 %v5065, 16
    %v5938 = vpop.permute.xlu0 %5937
    %5939 = vrot.lane.b32.xlu0 %v5067, 16
    %v5940 = vpop.permute.xlu0 %5939
    %5941 = vrot.lane.b32.xlu0 %v5070, 16
    %v5942 = vpop.permute.xlu0 %5941
    %5943 = vrot.lane.b32.xlu0 %v5072, 16
    %v5944 = vpop.permute.xlu0 %5943
    %5945 = vrot.lane.b32.xlu0 %v5075, 16
    %v5946 = vpop.permute.xlu0 %5945
    %5947 = vrot.lane.b32.xlu0 %v5077, 16
    %v5948 = vpop.permute.xlu0 %5947
    %5949 = vrot.lane.b32.xlu0 %v5080, 16
    %v5950 = vpop.permute.xlu0 %5949
    %5951 = vrot.lane.b32.xlu0 %v5082, 16
    %v5952 = vpop.permute.xlu0 %5951
    %5953 = vrot.lane.b32.xlu0 %v5085, 16
    %v5954 = vpop.permute.xlu0 %5953
    %5955 = vrot.lane.b32.xlu0 %v5087, 16
    %v5956 = vpop.permute.xlu0 %5955
    %5957 = vrot.lane.b32.xlu0 %v5090, 16
    %v5958 = vpop.permute.xlu0 %5957
    %5959 = vrot.lane.b32.xlu0 %v5092, 16
    %v5960 = vpop.permute.xlu0 %5959
    %5961 = vrot.lane.b32.xlu0 %v5095, 16
    %v5962 = vpop.permute.xlu0 %5961
    %5963 = vrot.lane.b32.xlu0 %v5097, 16
    %v5964 = vpop.permute.xlu0 %5963
    %5965 = vrot.lane.b32.xlu0 %v5100, 16
    %v5966 = vpop.permute.xlu0 %5965
    %5967 = vrot.lane.b32.xlu0 %v5102, 16
    %v5968 = vpop.permute.xlu0 %5967
    %5969 = vrot.lane.b32.xlu0 %v5105, 16
    %v5970 = vpop.permute.xlu0 %5969
    %5971 = vrot.lane.b32.xlu0 %v5107, 16
    %v5972 = vpop.permute.xlu0 %5971
    %5973 = vrot.lane.b32.xlu0 %v5110, 16
    %v5974 = vpop.permute.xlu0 %5973
    %5975 = vrot.lane.b32.xlu0 %v5112, 16
    %v5976 = vpop.permute.xlu0 %5975
    %5977 = vrot.lane.b32.xlu0 %v5115, 16
    %v5978 = vpop.permute.xlu0 %5977
    %5979 = vrot.lane.b32.xlu0 %v5117, 16
    %v5980 = vpop.permute.xlu0 %5979
    %5981 = vrot.lane.b32.xlu0 %v5913, 16
    %v5982 = vpop.permute.xlu0 %5981
    %5983 = vrot.lane.b32.xlu0 %v5915, 16
    %v5984 = vpop.permute.xlu0 %5983
    %5985 = vrot.lane.b32.xlu0 %v5120, 16
    %v5986 = vpop.permute.xlu0 %5985
    %5987 = vrot.lane.b32.xlu0 %v5122, 16
    %v5988 = vpop.permute.xlu0 %5987
    %5989 = vrot.lane.b32.xlu0 %v5125, 16
    %v5990 = vpop.permute.xlu0 %5989
    %5991 = vrot.lane.b32.xlu0 %v5127, 16
    %v5992 = vpop.permute.xlu0 %5991
    %5993 = vrot.lane.b32.xlu0 %v5130, 16
    %v5994 = vpop.permute.xlu0 %5993
    %5995 = vrot.lane.b32.xlu0 %v5132, 16
    %v5996 = vpop.permute.xlu0 %5995
    %5997 = vrot.lane.b32.xlu0 %v5135, 16
    %v5998 = vpop.permute.xlu0 %5997
    %5999 = vrot.lane.b32.xlu0 %v5137, 16
    %v6000 = vpop.permute.xlu0 %5999
    %6001 = vrot.lane.b32.xlu0 %v5140, 16
    %v6002 = vpop.permute.xlu0 %6001
    %6003 = vrot.lane.b32.xlu0 %v5142, 16
    %v6004 = vpop.permute.xlu0 %6003
    %6005 = vrot.lane.b32.xlu0 %v5145, 16
    %v6006 = vpop.permute.xlu0 %6005
    %6007 = vrot.lane.b32.xlu0 %v5147, 16
    %v6008 = vpop.permute.xlu0 %6007
    %6009 = vrot.lane.b32.xlu0 %v5150, 16
    %v6010 = vpop.permute.xlu0 %6009
    %6011 = vrot.lane.b32.xlu0 %v5152, 16
    %v6012 = vpop.permute.xlu0 %6011
    %6013 = vrot.lane.b32.xlu0 %v5155, 16
    %v6014 = vpop.permute.xlu0 %6013
    %6015 = vrot.lane.b32.xlu0 %v5157, 16
    %v6016 = vpop.permute.xlu0 %6015
    %6017 = vrot.lane.b32.xlu0 %v5160, 16
    %v6018 = vpop.permute.xlu0 %6017
    %6019 = vrot.lane.b32.xlu0 %v5162, 16
    %v6020 = vpop.permute.xlu0 %6019
    %6021 = vrot.lane.b32.xlu0 %v5165, 16
    %v6022 = vpop.permute.xlu0 %6021
    %6023 = vrot.lane.b32.xlu0 %v5167, 16
    %v6024 = vpop.permute.xlu0 %6023
    %6025 = vrot.lane.b32.xlu0 %v5170, 16
    %v6026 = vpop.permute.xlu0 %6025
    %6027 = vrot.lane.b32.xlu0 %v5172, 16
    %v6028 = vpop.permute.xlu0 %6027
    %6029 = vrot.lane.b32.xlu0 %v5175, 16
    %v6030 = vpop.permute.xlu0 %6029
    %6031 = vrot.lane.b32.xlu0 %v5177, 16
    %v6032 = vpop.permute.xlu0 %6031
    %6033 = vrot.lane.b32.xlu0 %v5180, 16
    %v6034 = vpop.permute.xlu0 %6033
    %6035 = vrot.lane.b32.xlu0 %v5182, 16
    %v6036 = vpop.permute.xlu0 %6035
    %6037 = vrot.lane.b32.xlu0 %v5185, 16
    %v6038 = vpop.permute.xlu0 %6037
    %6039 = vrot.lane.b32.xlu0 %v5187, 16
    %v6040 = vpop.permute.xlu0 %6039
    %6041 = vrot.lane.b32.xlu0 %v5190, 16
    %v6042 = vpop.permute.xlu0 %6041
    %6043 = vrot.lane.b32.xlu0 %v5192, 16
    %v6044 = vpop.permute.xlu0 %6043
    %6045 = vrot.lane.b32.xlu0 %v5918, 16
    %v6046 = vpop.permute.xlu0 %6045
    %6047 = vrot.lane.b32.xlu0 %v5920, 16
    %v6048 = vpop.permute.xlu0 %6047
    %v6113 = vrot.slane %v4934, 2
    %v6114 = vrot.slane %v4776, 2
    %v6115 = vsel %vm1607, %v6113, %v6114
    %v6116 = vrot.slane %v4966, 2
    %v6117 = vsel %vm1607, %v6114, %v6116
    %v6118 = vrot.slane %v4950, 2
    %v6119 = vrot.slane %v4824, 2
    %v6120 = vsel %vm1607, %v6118, %v6119
    %v6121 = vrot.slane %v4982, 2
    %v6122 = vsel %vm1607, %v6119, %v6121
    %6123 = vrot.lane.b32.xlu0 %v5381, 20
    %v6124 = vpop.permute.xlu0 %6123
    %6125 = vrot.lane.b32.xlu0 %v5383, 20
    %v6126 = vpop.permute.xlu0 %6125
    %6127 = vrot.lane.b32.xlu0 %v5386, 20
    %v6128 = vpop.permute.xlu0 %6127
    %6129 = vrot.lane.b32.xlu0 %v5388, 20
    %v6130 = vpop.permute.xlu0 %6129
    %6131 = vrot.lane.b32.xlu0 %v5391, 20
    %v6132 = vpop.permute.xlu0 %6131
    %6133 = vrot.lane.b32.xlu0 %v5393, 20
    %v6134 = vpop.permute.xlu0 %6133
    %6135 = vrot.lane.b32.xlu0 %v5396, 20
    %v6136 = vpop.permute.xlu0 %6135
    %6137 = vrot.lane.b32.xlu0 %v5398, 20
    %v6138 = vpop.permute.xlu0 %6137
    %6139 = vrot.lane.b32.xlu0 %v5401, 20
    %v6140 = vpop.permute.xlu0 %6139
    %6141 = vrot.lane.b32.xlu0 %v5403, 20
    %v6142 = vpop.permute.xlu0 %6141
    %6143 = vrot.lane.b32.xlu0 %v5406, 20
    %v6144 = vpop.permute.xlu0 %6143
    %6145 = vrot.lane.b32.xlu0 %v5408, 20
    %v6146 = vpop.permute.xlu0 %6145
    %6147 = vrot.lane.b32.xlu0 %v5411, 20
    %v6148 = vpop.permute.xlu0 %6147
    %6149 = vrot.lane.b32.xlu0 %v5413, 20
    %v6150 = vpop.permute.xlu0 %6149
    %6151 = vrot.lane.b32.xlu0 %v5416, 20
    %v6152 = vpop.permute.xlu0 %6151
    %6153 = vrot.lane.b32.xlu0 %v5418, 20
    %v6154 = vpop.permute.xlu0 %6153
    %6155 = vrot.lane.b32.xlu0 %v5421, 20
    %v6156 = vpop.permute.xlu0 %6155
    %6157 = vrot.lane.b32.xlu0 %v5423, 20
    %v6158 = vpop.permute.xlu0 %6157
    %6159 = vrot.lane.b32.xlu0 %v5426, 20
    %v6160 = vpop.permute.xlu0 %6159
    %6161 = vrot.lane.b32.xlu0 %v5428, 20
    %v6162 = vpop.permute.xlu0 %6161
    %6163 = vrot.lane.b32.xlu0 %v5431, 20
    %v6164 = vpop.permute.xlu0 %6163
    %6165 = vrot.lane.b32.xlu0 %v5433, 20
    %v6166 = vpop.permute.xlu0 %6165
    %6167 = vrot.lane.b32.xlu0 %v5436, 20
    %v6168 = vpop.permute.xlu0 %6167
    %6169 = vrot.lane.b32.xlu0 %v5438, 20
    %v6170 = vpop.permute.xlu0 %6169
    %6171 = vrot.lane.b32.xlu0 %v5441, 20
    %v6172 = vpop.permute.xlu0 %6171
    %6173 = vrot.lane.b32.xlu0 %v5443, 20
    %v6174 = vpop.permute.xlu0 %6173
    %6175 = vrot.lane.b32.xlu0 %v5446, 20
    %v6176 = vpop.permute.xlu0 %6175
    %6177 = vrot.lane.b32.xlu0 %v5448, 20
    %v6178 = vpop.permute.xlu0 %6177
    %6179 = vrot.lane.b32.xlu0 %v5451, 20
    %v6180 = vpop.permute.xlu0 %6179
    %6181 = vrot.lane.b32.xlu0 %v5453, 20
    %v6182 = vpop.permute.xlu0 %6181
    %6183 = vrot.lane.b32.xlu0 %v6115, 20
    %v6184 = vpop.permute.xlu0 %6183
    %6185 = vrot.lane.b32.xlu0 %v6117, 20
    %v6186 = vpop.permute.xlu0 %6185
    %6187 = vrot.lane.b32.xlu0 %v5456, 20
    %v6188 = vpop.permute.xlu0 %6187
    %6189 = vrot.lane.b32.xlu0 %v5458, 20
    %v6190 = vpop.permute.xlu0 %6189
    %6191 = vrot.lane.b32.xlu0 %v5461, 20
    %v6192 = vpop.permute.xlu0 %6191
    %6193 = vrot.lane.b32.xlu0 %v5463, 20
    %v6194 = vpop.permute.xlu0 %6193
    %6195 = vrot.lane.b32.xlu0 %v5466, 20
    %v6196 = vpop.permute.xlu0 %6195
    %6197 = vrot.lane.b32.xlu0 %v5468, 20
    %v6198 = vpop.permute.xlu0 %6197
    %6199 = vrot.lane.b32.xlu0 %v5471, 20
    %v6200 = vpop.permute.xlu0 %6199
    %6201 = vrot.lane.b32.xlu0 %v5473, 20
    %v6202 = vpop.permute.xlu0 %6201
    %6203 = vrot.lane.b32.xlu0 %v5476, 20
    %v6204 = vpop.permute.xlu0 %6203
    %6205 = vrot.lane.b32.xlu0 %v5478, 20
    %v6206 = vpop.permute.xlu0 %6205
    %6207 = vrot.lane.b32.xlu0 %v5481, 20
    %v6208 = vpop.permute.xlu0 %6207
    %6209 = vrot.lane.b32.xlu0 %v5483, 20
    %v6210 = vpop.permute.xlu0 %6209
    %6211 = vrot.lane.b32.xlu0 %v5486, 20
    %v6212 = vpop.permute.xlu0 %6211
    %6213 = vrot.lane.b32.xlu0 %v5488, 20
    %v6214 = vpop.permute.xlu0 %6213
    %6215 = vrot.lane.b32.xlu0 %v5491, 20
    %v6216 = vpop.permute.xlu0 %6215
    %6217 = vrot.lane.b32.xlu0 %v5493, 20
    %v6218 = vpop.permute.xlu0 %6217
    %6219 = vrot.lane.b32.xlu0 %v5496, 20
    %v6220 = vpop.permute.xlu0 %6219
    %6221 = vrot.lane.b32.xlu0 %v5498, 20
    %v6222 = vpop.permute.xlu0 %6221
    %6223 = vrot.lane.b32.xlu0 %v5501, 20
    %v6224 = vpop.permute.xlu0 %6223
    %6225 = vrot.lane.b32.xlu0 %v5503, 20
    %v6226 = vpop.permute.xlu0 %6225
    %6227 = vrot.lane.b32.xlu0 %v5506, 20
    %v6228 = vpop.permute.xlu0 %6227
    %6229 = vrot.lane.b32.xlu0 %v5508, 20
    %v6230 = vpop.permute.xlu0 %6229
    %6231 = vrot.lane.b32.xlu0 %v5511, 20
    %v6232 = vpop.permute.xlu0 %6231
    %6233 = vrot.lane.b32.xlu0 %v5513, 20
    %v6234 = vpop.permute.xlu0 %6233
    %6235 = vrot.lane.b32.xlu0 %v5516, 20
    %v6236 = vpop.permute.xlu0 %6235
    %6237 = vrot.lane.b32.xlu0 %v5518, 20
    %v6238 = vpop.permute.xlu0 %6237
    %6239 = vrot.lane.b32.xlu0 %v5521, 20
    %v6240 = vpop.permute.xlu0 %6239
    %6241 = vrot.lane.b32.xlu0 %v5523, 20
    %v6242 = vpop.permute.xlu0 %6241
    %6243 = vrot.lane.b32.xlu0 %v5526, 20
    %v6244 = vpop.permute.xlu0 %6243
    %6245 = vrot.lane.b32.xlu0 %v5528, 20
    %v6246 = vpop.permute.xlu0 %6245
    %6247 = vrot.lane.b32.xlu0 %v6120, 20
    %v6248 = vpop.permute.xlu0 %6247
    %6249 = vrot.lane.b32.xlu0 %v6122, 20
    %v6250 = vpop.permute.xlu0 %6249
    %6315 = vrot.lane.b32.xlu0 %v4920, 24
    %v6316 = vpop.permute.xlu0 %6315
    %6317 = vrot.lane.b32.xlu0 %v4734, 24
    %v6318 = vpop.permute.xlu0 %6317
    %6319 = vrot.lane.b32.xlu0 %v4921, 24
    %v6320 = vpop.permute.xlu0 %6319
    %6321 = vrot.lane.b32.xlu0 %v4737, 24
    %v6322 = vpop.permute.xlu0 %6321
    %6323 = vrot.lane.b32.xlu0 %v4922, 24
    %v6324 = vpop.permute.xlu0 %6323
    %6325 = vrot.lane.b32.xlu0 %v4740, 24
    %v6326 = vpop.permute.xlu0 %6325
    %6327 = vrot.lane.b32.xlu0 %v4923, 24
    %v6328 = vpop.permute.xlu0 %6327
    %6329 = vrot.lane.b32.xlu0 %v4743, 24
    %v6330 = vpop.permute.xlu0 %6329
    %6331 = vrot.lane.b32.xlu0 %v4924, 24
    %v6332 = vpop.permute.xlu0 %6331
    %6333 = vrot.lane.b32.xlu0 %v4746, 24
    %v6334 = vpop.permute.xlu0 %6333
    %6335 = vrot.lane.b32.xlu0 %v4925, 24
    %v6336 = vpop.permute.xlu0 %6335
    %6337 = vrot.lane.b32.xlu0 %v4749, 24
    %v6338 = vpop.permute.xlu0 %6337
    %6339 = vrot.lane.b32.xlu0 %v4926, 24
    %v6340 = vpop.permute.xlu0 %6339
    %6341 = vrot.lane.b32.xlu0 %v4752, 24
    %v6342 = vpop.permute.xlu0 %6341
    %6343 = vrot.lane.b32.xlu0 %v4927, 24
    %v6344 = vpop.permute.xlu0 %6343
    %6345 = vrot.lane.b32.xlu0 %v4755, 24
    %v6346 = vpop.permute.xlu0 %6345
    %6347 = vrot.lane.b32.xlu0 %v4928, 24
    %v6348 = vpop.permute.xlu0 %6347
    %6349 = vrot.lane.b32.xlu0 %v4758, 24
    %v6350 = vpop.permute.xlu0 %6349
    %6351 = vrot.lane.b32.xlu0 %v4929, 24
    %v6352 = vpop.permute.xlu0 %6351
    %6353 = vrot.lane.b32.xlu0 %v4761, 24
    %v6354 = vpop.permute.xlu0 %6353
    %6355 = vrot.lane.b32.xlu0 %v4930, 24
    %v6356 = vpop.permute.xlu0 %6355
    %6357 = vrot.lane.b32.xlu0 %v4764, 24
    %v6358 = vpop.permute.xlu0 %6357
    %6359 = vrot.lane.b32.xlu0 %v4931, 24
    %v6360 = vpop.permute.xlu0 %6359
    %6361 = vrot.lane.b32.xlu0 %v4767, 24
    %v6362 = vpop.permute.xlu0 %6361
    %6363 = vrot.lane.b32.xlu0 %v4932, 24
    %v6364 = vpop.permute.xlu0 %6363
    %6365 = vrot.lane.b32.xlu0 %v4770, 24
    %v6366 = vpop.permute.xlu0 %6365
    %6367 = vrot.lane.b32.xlu0 %v4933, 24
    %v6368 = vpop.permute.xlu0 %6367
    %6369 = vrot.lane.b32.xlu0 %v4773, 24
    %v6370 = vpop.permute.xlu0 %6369
    %6371 = vrot.lane.b32.xlu0 %v4934, 24
    %v6372 = vpop.permute.xlu0 %6371
    %6373 = vrot.lane.b32.xlu0 %v4776, 24
    %v6374 = vpop.permute.xlu0 %6373
    %6375 = vrot.lane.b32.xlu0 %v1137, 24
    %v6376 = vpop.permute.xlu0 %6375
    %6377 = vrot.lane.b32.xlu0 %v944, 24
    %v6378 = vpop.permute.xlu0 %6377
    %6379 = vrot.lane.b32.xlu0 %v4936, 24
    %v6380 = vpop.permute.xlu0 %6379
    %6381 = vrot.lane.b32.xlu0 %v4782, 24
    %v6382 = vpop.permute.xlu0 %6381
    %6383 = vrot.lane.b32.xlu0 %v4937, 24
    %v6384 = vpop.permute.xlu0 %6383
    %6385 = vrot.lane.b32.xlu0 %v4785, 24
    %v6386 = vpop.permute.xlu0 %6385
    %6387 = vrot.lane.b32.xlu0 %v4938, 24
    %v6388 = vpop.permute.xlu0 %6387
    %6389 = vrot.lane.b32.xlu0 %v4788, 24
    %v6390 = vpop.permute.xlu0 %6389
    %6391 = vrot.lane.b32.xlu0 %v4939, 24
    %v6392 = vpop.permute.xlu0 %6391
    %6393 = vrot.lane.b32.xlu0 %v4791, 24
    %v6394 = vpop.permute.xlu0 %6393
    %6395 = vrot.lane.b32.xlu0 %v4940, 24
    %v6396 = vpop.permute.xlu0 %6395
    %6397 = vrot.lane.b32.xlu0 %v4794, 24
    %v6398 = vpop.permute.xlu0 %6397
    %6399 = vrot.lane.b32.xlu0 %v4941, 24
    %v6400 = vpop.permute.xlu0 %6399
    %6401 = vrot.lane.b32.xlu0 %v4797, 24
    %v6402 = vpop.permute.xlu0 %6401
    %6403 = vrot.lane.b32.xlu0 %v4942, 24
    %v6404 = vpop.permute.xlu0 %6403
    %6405 = vrot.lane.b32.xlu0 %v4800, 24
    %v6406 = vpop.permute.xlu0 %6405
    %6407 = vrot.lane.b32.xlu0 %v4943, 24
    %v6408 = vpop.permute.xlu0 %6407
    %6409 = vrot.lane.b32.xlu0 %v4803, 24
    %v6410 = vpop.permute.xlu0 %6409
    %6411 = vrot.lane.b32.xlu0 %v4944, 24
    %v6412 = vpop.permute.xlu0 %6411
    %6413 = vrot.lane.b32.xlu0 %v4806, 24
    %v6414 = vpop.permute.xlu0 %6413
    %6415 = vrot.lane.b32.xlu0 %v4945, 24
    %v6416 = vpop.permute.xlu0 %6415
    %6417 = vrot.lane.b32.xlu0 %v4809, 24
    %v6418 = vpop.permute.xlu0 %6417
    %6419 = vrot.lane.b32.xlu0 %v4946, 24
    %v6420 = vpop.permute.xlu0 %6419
    %6421 = vrot.lane.b32.xlu0 %v4812, 24
    %v6422 = vpop.permute.xlu0 %6421
    %6423 = vrot.lane.b32.xlu0 %v4947, 24
    %v6424 = vpop.permute.xlu0 %6423
    %6425 = vrot.lane.b32.xlu0 %v4815, 24
    %v6426 = vpop.permute.xlu0 %6425
    %6427 = vrot.lane.b32.xlu0 %v4948, 24
    %v6428 = vpop.permute.xlu0 %6427
    %6429 = vrot.lane.b32.xlu0 %v4818, 24
    %v6430 = vpop.permute.xlu0 %6429
    %6431 = vrot.lane.b32.xlu0 %v4949, 24
    %v6432 = vpop.permute.xlu0 %6431
    %6433 = vrot.lane.b32.xlu0 %v4821, 24
    %v6434 = vpop.permute.xlu0 %6433
    %6435 = vrot.lane.b32.xlu0 %v4950, 24
    %v6436 = vpop.permute.xlu0 %6435
    %6437 = vrot.lane.b32.xlu0 %v4824, 24
    %v6438 = vpop.permute.xlu0 %6437
    %6501 = vrot.lane.b32.xlu0 %v5050, 28
    %v6502 = vpop.permute.xlu0 %6501
    %6503 = vrot.lane.b32.xlu0 %v5052, 28
    %v6504 = vpop.permute.xlu0 %6503
    %6505 = vrot.lane.b32.xlu0 %v5055, 28
    %v6506 = vpop.permute.xlu0 %6505
    %6507 = vrot.lane.b32.xlu0 %v5057, 28
    %v6508 = vpop.permute.xlu0 %6507
    %6509 = vrot.lane.b32.xlu0 %v5060, 28
    %v6510 = vpop.permute.xlu0 %6509
    %6511 = vrot.lane.b32.xlu0 %v5062, 28
    %v6512 = vpop.permute.xlu0 %6511
    %6513 = vrot.lane.b32.xlu0 %v5065, 28
    %v6514 = vpop.permute.xlu0 %6513
    %6515 = vrot.lane.b32.xlu0 %v5067, 28
    %v6516 = vpop.permute.xlu0 %6515
    %6517 = vrot.lane.b32.xlu0 %v5070, 28
    %v6518 = vpop.permute.xlu0 %6517
    %6519 = vrot.lane.b32.xlu0 %v5072, 28
    %v6520 = vpop.permute.xlu0 %6519
    %6521 = vrot.lane.b32.xlu0 %v5075, 28
    %v6522 = vpop.permute.xlu0 %6521
    %6523 = vrot.lane.b32.xlu0 %v5077, 28
    %v6524 = vpop.permute.xlu0 %6523
    %6525 = vrot.lane.b32.xlu0 %v5080, 28
    %v6526 = vpop.permute.xlu0 %6525
    %6527 = vrot.lane.b32.xlu0 %v5082, 28
    %v6528 = vpop.permute.xlu0 %6527
    %6529 = vrot.lane.b32.xlu0 %v5085, 28
    %v6530 = vpop.permute.xlu0 %6529
    %6531 = vrot.lane.b32.xlu0 %v5087, 28
    %v6532 = vpop.permute.xlu0 %6531
    %6533 = vrot.lane.b32.xlu0 %v5090, 28
    %v6534 = vpop.permute.xlu0 %6533
    %6535 = vrot.lane.b32.xlu0 %v5092, 28
    %v6536 = vpop.permute.xlu0 %6535
    %6537 = vrot.lane.b32.xlu0 %v5095, 28
    %v6538 = vpop.permute.xlu0 %6537
    %6539 = vrot.lane.b32.xlu0 %v5097, 28
    %v6540 = vpop.permute.xlu0 %6539
    %6541 = vrot.lane.b32.xlu0 %v5100, 28
    %v6542 = vpop.permute.xlu0 %6541
    %6543 = vrot.lane.b32.xlu0 %v5102, 28
    %v6544 = vpop.permute.xlu0 %6543
    %6545 = vrot.lane.b32.xlu0 %v5105, 28
    %v6546 = vpop.permute.xlu0 %6545
    %6547 = vrot.lane.b32.xlu0 %v5107, 28
    %v6548 = vpop.permute.xlu0 %6547
    %6549 = vrot.lane.b32.xlu0 %v5110, 28
    %v6550 = vpop.permute.xlu0 %6549
    %6551 = vrot.lane.b32.xlu0 %v5112, 28
    %v6552 = vpop.permute.xlu0 %6551
    %6553 = vrot.lane.b32.xlu0 %v5115, 28
    %v6554 = vpop.permute.xlu0 %6553
    %6555 = vrot.lane.b32.xlu0 %v5117, 28
    %v6556 = vpop.permute.xlu0 %6555
    %6557 = vrot.lane.b32.xlu0 %v5913, 28
    %v6558 = vpop.permute.xlu0 %6557
    %6559 = vrot.lane.b32.xlu0 %v5915, 28
    %v6560 = vpop.permute.xlu0 %6559
    %6561 = vrot.lane.b32.xlu0 %v1268, 28
    %v6562 = vpop.permute.xlu0 %6561
    %6563 = vrot.lane.b32.xlu0 %v1270, 28
    %v6564 = vpop.permute.xlu0 %6563
    %6565 = vrot.lane.b32.xlu0 %v5125, 28
    %v6566 = vpop.permute.xlu0 %6565
    %6567 = vrot.lane.b32.xlu0 %v5127, 28
    %v6568 = vpop.permute.xlu0 %6567
    %6569 = vrot.lane.b32.xlu0 %v5130, 28
    %v6570 = vpop.permute.xlu0 %6569
    %6571 = vrot.lane.b32.xlu0 %v5132, 28
    %v6572 = vpop.permute.xlu0 %6571
    %6573 = vrot.lane.b32.xlu0 %v5135, 28
    %v6574 = vpop.permute.xlu0 %6573
    %6575 = vrot.lane.b32.xlu0 %v5137, 28
    %v6576 = vpop.permute.xlu0 %6575
    %6577 = vrot.lane.b32.xlu0 %v5140, 28
    %v6578 = vpop.permute.xlu0 %6577
    %6579 = vrot.lane.b32.xlu0 %v5142, 28
    %v6580 = vpop.permute.xlu0 %6579
    %6581 = vrot.lane.b32.xlu0 %v5145, 28
    %v6582 = vpop.permute.xlu0 %6581
    %6583 = vrot.lane.b32.xlu0 %v5147, 28
    %v6584 = vpop.permute.xlu0 %6583
    %6585 = vrot.lane.b32.xlu0 %v5150, 28
    %v6586 = vpop.permute.xlu0 %6585
    %6587 = vrot.lane.b32.xlu0 %v5152, 28
    %v6588 = vpop.permute.xlu0 %6587
    %6589 = vrot.lane.b32.xlu0 %v5155, 28
    %v6590 = vpop.permute.xlu0 %6589
    %6591 = vrot.lane.b32.xlu0 %v5157, 28
    %v6592 = vpop.permute.xlu0 %6591
    %6593 = vrot.lane.b32.xlu0 %v5160, 28
    %v6594 = vpop.permute.xlu0 %6593
    %6595 = vrot.lane.b32.xlu0 %v5162, 28
    %v6596 = vpop.permute.xlu0 %6595
    %6597 = vrot.lane.b32.xlu0 %v5165, 28
    %v6598 = vpop.permute.xlu0 %6597
    %6599 = vrot.lane.b32.xlu0 %v5167, 28
    %v6600 = vpop.permute.xlu0 %6599
    %6601 = vrot.lane.b32.xlu0 %v5170, 28
    %v6602 = vpop.permute.xlu0 %6601
    %6603 = vrot.lane.b32.xlu0 %v5172, 28
    %v6604 = vpop.permute.xlu0 %6603
    %6605 = vrot.lane.b32.xlu0 %v5175, 28
    %v6606 = vpop.permute.xlu0 %6605
    %6607 = vrot.lane.b32.xlu0 %v5177, 28
    %v6608 = vpop.permute.xlu0 %6607
    %6609 = vrot.lane.b32.xlu0 %v5180, 28
    %v6610 = vpop.permute.xlu0 %6609
    %6611 = vrot.lane.b32.xlu0 %v5182, 28
    %v6612 = vpop.permute.xlu0 %6611
    %6613 = vrot.lane.b32.xlu0 %v5185, 28
    %v6614 = vpop.permute.xlu0 %6613
    %6615 = vrot.lane.b32.xlu0 %v5187, 28
    %v6616 = vpop.permute.xlu0 %6615
    %6617 = vrot.lane.b32.xlu0 %v5190, 28
    %v6618 = vpop.permute.xlu0 %6617
    %6619 = vrot.lane.b32.xlu0 %v5192, 28
    %v6620 = vpop.permute.xlu0 %6619
    %6621 = vrot.lane.b32.xlu0 %v5918, 28
    %v6622 = vpop.permute.xlu0 %6621
    %6623 = vrot.lane.b32.xlu0 %v5920, 28
    %v6624 = vpop.permute.xlu0 %6623
    %6687 = vrot.lane.b32.xlu0 %v5386, 32
    %v6688 = vpop.permute.xlu0 %6687
    %6689 = vrot.lane.b32.xlu0 %v5388, 32
    %v6690 = vpop.permute.xlu0 %6689
    %6691 = vrot.lane.b32.xlu0 %v5391, 32
    %v6692 = vpop.permute.xlu0 %6691
    %6693 = vrot.lane.b32.xlu0 %v5393, 32
    %v6694 = vpop.permute.xlu0 %6693
    %6695 = vrot.lane.b32.xlu0 %v5396, 32
    %v6696 = vpop.permute.xlu0 %6695
    %6697 = vrot.lane.b32.xlu0 %v5398, 32
    %v6698 = vpop.permute.xlu0 %6697
    %6699 = vrot.lane.b32.xlu0 %v5401, 32
    %v6700 = vpop.permute.xlu0 %6699
    %6701 = vrot.lane.b32.xlu0 %v5403, 32
    %v6702 = vpop.permute.xlu0 %6701
    %6703 = vrot.lane.b32.xlu0 %v5406, 32
    %v6704 = vpop.permute.xlu0 %6703
    %6705 = vrot.lane.b32.xlu0 %v5408, 32
    %v6706 = vpop.permute.xlu0 %6705
    %6707 = vrot.lane.b32.xlu0 %v5411, 32
    %v6708 = vpop.permute.xlu0 %6707
    %6709 = vrot.lane.b32.xlu0 %v5413, 32
    %v6710 = vpop.permute.xlu0 %6709
    %6711 = vrot.lane.b32.xlu0 %v5416, 32
    %v6712 = vpop.permute.xlu0 %6711
    %6713 = vrot.lane.b32.xlu0 %v5418, 32
    %v6714 = vpop.permute.xlu0 %6713
    %6715 = vrot.lane.b32.xlu0 %v5421, 32
    %v6716 = vpop.permute.xlu0 %6715
    %6717 = vrot.lane.b32.xlu0 %v5423, 32
    %v6718 = vpop.permute.xlu0 %6717
    %6719 = vrot.lane.b32.xlu0 %v5426, 32
    %v6720 = vpop.permute.xlu0 %6719
    %6721 = vrot.lane.b32.xlu0 %v5428, 32
    %v6722 = vpop.permute.xlu0 %6721
    %6723 = vrot.lane.b32.xlu0 %v5431, 32
    %v6724 = vpop.permute.xlu0 %6723
    %6725 = vrot.lane.b32.xlu0 %v5433, 32
    %v6726 = vpop.permute.xlu0 %6725
    %6727 = vrot.lane.b32.xlu0 %v5436, 32
    %v6728 = vpop.permute.xlu0 %6727
    %6729 = vrot.lane.b32.xlu0 %v5438, 32
    %v6730 = vpop.permute.xlu0 %6729
    %6731 = vrot.lane.b32.xlu0 %v5441, 32
    %v6732 = vpop.permute.xlu0 %6731
    %6733 = vrot.lane.b32.xlu0 %v5443, 32
    %v6734 = vpop.permute.xlu0 %6733
    %6735 = vrot.lane.b32.xlu0 %v5446, 32
    %v6736 = vpop.permute.xlu0 %6735
    %6737 = vrot.lane.b32.xlu0 %v5448, 32
    %v6738 = vpop.permute.xlu0 %6737
    %6739 = vrot.lane.b32.xlu0 %v5451, 32
    %v6740 = vpop.permute.xlu0 %6739
    %6741 = vrot.lane.b32.xlu0 %v5453, 32
    %v6742 = vpop.permute.xlu0 %6741
    %6743 = vrot.lane.b32.xlu0 %v6115, 32
    %v6744 = vpop.permute.xlu0 %6743
    %6745 = vrot.lane.b32.xlu0 %v6117, 32
    %v6746 = vpop.permute.xlu0 %6745
    %6747 = vrot.lane.b32.xlu0 %v1610, 32
    %v6748 = vpop.permute.xlu0 %6747
    %6749 = vrot.lane.b32.xlu0 %v1612, 32
    %v6750 = vpop.permute.xlu0 %6749
    %6751 = vrot.lane.b32.xlu0 %v5461, 32
    %v6752 = vpop.permute.xlu0 %6751
    %6753 = vrot.lane.b32.xlu0 %v5463, 32
    %v6754 = vpop.permute.xlu0 %6753
    %6755 = vrot.lane.b32.xlu0 %v5466, 32
    %v6756 = vpop.permute.xlu0 %6755
    %6757 = vrot.lane.b32.xlu0 %v5468, 32
    %v6758 = vpop.permute.xlu0 %6757
    %6759 = vrot.lane.b32.xlu0 %v5471, 32
    %v6760 = vpop.permute.xlu0 %6759
    %6761 = vrot.lane.b32.xlu0 %v5473, 32
    %v6762 = vpop.permute.xlu0 %6761
    %6763 = vrot.lane.b32.xlu0 %v5476, 32
    %v6764 = vpop.permute.xlu0 %6763
    %6765 = vrot.lane.b32.xlu0 %v5478, 32
    %v6766 = vpop.permute.xlu0 %6765
    %6767 = vrot.lane.b32.xlu0 %v5481, 32
    %v6768 = vpop.permute.xlu0 %6767
    %6769 = vrot.lane.b32.xlu0 %v5483, 32
    %v6770 = vpop.permute.xlu0 %6769
    %6771 = vrot.lane.b32.xlu0 %v5486, 32
    %v6772 = vpop.permute.xlu0 %6771
    %6773 = vrot.lane.b32.xlu0 %v5488, 32
    %v6774 = vpop.permute.xlu0 %6773
    %6775 = vrot.lane.b32.xlu0 %v5491, 32
    %v6776 = vpop.permute.xlu0 %6775
    %6777 = vrot.lane.b32.xlu0 %v5493, 32
    %v6778 = vpop.permute.xlu0 %6777
    %6779 = vrot.lane.b32.xlu0 %v5496, 32
    %v6780 = vpop.permute.xlu0 %6779
    %6781 = vrot.lane.b32.xlu0 %v5498, 32
    %v6782 = vpop.permute.xlu0 %6781
    %6783 = vrot.lane.b32.xlu0 %v5501, 32
    %v6784 = vpop.permute.xlu0 %6783
    %6785 = vrot.lane.b32.xlu0 %v5503, 32
    %v6786 = vpop.permute.xlu0 %6785
    %6787 = vrot.lane.b32.xlu0 %v5506, 32
    %v6788 = vpop.permute.xlu0 %6787
    %6789 = vrot.lane.b32.xlu0 %v5508, 32
    %v6790 = vpop.permute.xlu0 %6789
    %6791 = vrot.lane.b32.xlu0 %v5511, 32
    %v6792 = vpop.permute.xlu0 %6791
    %6793 = vrot.lane.b32.xlu0 %v5513, 32
    %v6794 = vpop.permute.xlu0 %6793
    %6795 = vrot.lane.b32.xlu0 %v5516, 32
    %v6796 = vpop.permute.xlu0 %6795
    %6797 = vrot.lane.b32.xlu0 %v5518, 32
    %v6798 = vpop.permute.xlu0 %6797
    %6799 = vrot.lane.b32.xlu0 %v5521, 32
    %v6800 = vpop.permute.xlu0 %6799
    %6801 = vrot.lane.b32.xlu0 %v5523, 32
    %v6802 = vpop.permute.xlu0 %6801
    %6803 = vrot.lane.b32.xlu0 %v5526, 32
    %v6804 = vpop.permute.xlu0 %6803
    %6805 = vrot.lane.b32.xlu0 %v5528, 32
    %v6806 = vpop.permute.xlu0 %6805
    %6807 = vrot.lane.b32.xlu0 %v6120, 32
    %v6808 = vpop.permute.xlu0 %6807
    %6809 = vrot.lane.b32.xlu0 %v6122, 32
    %v6810 = vpop.permute.xlu0 %6809
    %v6873 = vsel %vm812, %v1137, %v5194
    %v6874 = vsel %vm812, %v944, %v5196
    %v6875 = vsel %vm812, %v4919, %v5198
    %v6876 = vsel %vm812, %v4731, %v5200
    %v6877 = vsel %vm812, %v4920, %v5202
    %v6878 = vsel %vm812, %v4734, %v5204
    %v6879 = vsel %vm812, %v4921, %v5206
    %v6880 = vsel %vm812, %v4737, %v5208
    %v6881 = vsel %vm812, %v4922, %v5210
    %v6882 = vsel %vm812, %v4740, %v5212
    %v6883 = vsel %vm812, %v4923, %v5214
    %v6884 = vsel %vm812, %v4743, %v5216
    %v6885 = vsel %vm812, %v4924, %v5218
    %v6886 = vsel %vm812, %v4746, %v5220
    %v6887 = vsel %vm812, %v4925, %v5222
    %v6888 = vsel %vm812, %v4749, %v5224
    %v6889 = vsel %vm812, %v4926, %v5226
    %v6890 = vsel %vm812, %v4752, %v5228
    %v6891 = vsel %vm812, %v4927, %v5230
    %v6892 = vsel %vm812, %v4755, %v5232
    %v6893 = vsel %vm812, %v4928, %v5234
    %v6894 = vsel %vm812, %v4758, %v5236
    %v6895 = vsel %vm812, %v4929, %v5238
    %v6896 = vsel %vm812, %v4761, %v5240
    %v6897 = vsel %vm812, %v4930, %v5242
    %v6898 = vsel %vm812, %v4764, %v5244
    %v6899 = vsel %vm812, %v4931, %v5246
    %v6900 = vsel %vm812, %v4767, %v5248
    %v6901 = vsel %vm812, %v4932, %v5250
    %v6902 = vsel %vm812, %v4770, %v5252
    %v6903 = vsel %vm812, %v4933, %v5254
    %v6904 = vsel %vm812, %v4773, %v5256
    %v6905 = vsel %vm812, %v4935, %v5258
    %v6906 = vsel %vm812, %v4779, %v5260
    %v6907 = vsel %vm812, %v4936, %v5262
    %v6908 = vsel %vm812, %v4782, %v5264
    %v6909 = vsel %vm812, %v4937, %v5266
    %v6910 = vsel %vm812, %v4785, %v5268
    %v6911 = vsel %vm812, %v4938, %v5270
    %v6912 = vsel %vm812, %v4788, %v5272
    %v6913 = vsel %vm812, %v4939, %v5274
    %v6914 = vsel %vm812, %v4791, %v5276
    %v6915 = vsel %vm812, %v4940, %v5278
    %v6916 = vsel %vm812, %v4794, %v5280
    %v6917 = vsel %vm812, %v4941, %v5282
    %v6918 = vsel %vm812, %v4797, %v5284
    %v6919 = vsel %vm812, %v4942, %v5286
    %v6920 = vsel %vm812, %v4800, %v5288
    %v6921 = vsel %vm812, %v4943, %v5290
    %v6922 = vsel %vm812, %v4803, %v5292
    %v6923 = vsel %vm812, %v4944, %v5294
    %v6924 = vsel %vm812, %v4806, %v5296
    %v6925 = vsel %vm812, %v4945, %v5298
    %v6926 = vsel %vm812, %v4809, %v5300
    %v6927 = vsel %vm812, %v4946, %v5302
    %v6928 = vsel %vm812, %v4812, %v5304
    %v6929 = vsel %vm812, %v4947, %v5306
    %v6930 = vsel %vm812, %v4815, %v5308
    %v6931 = vsel %vm812, %v4948, %v5310
    %v6932 = vsel %vm812, %v4818, %v5312
    %v6933 = vsel %vm812, %v4949, %v5314
    %v6934 = vsel %vm812, %v4821, %v5316
    %v6935 = vsel %vm3107, %v6873, %v5530
    %v6936 = vsel %vm3107, %v6874, %v5532
    %v6937 = vsel %vm3107, %v6875, %v5534
    %v6938 = vsel %vm3107, %v6876, %v5536
    %v6939 = vsel %vm3107, %v6877, %v5538
    %v6940 = vsel %vm3107, %v6878, %v5540
    %v6941 = vsel %vm3107, %v6879, %v5542
    %v6942 = vsel %vm3107, %v6880, %v5544
    %v6943 = vsel %vm3107, %v6881, %v5546
    %v6944 = vsel %vm3107, %v6882, %v5548
    %v6945 = vsel %vm3107, %v6883, %v5550
    %v6946 = vsel %vm3107, %v6884, %v5552
    %v6947 = vsel %vm3107, %v6885, %v5554
    %v6948 = vsel %vm3107, %v6886, %v5556
    %v6949 = vsel %vm3107, %v6887, %v5558
    %v6950 = vsel %vm3107, %v6888, %v5560
    %v6951 = vsel %vm3107, %v6889, %v5562
    %v6952 = vsel %vm3107, %v6890, %v5564
    %v6953 = vsel %vm3107, %v6891, %v5566
    %v6954 = vsel %vm3107, %v6892, %v5568
    %v6955 = vsel %vm3107, %v6893, %v5570
    %v6956 = vsel %vm3107, %v6894, %v5572
    %v6957 = vsel %vm3107, %v6895, %v5574
    %v6958 = vsel %vm3107, %v6896, %v5576
    %v6959 = vsel %vm3107, %v6897, %v5578
    %v6960 = vsel %vm3107, %v6898, %v5580
    %v6961 = vsel %vm3107, %v6899, %v5582
    %v6962 = vsel %vm3107, %v6900, %v5584
    %v6963 = vsel %vm3107, %v6901, %v5586
    %v6964 = vsel %vm3107, %v6902, %v5588
    %v6965 = vsel %vm3107, %v6903, %v5590
    %v6966 = vsel %vm3107, %v6904, %v5592
    %v6967 = vsel %vm3107, %v6905, %v5594
    %v6968 = vsel %vm3107, %v6906, %v5596
    %v6969 = vsel %vm3107, %v6907, %v5598
    %v6970 = vsel %vm3107, %v6908, %v5600
    %v6971 = vsel %vm3107, %v6909, %v5602
    %v6972 = vsel %vm3107, %v6910, %v5604
    %v6973 = vsel %vm3107, %v6911, %v5606
    %v6974 = vsel %vm3107, %v6912, %v5608
    %v6975 = vsel %vm3107, %v6913, %v5610
    %v6976 = vsel %vm3107, %v6914, %v5612
    %v6977 = vsel %vm3107, %v6915, %v5614
    %v6978 = vsel %vm3107, %v6916, %v5616
    %v6979 = vsel %vm3107, %v6917, %v5618
    %v6980 = vsel %vm3107, %v6918, %v5620
    %v6981 = vsel %vm3107, %v6919, %v5622
    %v6982 = vsel %vm3107, %v6920, %v5624
    %v6983 = vsel %vm3107, %v6921, %v5626
    %v6984 = vsel %vm3107, %v6922, %v5628
    %v6985 = vsel %vm3107, %v6923, %v5630
    %v6986 = vsel %vm3107, %v6924, %v5632
    %v6987 = vsel %vm3107, %v6925, %v5634
    %v6988 = vsel %vm3107, %v6926, %v5636
    %v6989 = vsel %vm3107, %v6927, %v5638
    %v6990 = vsel %vm3107, %v6928, %v5640
    %v6991 = vsel %vm3107, %v6929, %v5642
    %v6992 = vsel %vm3107, %v6930, %v5644
    %v6993 = vsel %vm3107, %v6931, %v5646
    %v6994 = vsel %vm3107, %v6932, %v5648
    %v6995 = vsel %vm3107, %v6933, %v5650
    %v6996 = vsel %vm3107, %v6934, %v5652
    %vm6997 = vcmask 97280
    %v6998 = vsel %vm6997, %v6935, %v5718
    %v6999 = vsel %vm6997, %v6936, %v5720
    %v7000 = vsel %vm6997, %v6937, %v5722
    %v7001 = vsel %vm6997, %v6938, %v5724
    %v7002 = vsel %vm6997, %v6939, %v5726
    %v7003 = vsel %vm6997, %v6940, %v5728
    %v7004 = vsel %vm6997, %v6941, %v5730
    %v7005 = vsel %vm6997, %v6942, %v5732
    %v7006 = vsel %vm6997, %v6943, %v5734
    %v7007 = vsel %vm6997, %v6944, %v5736
    %v7008 = vsel %vm6997, %v6945, %v5738
    %v7009 = vsel %vm6997, %v6946, %v5740
    %v7010 = vsel %vm6997, %v6947, %v5742
    %v7011 = vsel %vm6997, %v6948, %v5744
    %v7012 = vsel %vm6997, %v6949, %v5746
    %v7013 = vsel %vm6997, %v6950, %v5748
    %v7014 = vsel %vm6997, %v6951, %v5750
    %v7015 = vsel %vm6997, %v6952, %v5752
    %v7016 = vsel %vm6997, %v6953, %v5754
    %v7017 = vsel %vm6997, %v6954, %v5756
    %v7018 = vsel %vm6997, %v6955, %v5758
    %v7019 = vsel %vm6997, %v6956, %v5760
    %v7020 = vsel %vm6997, %v6957, %v5762
    %v7021 = vsel %vm6997, %v6958, %v5764
    %v7022 = vsel %vm6997, %v6959, %v5766
    %v7023 = vsel %vm6997, %v6960, %v5768
    %v7024 = vsel %vm6997, %v6961, %v5770
    %v7025 = vsel %vm6997, %v6962, %v5772
    %v7026 = vsel %vm6997, %v6963, %v5774
    %v7027 = vsel %vm6997, %v6964, %v5776
    %v7028 = vsel %vm6997, %v6965, %v5778
    %v7029 = vsel %vm6997, %v6966, %v5780
    %v7030 = vsel %vm6997, %v6935, %v5782
    %v7031 = vsel %vm6997, %v6936, %v5784
    %v7032 = vsel %vm6997, %v6967, %v5786
    %v7033 = vsel %vm6997, %v6968, %v5788
    %v7034 = vsel %vm6997, %v6969, %v5790
    %v7035 = vsel %vm6997, %v6970, %v5792
    %v7036 = vsel %vm6997, %v6971, %v5794
    %v7037 = vsel %vm6997, %v6972, %v5796
    %v7038 = vsel %vm6997, %v6973, %v5798
    %v7039 = vsel %vm6997, %v6974, %v5800
    %v7040 = vsel %vm6997, %v6975, %v5802
    %v7041 = vsel %vm6997, %v6976, %v5804
    %v7042 = vsel %vm6997, %v6977, %v5806
    %v7043 = vsel %vm6997, %v6978, %v5808
    %v7044 = vsel %vm6997, %v6979, %v5810
    %v7045 = vsel %vm6997, %v6980, %v5812
    %v7046 = vsel %vm6997, %v6981, %v5814
    %v7047 = vsel %vm6997, %v6982, %v5816
    %v7048 = vsel %vm6997, %v6983, %v5818
    %v7049 = vsel %vm6997, %v6984, %v5820
    %v7050 = vsel %vm6997, %v6985, %v5822
    %v7051 = vsel %vm6997, %v6986, %v5824
    %v7052 = vsel %vm6997, %v6987, %v5826
    %v7053 = vsel %vm6997, %v6988, %v5828
    %v7054 = vsel %vm6997, %v6989, %v5830
    %v7055 = vsel %vm6997, %v6990, %v5832
    %v7056 = vsel %vm6997, %v6991, %v5834
    %v7057 = vsel %vm6997, %v6992, %v5836
    %v7058 = vsel %vm6997, %v6993, %v5838
    %v7059 = vsel %vm6997, %v6994, %v5840
    %v7060 = vsel %vm6997, %v6995, %v5842
    %v7061 = vsel %vm6997, %v6996, %v5844
    %v7062 = vsel %vm3170, %v6998, %v5922
    %v7063 = vsel %vm3170, %v6999, %v5924
    %v7064 = vsel %vm3170, %v7000, %v5926
    %v7065 = vsel %vm3170, %v7001, %v5928
    %v7066 = vsel %vm3170, %v7002, %v5930
    %v7067 = vsel %vm3170, %v7003, %v5932
    %v7068 = vsel %vm3170, %v7004, %v5934
    %v7069 = vsel %vm3170, %v7005, %v5936
    %v7070 = vsel %vm3170, %v7006, %v5938
    %v7071 = vsel %vm3170, %v7007, %v5940
    %v7072 = vsel %vm3170, %v7008, %v5942
    %v7073 = vsel %vm3170, %v7009, %v5944
    %v7074 = vsel %vm3170, %v7010, %v5946
    %v7075 = vsel %vm3170, %v7011, %v5948
    %v7076 = vsel %vm3170, %v7012, %v5950
    %v7077 = vsel %vm3170, %v7013, %v5952
    %v7078 = vsel %vm3170, %v7014, %v5954
    %v7079 = vsel %vm3170, %v7015, %v5956
    %v7080 = vsel %vm3170, %v7016, %v5958
    %v7081 = vsel %vm3170, %v7017, %v5960
    %v7082 = vsel %vm3170, %v7018, %v5962
    %v7083 = vsel %vm3170, %v7019, %v5964
    %v7084 = vsel %vm3170, %v7020, %v5966
    %v7085 = vsel %vm3170, %v7021, %v5968
    %v7086 = vsel %vm3170, %v7022, %v5970
    %v7087 = vsel %vm3170, %v7023, %v5972
    %v7088 = vsel %vm3170, %v7024, %v5974
    %v7089 = vsel %vm3170, %v7025, %v5976
    %v7090 = vsel %vm3170, %v7026, %v5978
    %v7091 = vsel %vm3170, %v7027, %v5980
    %v7092 = vsel %vm3170, %v7028, %v5982
    %v7093 = vsel %vm3170, %v7029, %v5984
    %v7094 = vsel %vm3170, %v7030, %v5986
    %v7095 = vsel %vm3170, %v7031, %v5988
    %v7096 = vsel %vm3170, %v7032, %v5990
    %v7097 = vsel %vm3170, %v7033, %v5992
    %v7098 = vsel %vm3170, %v7034, %v5994
    %v7099 = vsel %vm3170, %v7035, %v5996
    %v7100 = vsel %vm3170, %v7036, %v5998
    %v7101 = vsel %vm3170, %v7037, %v6000
    %v7102 = vsel %vm3170, %v7038, %v6002
    %v7103 = vsel %vm3170, %v7039, %v6004
    %v7104 = vsel %vm3170, %v7040, %v6006
    %v7105 = vsel %vm3170, %v7041, %v6008
    %v7106 = vsel %vm3170, %v7042, %v6010
    %v7107 = vsel %vm3170, %v7043, %v6012
    %v7108 = vsel %vm3170, %v7044, %v6014
    %v7109 = vsel %vm3170, %v7045, %v6016
    %v7110 = vsel %vm3170, %v7046, %v6018
    %v7111 = vsel %vm3170, %v7047, %v6020
    %v7112 = vsel %vm3170, %v7048, %v6022
    %v7113 = vsel %vm3170, %v7049, %v6024
    %v7114 = vsel %vm3170, %v7050, %v6026
    %v7115 = vsel %vm3170, %v7051, %v6028
    %v7116 = vsel %vm3170, %v7052, %v6030
    %v7117 = vsel %vm3170, %v7053, %v6032
    %v7118 = vsel %vm3170, %v7054, %v6034
    %v7119 = vsel %vm3170, %v7055, %v6036
    %v7120 = vsel %vm3170, %v7056, %v6038
    %v7121 = vsel %vm3170, %v7057, %v6040
    %v7122 = vsel %vm3170, %v7058, %v6042
    %v7123 = vsel %vm3170, %v7059, %v6044
    %v7124 = vsel %vm3170, %v7060, %v6046
    %v7125 = vsel %vm3170, %v7061, %v6048
    %vm7126 = vcmask 162816
    %v7127 = vsel %vm7126, %v7062, %v6124
    %v7128 = vsel %vm7126, %v7063, %v6126
    %v7129 = vsel %vm7126, %v7064, %v6128
    %v7130 = vsel %vm7126, %v7065, %v6130
    %v7131 = vsel %vm7126, %v7066, %v6132
    %v7132 = vsel %vm7126, %v7067, %v6134
    %v7133 = vsel %vm7126, %v7068, %v6136
    %v7134 = vsel %vm7126, %v7069, %v6138
    %v7135 = vsel %vm7126, %v7070, %v6140
    %v7136 = vsel %vm7126, %v7071, %v6142
    %v7137 = vsel %vm7126, %v7072, %v6144
    %v7138 = vsel %vm7126, %v7073, %v6146
    %v7139 = vsel %vm7126, %v7074, %v6148
    %v7140 = vsel %vm7126, %v7075, %v6150
    %v7141 = vsel %vm7126, %v7076, %v6152
    %v7142 = vsel %vm7126, %v7077, %v6154
    %v7143 = vsel %vm7126, %v7078, %v6156
    %v7144 = vsel %vm7126, %v7079, %v6158
    %v7145 = vsel %vm7126, %v7080, %v6160
    %v7146 = vsel %vm7126, %v7081, %v6162
    %v7147 = vsel %vm7126, %v7082, %v6164
    %v7148 = vsel %vm7126, %v7083, %v6166
    %v7149 = vsel %vm7126, %v7084, %v6168
    %v7150 = vsel %vm7126, %v7085, %v6170
    %v7151 = vsel %vm7126, %v7086, %v6172
    %v7152 = vsel %vm7126, %v7087, %v6174
    %v7153 = vsel %vm7126, %v7088, %v6176
    %v7154 = vsel %vm7126, %v7089, %v6178
    %v7155 = vsel %vm7126, %v7090, %v6180
    %v7156 = vsel %vm7126, %v7091, %v6182
    %v7157 = vsel %vm7126, %v7092, %v6184
    %v7158 = vsel %vm7126, %v7093, %v6186
    %v7159 = vsel %vm7126, %v7094, %v6188
    %v7160 = vsel %vm7126, %v7095, %v6190
    %v7161 = vsel %vm7126, %v7096, %v6192
    %v7162 = vsel %vm7126, %v7097, %v6194
    %v7163 = vsel %vm7126, %v7098, %v6196
    %v7164 = vsel %vm7126, %v7099, %v6198
    %v7165 = vsel %vm7126, %v7100, %v6200
    %v7166 = vsel %vm7126, %v7101, %v6202
    %v7167 = vsel %vm7126, %v7102, %v6204
    %v7168 = vsel %vm7126, %v7103, %v6206
    %v7169 = vsel %vm7126, %v7104, %v6208
    %v7170 = vsel %vm7126, %v7105, %v6210
    %v7171 = vsel %vm7126, %v7106, %v6212
    %v7172 = vsel %vm7126, %v7107, %v6214
    %v7173 = vsel %vm7126, %v7108, %v6216
    %v7174 = vsel %vm7126, %v7109, %v6218
    %v7175 = vsel %vm7126, %v7110, %v6220
    %v7176 = vsel %vm7126, %v7111, %v6222
    %v7177 = vsel %vm7126, %v7112, %v6224
    %v7178 = vsel %vm7126, %v7113, %v6226
    %v7179 = vsel %vm7126, %v7114, %v6228
    %v7180 = vsel %vm7126, %v7115, %v6230
    %v7181 = vsel %vm7126, %v7116, %v6232
    %v7182 = vsel %vm7126, %v7117, %v6234
    %v7183 = vsel %vm7126, %v7118, %v6236
    %v7184 = vsel %vm7126, %v7119, %v6238
    %v7185 = vsel %vm7126, %v7120, %v6240
    %v7186 = vsel %vm7126, %v7121, %v6242
    %v7187 = vsel %vm7126, %v7122, %v6244
    %v7188 = vsel %vm7126, %v7123, %v6246
    %v7189 = vsel %vm7126, %v7124, %v6248
    %v7190 = vsel %vm7126, %v7125, %v6250
    %v7191 = vsel %vm3233, %v7127, %v6316
    %v7192 = vsel %vm3233, %v7128, %v6318
    %v7193 = vsel %vm3233, %v7129, %v6320
    %v7194 = vsel %vm3233, %v7130, %v6322
    %v7195 = vsel %vm3233, %v7131, %v6324
    %v7196 = vsel %vm3233, %v7132, %v6326
    %v7197 = vsel %vm3233, %v7133, %v6328
    %v7198 = vsel %vm3233, %v7134, %v6330
    %v7199 = vsel %vm3233, %v7135, %v6332
    %v7200 = vsel %vm3233, %v7136, %v6334
    %v7201 = vsel %vm3233, %v7137, %v6336
    %v7202 = vsel %vm3233, %v7138, %v6338
    %v7203 = vsel %vm3233, %v7139, %v6340
    %v7204 = vsel %vm3233, %v7140, %v6342
    %v7205 = vsel %vm3233, %v7141, %v6344
    %v7206 = vsel %vm3233, %v7142, %v6346
    %v7207 = vsel %vm3233, %v7143, %v6348
    %v7208 = vsel %vm3233, %v7144, %v6350
    %v7209 = vsel %vm3233, %v7145, %v6352
    %v7210 = vsel %vm3233, %v7146, %v6354
    %v7211 = vsel %vm3233, %v7147, %v6356
    %v7212 = vsel %vm3233, %v7148, %v6358
    %v7213 = vsel %vm3233, %v7149, %v6360
    %v7214 = vsel %vm3233, %v7150, %v6362
    %v7215 = vsel %vm3233, %v7151, %v6364
    %v7216 = vsel %vm3233, %v7152, %v6366
    %v7217 = vsel %vm3233, %v7153, %v6368
    %v7218 = vsel %vm3233, %v7154, %v6370
    %v7219 = vsel %vm3233, %v7155, %v6372
    %v7220 = vsel %vm3233, %v7156, %v6374
    %v7221 = vsel %vm3233, %v7157, %v6376
    %v7222 = vsel %vm3233, %v7158, %v6378
    %v7223 = vsel %vm3233, %v7159, %v6380
    %v7224 = vsel %vm3233, %v7160, %v6382
    %v7225 = vsel %vm3233, %v7161, %v6384
    %v7226 = vsel %vm3233, %v7162, %v6386
    %v7227 = vsel %vm3233, %v7163, %v6388
    %v7228 = vsel %vm3233, %v7164, %v6390
    %v7229 = vsel %vm3233, %v7165, %v6392
    %v7230 = vsel %vm3233, %v7166, %v6394
    %v7231 = vsel %vm3233, %v7167, %v6396
    %v7232 = vsel %vm3233, %v7168, %v6398
    %v7233 = vsel %vm3233, %v7169, %v6400
    %v7234 = vsel %vm3233, %v7170, %v6402
    %v7235 = vsel %vm3233, %v7171, %v6404
    %v7236 = vsel %vm3233, %v7172, %v6406
    %v7237 = vsel %vm3233, %v7173, %v6408
    %v7238 = vsel %vm3233, %v7174, %v6410
    %v7239 = vsel %vm3233, %v7175, %v6412
    %v7240 = vsel %vm3233, %v7176, %v6414
    %v7241 = vsel %vm3233, %v7177, %v6416
    %v7242 = vsel %vm3233, %v7178, %v6418
    %v7243 = vsel %vm3233, %v7179, %v6420
    %v7244 = vsel %vm3233, %v7180, %v6422
    %v7245 = vsel %vm3233, %v7181, %v6424
    %v7246 = vsel %vm3233, %v7182, %v6426
    %v7247 = vsel %vm3233, %v7183, %v6428
    %v7248 = vsel %vm3233, %v7184, %v6430
    %v7249 = vsel %vm3233, %v7185, %v6432
    %v7250 = vsel %vm3233, %v7186, %v6434
    %v7251 = vsel %vm3233, %v7187, %v6436
    %v7252 = vsel %vm3233, %v7188, %v6438
    %v7253 = vsel %vm3233, %v7189, %v6376
    %v7254 = vsel %vm3233, %v7190, %v6378
    %vm7255 = vcmask 228352
    %v7256 = vsel %vm7255, %v7191, %v6502
    %v7257 = vsel %vm7255, %v7192, %v6504
    %v7258 = vsel %vm7255, %v7193, %v6506
    %v7259 = vsel %vm7255, %v7194, %v6508
    %v7260 = vsel %vm7255, %v7195, %v6510
    %v7261 = vsel %vm7255, %v7196, %v6512
    %v7262 = vsel %vm7255, %v7197, %v6514
    %v7263 = vsel %vm7255, %v7198, %v6516
    %v7264 = vsel %vm7255, %v7199, %v6518
    %v7265 = vsel %vm7255, %v7200, %v6520
    %v7266 = vsel %vm7255, %v7201, %v6522
    %v7267 = vsel %vm7255, %v7202, %v6524
    %v7268 = vsel %vm7255, %v7203, %v6526
    %v7269 = vsel %vm7255, %v7204, %v6528
    %v7270 = vsel %vm7255, %v7205, %v6530
    %v7271 = vsel %vm7255, %v7206, %v6532
    %v7272 = vsel %vm7255, %v7207, %v6534
    %v7273 = vsel %vm7255, %v7208, %v6536
    %v7274 = vsel %vm7255, %v7209, %v6538
    %v7275 = vsel %vm7255, %v7210, %v6540
    %v7276 = vsel %vm7255, %v7211, %v6542
    %v7277 = vsel %vm7255, %v7212, %v6544
    %v7278 = vsel %vm7255, %v7213, %v6546
    %v7279 = vsel %vm7255, %v7214, %v6548
    %v7280 = vsel %vm7255, %v7215, %v6550
    %v7281 = vsel %vm7255, %v7216, %v6552
    %v7282 = vsel %vm7255, %v7217, %v6554
    %v7283 = vsel %vm7255, %v7218, %v6556
    %v7284 = vsel %vm7255, %v7219, %v6558
    %v7285 = vsel %vm7255, %v7220, %v6560
    %v7286 = vsel %vm7255, %v7221, %v6562
    %v7287 = vsel %vm7255, %v7222, %v6564
    %v7288 = vsel %vm7255, %v7223, %v6566
    %v7289 = vsel %vm7255, %v7224, %v6568
    %v7290 = vsel %vm7255, %v7225, %v6570
    %v7291 = vsel %vm7255, %v7226, %v6572
    %v7292 = vsel %vm7255, %v7227, %v6574
    %v7293 = vsel %vm7255, %v7228, %v6576
    %v7294 = vsel %vm7255, %v7229, %v6578
    %v7295 = vsel %vm7255, %v7230, %v6580
    %v7296 = vsel %vm7255, %v7231, %v6582
    %v7297 = vsel %vm7255, %v7232, %v6584
    %v7298 = vsel %vm7255, %v7233, %v6586
    %v7299 = vsel %vm7255, %v7234, %v6588
    %v7300 = vsel %vm7255, %v7235, %v6590
    %v7301 = vsel %vm7255, %v7236, %v6592
    %v7302 = vsel %vm7255, %v7237, %v6594
    %v7303 = vsel %vm7255, %v7238, %v6596
    %v7304 = vsel %vm7255, %v7239, %v6598
    %v7305 = vsel %vm7255, %v7240, %v6600
    %v7306 = vsel %vm7255, %v7241, %v6602
    %v7307 = vsel %vm7255, %v7242, %v6604
    %v7308 = vsel %vm7255, %v7243, %v6606
    %v7309 = vsel %vm7255, %v7244, %v6608
    %v7310 = vsel %vm7255, %v7245, %v6610
    %v7311 = vsel %vm7255, %v7246, %v6612
    %v7312 = vsel %vm7255, %v7247, %v6614
    %v7313 = vsel %vm7255, %v7248, %v6616
    %v7314 = vsel %vm7255, %v7249, %v6618
    %v7315 = vsel %vm7255, %v7250, %v6620
    %v7316 = vsel %vm7255, %v7251, %v6622
    %v7317 = vsel %vm7255, %v7252, %v6624
    %v7318 = vsel %vm7255, %v7253, %v6562
    %v7319 = vsel %vm7255, %v7254, %v6564
    %v7320 = vsel %vm3298, %v7256, %v6688
    %v7321 = vsel %vm3298, %v7257, %v6690
    %v7322 = vsel %vm3298, %v7258, %v6692
    %v7323 = vsel %vm3298, %v7259, %v6694
    %v7324 = vsel %vm3298, %v7260, %v6696
    %v7325 = vsel %vm3298, %v7261, %v6698
    %v7326 = vsel %vm3298, %v7262, %v6700
    %v7327 = vsel %vm3298, %v7263, %v6702
    %v7328 = vsel %vm3298, %v7264, %v6704
    %v7329 = vsel %vm3298, %v7265, %v6706
    %v7330 = vsel %vm3298, %v7266, %v6708
    %v7331 = vsel %vm3298, %v7267, %v6710
    %v7332 = vsel %vm3298, %v7268, %v6712
    %v7333 = vsel %vm3298, %v7269, %v6714
    %v7334 = vsel %vm3298, %v7270, %v6716
    %v7335 = vsel %vm3298, %v7271, %v6718
    %v7336 = vsel %vm3298, %v7272, %v6720
    %v7337 = vsel %vm3298, %v7273, %v6722
    %v7338 = vsel %vm3298, %v7274, %v6724
    %v7339 = vsel %vm3298, %v7275, %v6726
    %v7340 = vsel %vm3298, %v7276, %v6728
    %v7341 = vsel %vm3298, %v7277, %v6730
    %v7342 = vsel %vm3298, %v7278, %v6732
    %v7343 = vsel %vm3298, %v7279, %v6734
    %v7344 = vsel %vm3298, %v7280, %v6736
    %v7345 = vsel %vm3298, %v7281, %v6738
    %v7346 = vsel %vm3298, %v7282, %v6740
    %v7347 = vsel %vm3298, %v7283, %v6742
    %v7348 = vsel %vm3298, %v7284, %v6744
    %v7349 = vsel %vm3298, %v7285, %v6746
    %v7350 = vsel %vm3298, %v7286, %v6748
    %v7351 = vsel %vm3298, %v7287, %v6750
    %v7352 = vsel %vm3298, %v7288, %v6752
    %v7353 = vsel %vm3298, %v7289, %v6754
    %v7354 = vsel %vm3298, %v7290, %v6756
    %v7355 = vsel %vm3298, %v7291, %v6758
    %v7356 = vsel %vm3298, %v7292, %v6760
    %v7357 = vsel %vm3298, %v7293, %v6762
    %v7358 = vsel %vm3298, %v7294, %v6764
    %v7359 = vsel %vm3298, %v7295, %v6766
    %v7360 = vsel %vm3298, %v7296, %v6768
    %v7361 = vsel %vm3298, %v7297, %v6770
    %v7362 = vsel %vm3298, %v7298, %v6772
    %v7363 = vsel %vm3298, %v7299, %v6774
    %v7364 = vsel %vm3298, %v7300, %v6776
    %v7365 = vsel %vm3298, %v7301, %v6778
    %v7366 = vsel %vm3298, %v7302, %v6780
    %v7367 = vsel %vm3298, %v7303, %v6782
    %v7368 = vsel %vm3298, %v7304, %v6784
    %v7369 = vsel %vm3298, %v7305, %v6786
    %v7370 = vsel %vm3298, %v7306, %v6788
    %v7371 = vsel %vm3298, %v7307, %v6790
    %v7372 = vsel %vm3298, %v7308, %v6792
    %v7373 = vsel %vm3298, %v7309, %v6794
    %v7374 = vsel %vm3298, %v7310, %v6796
    %v7375 = vsel %vm3298, %v7311, %v6798
    %v7376 = vsel %vm3298, %v7312, %v6800
    %v7377 = vsel %vm3298, %v7313, %v6802
    %v7378 = vsel %vm3298, %v7314, %v6804
    %v7379 = vsel %vm3298, %v7315, %v6806
    %v7380 = vsel %vm3298, %v7316, %v6808
    %v7381 = vsel %vm3298, %v7317, %v6810
    %v7382 = vsel %vm3298, %v7318, %v6748
    %v7383 = vsel %vm3298, %v7319, %v6750
    %v7384 = vld [vmem:[%s5] sm:$0xf]
    %v7385 = vld [vmem:[%s6] sm:$0xf]
    %7387 = vset.pattern.permute.xlu0 0
    %7388 = vperm.xlu0 %7387, %v7385
    %v7389 = vpop.permute.xlu0 %7388
    %vm7391 = vcmask 293888
    %v7393 = vsel %vm7391, %v7384, 0
    %v7396 = vsel %vm7391, %v7320, 0
    %v7399 = vsel %vm7391, %v7321, 0
    %v7402 = vsel %vm7391, %v7322, 0
    %v7405 = vsel %vm7391, %v7323, 0
    %v7408 = vsel %vm7391, %v7324, 0
    %v7411 = vsel %vm7391, %v7325, 0
    %v7414 = vsel %vm7391, %v7326, 0
    %v7417 = vsel %vm7391, %v7327, 0
    %v7420 = vsel %vm7391, %v7328, 0
    %v7423 = vsel %vm7391, %v7329, 0
    %v7426 = vsel %vm7391, %v7330, 0
    %v7429 = vsel %vm7391, %v7331, 0
    %v7432 = vsel %vm7391, %v7332, 0
    %v7435 = vsel %vm7391, %v7333, 0
    %v7438 = vsel %vm7391, %v7334, 0
    %v7441 = vsel %vm7391, %v7335, 0
    %v7444 = vsel %vm7391, %v7336, 0
    %v7447 = vsel %vm7391, %v7337, 0
    %v7450 = vsel %vm7391, %v7338, 0
    %v7453 = vsel %vm7391, %v7339, 0
    %v7456 = vsel %vm7391, %v7340, 0
    %v7459 = vsel %vm7391, %v7341, 0
    %v7462 = vsel %vm7391, %v7342, 0
    %v7465 = vsel %vm7391, %v7343, 0
    %v7468 = vsel %vm7391, %v7344, 0
    %v7471 = vsel %vm7391, %v7345, 0
    %v7474 = vsel %vm7391, %v7346, 0
    %v7477 = vsel %vm7391, %v7347, 0
    %v7480 = vsel %vm7391, %v7348, 0
    %v7483 = vsel %vm7391, %v7349, 0
    %v7486 = vsel %vm7391, %v7350, 0
    %v7489 = vsel %vm7391, %v7351, 0
    %v7492 = vsel %vm7391, %v7352, 0
    %v7495 = vsel %vm7391, %v7353, 0
    %v7498 = vsel %vm7391, %v7354, 0
    %v7501 = vsel %vm7391, %v7355, 0
    %v7504 = vsel %vm7391, %v7356, 0
    %v7507 = vsel %vm7391, %v7357, 0
    %v7510 = vsel %vm7391, %v7358, 0
    %v7513 = vsel %vm7391, %v7359, 0
    %v7516 = vsel %vm7391, %v7360, 0
    %v7519 = vsel %vm7391, %v7361, 0
    %v7522 = vsel %vm7391, %v7362, 0
    %v7525 = vsel %vm7391, %v7363, 0
    %v7528 = vsel %vm7391, %v7364, 0
    %v7531 = vsel %vm7391, %v7365, 0
    %v7534 = vsel %vm7391, %v7366, 0
    %v7537 = vsel %vm7391, %v7367, 0
    %v7540 = vsel %vm7391, %v7368, 0
    %v7543 = vsel %vm7391, %v7369, 0
    %v7546 = vsel %vm7391, %v7370, 0
    %v7549 = vsel %vm7391, %v7371, 0
    %v7552 = vsel %vm7391, %v7372, 0
    %v7555 = vsel %vm7391, %v7373, 0
    %v7558 = vsel %vm7391, %v7374, 0
    %v7561 = vsel %vm7391, %v7375, 0
    %v7564 = vsel %vm7391, %v7376, 0
    %v7567 = vsel %vm7391, %v7377, 0
    %v7570 = vsel %vm7391, %v7378, 0
    %v7573 = vsel %vm7391, %v7379, 0
    %v7576 = vsel %vm7391, %v7380, 0
    %v7579 = vsel %vm7391, %v7381, 0
    %v7582 = vsel %vm7391, %v7382, 0
    %v7585 = vsel %vm7391, %v7383, 0
    %7587 = vmatprep.subr.mxu0 0.0
    %7588 = vmatpush1.xpose.msra.mxu0 %v7396
    %7589 = vmatprep.subr.mxu0 0.0
    %7590 = vmatpush1.xpose.msra.mxu0 %v7399
    %7591 = vmatprep.subr.mxu0 0.0
    %7592 = vmatpush1.xpose.msra.mxu0 %v7402
    %7593 = vmatprep.subr.mxu0 0.0
    %7594 = vmatpush1.xpose.msra.mxu0 %v7405
    %7595 = vmatprep.subr.mxu0 0.0
    %7596 = vmatpush1.xpose.msra.mxu0 %v7408
    %7597 = vmatprep.subr.mxu0 0.0
    %7598 = vmatpush1.xpose.msra.mxu0 %v7411
    %7599 = vmatprep.subr.mxu0 0.0
    %7600 = vmatpush1.xpose.msra.mxu0 %v7414
    %7601 = vmatprep.subr.mxu0 0.0
    %7602 = vmatpush1.xpose.msra.mxu0 %v7417
    %7603 = vmatprep.subr.mxu0 0.0
    %7604 = vmatpush1.xpose.msra.mxu0 %v7420
    %7605 = vmatprep.subr.mxu0 0.0
    %7606 = vmatpush1.xpose.msra.mxu0 %v7423
    %7607 = vmatprep.subr.mxu0 0.0
    %7608 = vmatpush1.xpose.msra.mxu0 %v7426
    %7609 = vmatprep.subr.mxu0 0.0
    %7610 = vmatpush1.xpose.msra.mxu0 %v7429
    %7611 = vmatprep.subr.mxu0 0.0
    %7612 = vmatpush1.xpose.msra.mxu0 %v7432
    %7613 = vmatprep.subr.mxu0 0.0
    %7614 = vmatpush1.xpose.msra.mxu0 %v7435
    %7615 = vmatprep.subr.mxu0 0.0
    %7616 = vmatpush1.xpose.msra.mxu0 %v7438
    %7617 = vmatprep.subr.mxu0 0.0
    %7618 = vmatpush1.xpose.msra.mxu0 %v7441
    %7619 = vmatprep.subr.mxu0 0.0
    %7620 = vmatpush1.xpose.msra.mxu0 %v7444
    %7621 = vmatprep.subr.mxu0 0.0
    %7622 = vmatpush1.xpose.msra.mxu0 %v7447
    %7623 = vmatprep.subr.mxu0 0.0
    %7624 = vmatpush1.xpose.msra.mxu0 %v7450
    %7625 = vmatprep.subr.mxu0 0.0
    %7626 = vmatpush1.xpose.msra.mxu0 %v7453
    %7627 = vmatprep.subr.mxu0 0.0
    %7628 = vmatpush1.xpose.msra.mxu0 %v7456
    %7629 = vmatprep.subr.mxu0 0.0
    %7630 = vmatpush1.xpose.msra.mxu0 %v7459
    %7631 = vmatprep.subr.mxu0 0.0
    %7632 = vmatpush1.xpose.msra.mxu0 %v7462
    %7633 = vmatprep.subr.mxu0 0.0
    %7634 = vmatpush1.xpose.msra.mxu0 %v7465
    %7635 = vmatprep.subr.mxu0 0.0
    %7636 = vmatpush1.xpose.msra.mxu0 %v7468
    %7637 = vmatprep.subr.mxu0 0.0
    %7638 = vmatpush1.xpose.msra.mxu0 %v7471
    %7639 = vmatprep.subr.mxu0 0.0
    %7640 = vmatpush1.xpose.msra.mxu0 %v7474
    %7641 = vmatprep.subr.mxu0 0.0
    %7642 = vmatpush1.xpose.msra.mxu0 %v7477
    %7643 = vmatprep.subr.mxu0 0.0
    %7644 = vmatpush1.xpose.msra.mxu0 %v7480
    %7645 = vmatprep.subr.mxu0 0.0
    %7646 = vmatpush1.xpose.msra.mxu0 %v7483
    %7647 = vmatprep.subr.mxu0 0.0
    %7648 = vmatpush1.xpose.msra.mxu0 %v7486
    %7649 = vmatprep.subr.mxu0 0.0
    %7650 = vmatpush1.xpose.msra.mxu0 %v7489
    %7651 = vmatprep.mubr.f32.mxu0 0.0
    %7652 = vmatmul.mubr.f32.gmra.mrb[0].mxu0 %v7393
    %v7653 = vpop.f32.mrb[0].mxu0
    %v7654 = vadd.f32 %v7389, %v7653
    %v7655 = vpop.f32.mrb[0].mxu0
    %v7656 = vadd.f32 %v7389, %v7655
    %7657 = vdwg.mxu0
    %7658 = vmatprep.subr.mxu0 0.0
    %7659 = vmatpush1.xpose.msra.mxu0 %v7492
    %7660 = vmatprep.subr.mxu0 0.0
    %7661 = vmatpush1.xpose.msra.mxu0 %v7495
    %7662 = vmatprep.subr.mxu0 0.0
    %7663 = vmatpush1.xpose.msra.mxu0 %v7498
    %7664 = vmatprep.subr.mxu0 0.0
    %7665 = vmatpush1.xpose.msra.mxu0 %v7501
    %7666 = vmatprep.subr.mxu0 0.0
    %7667 = vmatpush1.xpose.msra.mxu0 %v7504
    %7668 = vmatprep.subr.mxu0 0.0
    %7669 = vmatpush1.xpose.msra.mxu0 %v7507
    %7670 = vmatprep.subr.mxu0 0.0
    %7671 = vmatpush1.xpose.msra.mxu0 %v7510
    %7672 = vmatprep.subr.mxu0 0.0
    %7673 = vmatpush1.xpose.msra.mxu0 %v7513
    %7674 = vmatprep.subr.mxu0 0.0
    %7675 = vmatpush1.xpose.msra.mxu0 %v7516
    %7676 = vmatprep.subr.mxu0 0.0
    %7677 = vmatpush1.xpose.msra.mxu0 %v7519
    %7678 = vmatprep.subr.mxu0 0.0
    %7679 = vmatpush1.xpose.msra.mxu0 %v7522
    %7680 = vmatprep.subr.mxu0 0.0
    %7681 = vmatpush1.xpose.msra.mxu0 %v7525
    %7682 = vmatprep.subr.mxu0 0.0
    %7683 = vmatpush1.xpose.msra.mxu0 %v7528
    %7684 = vmatprep.subr.mxu0 0.0
    %7685 = vmatpush1.xpose.msra.mxu0 %v7531
    %7686 = vmatprep.subr.mxu0 0.0
    %7687 = vmatpush1.xpose.msra.mxu0 %v7534
    %7688 = vmatprep.subr.mxu0 0.0
    %7689 = vmatpush1.xpose.msra.mxu0 %v7537
    %7690 = vmatprep.subr.mxu0 0.0
    %7691 = vmatpush1.xpose.msra.mxu0 %v7540
    %7692 = vmatprep.subr.mxu0 0.0
    %7693 = vmatpush1.xpose.msra.mxu0 %v7543
    %7694 = vmatprep.subr.mxu0 0.0
    %7695 = vmatpush1.xpose.msra.mxu0 %v7546
    %7696 = vmatprep.subr.mxu0 0.0
    %7697 = vmatpush1.xpose.msra.mxu0 %v7549
    %7698 = vmatprep.subr.mxu0 0.0
    %7699 = vmatpush1.xpose.msra.mxu0 %v7552
    %7700 = vmatprep.subr.mxu0 0.0
    %7701 = vmatpush1.xpose.msra.mxu0 %v7555
    %7702 = vmatprep.subr.mxu0 0.0
    %7703 = vmatpush1.xpose.msra.mxu0 %v7558
    %7704 = vmatprep.subr.mxu0 0.0
    %7705 = vmatpush1.xpose.msra.mxu0 %v7561
    %7706 = vmatprep.subr.mxu0 0.0
    %7707 = vmatpush1.xpose.msra.mxu0 %v7564
    %7708 = vmatprep.subr.mxu0 0.0
    %7709 = vmatpush1.xpose.msra.mxu0 %v7567
    %7710 = vmatprep.subr.mxu0 0.0
    %7711 = vmatpush1.xpose.msra.mxu0 %v7570
    %7712 = vmatprep.subr.mxu0 0.0
    %7713 = vmatpush1.xpose.msra.mxu0 %v7573
    %7714 = vmatprep.subr.mxu0 0.0
    %7715 = vmatpush1.xpose.msra.mxu0 %v7576
    %7716 = vmatprep.subr.mxu0 0.0
    %7717 = vmatpush1.xpose.msra.mxu0 %v7579
    %7718 = vmatprep.subr.mxu0 0.0
    %7719 = vmatpush1.xpose.msra.mxu0 %v7582
    %7720 = vmatprep.subr.mxu0 0.0
    %7721 = vmatpush1.xpose.msra.mxu0 %v7585
    %7722 = vmatprep.mubr.f32.mxu0 0.0
    %7723 = vmatmul.mubr.f32.gmra.mrb[0].mxu0 %v7393
    %v7724 = vpop.f32.mrb[0].mxu0
    %v7725 = vadd.f32 %v7389, %v7724
    %v7726 = vpop.f32.mrb[0].mxu0
    %v7727 = vadd.f32 %v7389, %v7726
    %7728 = vdwg.mxu0
    %vm7729 = vcmp.gt.f32.partialorder %v7654, 0.0
    %vm7730 = vcmp.gt.f32.partialorder %v7656, 0.0
    %vm7731 = vcmp.gt.f32.partialorder %v7725, 0.0
    %vm7732 = vcmp.gt.f32.partialorder %v7727, 0.0
    %v7733 = vmul.f32 %v7654, 1.442695
    %v7734 = vpow.pop %v7733
    %v7735 = vmul.f32 %v7656, 1.442695
    %v7736 = vpow.pop %v7735
    %v7737 = vmul.f32 %v7725, 1.442695
    %v7738 = vpow.pop %v7737
    %v7739 = vmul.f32 %v7727, 1.442695
    %v7740 = vpow.pop %v7739
    %v7741 = vsub.f32 %v7734, 1.0
    %v7742 = vsub.f32 %v7736, 1.0
    %v7743 = vsub.f32 %v7738, 1.0
    %v7744 = vsub.f32 %v7740, 1.0
    %v7745 = vmul.f32 %v7741, 1.6732632
    %v7746 = vmul.f32 %v7742, 1.6732632
    %v7747 = vmul.f32 %v7743, 1.6732632
    %v7748 = vmul.f32 %v7744, 1.6732632
    %v7749 = vsel %vm7729, %v7654, %v7745
    %v7750 = vsel %vm7730, %v7656, %v7746
    %v7751 = vsel %vm7731, %v7725, %v7747
    %v7752 = vsel %vm7732, %v7727, %v7748
    %v7753 = vmul.f32 %v7749, 1.050701
    %v7754 = vmul.f32 %v7750, 1.050701
    %v7755 = vmul.f32 %v7751, 1.050701
    %v7756 = vmul.f32 %v7752, 1.050701
    %v7761 = vcombine.low %v7753, %v7754
    %v7762 = vcombine.low %v7755, %v7756
    %7765 = vst [vmem:[#allocation2] sm:$0xff] %v7761
    %7766 = vst [vmem:[#allocation2 + $0x8] sm:$0xff] %v7762
    // Predicated region
    $region30: #{tpu_custom_call.1} parent=1 // pred_check
      _
    $region31: #{tpu_custom_call.1} parent=1 // pred_check_branch
      %7768 = sbr.rel (0) target = $region33
    $region32: #{tpu_custom_call.1} parent=1 // pred_region
      %s7770 = ssub.s32 256, 256
      %7771 = vsyncadd [#allocation3], %s7770
      %s7773 = sshll.u32 [#allocation2], 4
      %s7774 = int_to_ptr.vmem [resolvable:$true] %s7773
      %7776 = dma.vmem_to_hbm [thread:$0]  %s7774, 256, %s7, [#allocation3]
    $region33: #{tpu_custom_call.1} parent=1 // pred_fallthru
      _
    // Predicated region
    $region34: #{tpu_custom_call.1} parent=1 // pred_check
      _
    $region35: #{tpu_custom_call.1} parent=1 // pred_check_branch
      %7778 = sbr.rel (0) target = $region37
    $region36: #{tpu_custom_call.1} parent=1 // pred_region
      %7779 = dma.done [#allocation3], 256
    $region37: #{tpu_custom_call.1} parent=1 // pred_fallthru
      _
    %7780 = vsyncpa [#allocation3], 1

</llo_original>
